<compile_context>
chip_gen: v7x
topology: tpu7x:2x2x1
jax: 0.10.0
libtpu: 0.0.40
codegen_flags: <defaults>
</compile_context>

<pallas_src>
import functools

import jax
import jax.numpy as jnp
import numpy as np
from jax.experimental import pallas as pl
from jax.experimental.pallas import tpu as pltpu

_VMEM_SPEC = pl.BlockSpec(memory_space=pltpu.MemorySpace.VMEM)
_NUM_CONV_LAYERS = 5


# ------------------------------ Pallas kernel -------------------------------

def _value_model_kernel(*refs):
    # refs = [x, (S1, M1, b1), ..., (S5, M5, b5), Smean, lin_w, lin_b, out]
    x_ref = refs[0]
    layer_refs = [refs[1 + 3 * l: 4 + 3 * l] for l in range(_NUM_CONV_LAYERS)]
    smean_ref = refs[1 + 3 * _NUM_CONV_LAYERS]
    linw_ref = refs[2 + 3 * _NUM_CONV_LAYERS]
    linb_ref = refs[3 + 3 * _NUM_CONV_LAYERS]
    o_ref = refs[4 + 3 * _NUM_CONV_LAYERS]

    # Raw uint8 pixel values (exactly representable in bf16); the 1/255 scale
    # is folded into the packed layer-1 weight matrices.
    a = x_ref[...]                                            # [N*3*H, W] bf16

    # Five Conv2d(k=3, s=2, p=1) + ReLU layers, fully on-chip.
    for s_ref, m_ref, b_ref in layer_refs:
        acc = jnp.zeros((s_ref.shape[1], m_ref.shape[2]), jnp.float32)
        for t in range(s_ref.shape[0]):                       # taps, unrolled
            # Stride-2 H taps + H padding as an exact 0/1 selection matmul.
            sel = jnp.dot(s_ref[t], a, preferred_element_type=jnp.float32)
            # W taps + W padding + channel mixing packed into one matrix.
            acc = acc + jnp.dot(sel.astype(jnp.bfloat16), m_ref[t],
                                preferred_element_type=jnp.float32)
        # Bias + ReLU epilogue in f32 on the VPU, bf16 for the next MXU op.
        a = jnp.maximum(acc + b_ref[...], 0.0).astype(jnp.bfloat16)

    # Head (fused): spatial mean = tiny row matmul (+ lane-block sum) + Linear.
    feat = jnp.dot(smean_ref[...], a, preferred_element_type=jnp.float32)
    c_out = linw_ref.shape[0]
    w_blocks = feat.shape[1] // c_out          # static; == 1 for 32x32 inputs
    if w_blocks > 1:
        feat = functools.reduce(
            lambda p, q: p + q,
            [feat[:, i * c_out:(i + 1) * c_out] for i in range(w_blocks)])
    out = jnp.dot(feat.astype(jnp.bfloat16), linw_ref[...],
                  preferred_element_type=jnp.float32) + linb_ref[...]
    o_ref[...] = out                                          # [N, 1] f32


# --------------------------- one-time weight packing -------------------------

def pack_params(params, *, batch, height, width):
    """Pack conv weights into (S, M, b) matmul operands. Runs once, in numpy."""
    N, H, W = batch, height, width
    packed = []
    convs = params["conv"]

    # Layer 1: planar NCHW input, rows = (n, c, h), cols = w.
    w1 = np.asarray(convs[0][0], np.float32)          # [3, 3, Cin, Cout] HWIO
    b1 = np.asarray(convs[0][1], np.float32)
    cin, cout = w1.shape[2], w1.shape[3]
    ho, wo_ = (H + 1) // 2, (W + 1) // 2
    S = np.zeros((3 * cin, N * ho, N * cin * H), np.float32)
    M = np.zeros((3 * cin, W, wo_ * cout), np.float32)
    for ki in range(3):
        for c in range(cin):
            t = ki * cin + c
            for n in range(N):
                for oi in range(ho):
                    hi = 2 * oi + ki - 1
                    if 0 <= hi < H:
                        S[t, n * ho + oi, (n * cin + c) * H + hi] = 1.0
            for wo in range(wo_):
                for kj in range(3):
                    wi = 2 * wo + kj - 1
                    if 0 <= wi < W:
                        # fold the 1/255 input normalisation into the weights
                        M[t, wi, wo * cout:(wo + 1) * cout] = w1[ki, kj, c, :] / 255.0
    packed += [jnp.asarray(S, dtype=jnp.bfloat16),
               jnp.asarray(M, dtype=jnp.bfloat16),
               jnp.asarray(np.tile(b1, wo_)[None, :], dtype=jnp.float32)]
    h_in, w_in = ho, wo_

    # Layers 2..5: interleaved layout, rows = (n, h), cols = (w, c).
    for (w, b) in convs[1:]:
        w = np.asarray(w, np.float32)
        b = np.asarray(b, np.float32)
        cin, cout = w.shape[2], w.shape[3]
        ho, wo_ = (h_in + 1) // 2, (w_in + 1) // 2
        S = np.zeros((3, N * ho, N * h_in), np.float32)
        M = np.zeros((3, w_in * cin, wo_ * cout), np.float32)
        for ki in range(3):
            for n in range(N):
                for oi in range(ho):
                    hi = 2 * oi + ki - 1
                    if 0 <= hi < h_in:
                        S[ki, n * ho + oi, n * h_in + hi] = 1.0
            for wo in range(wo_):
                for kj in range(3):
                    wi = 2 * wo + kj - 1
                    if 0 <= wi < w_in:
                        M[ki, wi * cin:(wi + 1) * cin,
                          wo * cout:(wo + 1) * cout] = w[ki, kj]
        packed += [jnp.asarray(S, dtype=jnp.bfloat16),
                   jnp.asarray(M, dtype=jnp.bfloat16),
                   jnp.asarray(np.tile(b, wo_)[None, :], dtype=jnp.float32)]
        h_in, w_in = ho, wo_

    # Head: mean over H as a tiny matrix (1/(H*W)); mean over W done in-kernel
    # by summing the lane blocks; then Linear(128 -> 1).
    smean = np.zeros((N, N * h_in), np.float32)
    for n in range(N):
        smean[n, n * h_in:(n + 1) * h_in] = 1.0 / (h_in * w_in)
    packed += [jnp.asarray(smean, dtype=jnp.bfloat16),
               jnp.asarray(params["lin_w"], dtype=jnp.bfloat16),
               jnp.asarray(params["lin_b"], dtype=jnp.float32)]
    return tuple(packed)


# ------------------------------- forward pass --------------------------------

@jax.jit
def value_model_forward(x, packed):
    """Equivalent of ValueModel.forward.  x: NCHW uint8 (ndim 3 or 4).

    `packed` must have been built by pack_params for the same batch/H/W.
    """
    if x.ndim == 3:
        x = x[None]
    N, C, H, W = x.shape
    # uint8 pixel values are exact in bf16; 1/255 and the NCHW layout handling
    # live inside the packed matrices, so this is just a cheap cast + a free
    # metadata-only reshape.
    a0 = x.astype(jnp.bfloat16).reshape(N * C * H, W)
    return pl.pallas_call(
        _value_model_kernel,
        out_shape=jax.ShapeDtypeStruct((N, 1), jnp.float32),
        in_specs=[_VMEM_SPEC] * (1 + len(packed)),
        out_specs=_VMEM_SPEC,
    )(a0, *packed)


# ------------------------- deterministic params ------------------------------

def init_params(key):
    channels = [3, 8, 16, 32, 64, 128]
    conv = []
    for i in range(_NUM_CONV_LAYERS):
        key, kw, kb = jax.random.split(key, 3)
        cin, cout = channels[i], channels[i + 1]
        w = 0.1 * jax.random.normal(kw, (3, 3, cin, cout), jnp.float32)   # HWIO
        b = 0.1 * jax.random.normal(kb, (cout,), jnp.float32)
        conv.append((w, b))
    key, kw, kb = jax.random.split(key, 3)
    lin_w = 0.1 * jax.random.normal(kw, (128, 1), jnp.float32)
    lin_b = 0.1 * jax.random.normal(kb, (1, 1), jnp.float32)
    return {"conv": conv, "lin_w": lin_w, "lin_b": lin_b}


# -------------------------------- reference ----------------------------------

def reference_forward(x, params):
    if x.ndim == 3:
        x = x[None]
    h = x.astype(jnp.float32) / 255.0
    h = jnp.transpose(h, (0, 2, 3, 1))
    for (w, b) in params["conv"]:
        h = jax.lax.conv_general_dilated(
            h, w, window_strides=(2, 2), padding=((1, 1), (1, 1)),
            dimension_numbers=("NHWC", "HWIO", "NHWC"),
            precision=jax.lax.Precision.HIGHEST)
        h = jnp.maximum(h + b, 0.0)
    m = jnp.mean(h, axis=(1, 2))                                 # [N, 128]
    return m @ params["lin_w"] + params["lin_b"]                 # [N, 1]


# ---------------------------------- main --------------------------------------

if __name__ == "__main__":
    key = jax.random.PRNGKey(0)
    key, kx = jax.random.split(key)
    params = init_params(key)

    N, H, W = 2, 32, 32
    x = jax.random.randint(kx, (N, 3, H, W), 0, 256, dtype=jnp.int32).astype(jnp.uint8)

    packed = pack_params(params, batch=N, height=H, width=W)

    out = jax.block_until_ready(value_model_forward(x, packed))
    assert out.shape == (N, 1) and out.dtype == jnp.float32

    ref = jax.block_until_ready(reference_forward(x, params))
    # Kernel uses bf16 operands / f32 accumulation (MXU native); reference is
    # f32 HIGHEST, so allow a small tolerance.
    np.testing.assert_allclose(np.asarray(out), np.asarray(ref), rtol=2e-2, atol=2e-2)

    print("KERNEL_OK")
</pallas_src>

<mosaic_0001>
module attributes {stable_mosaic.version = 11 : i64} {
  func.func @_value_model_kernel(%arg0: memref<192x32xbf16, #tpu.memory_space<vmem>>, %arg1: memref<9x32x192xbf16, #tpu.memory_space<vmem>>, %arg2: memref<9x32x128xbf16, #tpu.memory_space<vmem>>, %arg3: memref<1x128xf32, #tpu.memory_space<vmem>>, %arg4: memref<3x16x32xbf16, #tpu.memory_space<vmem>>, %arg5: memref<3x128x128xbf16, #tpu.memory_space<vmem>>, %arg6: memref<1x128xf32, #tpu.memory_space<vmem>>, %arg7: memref<3x8x16xbf16, #tpu.memory_space<vmem>>, %arg8: memref<3x128x128xbf16, #tpu.memory_space<vmem>>, %arg9: memref<1x128xf32, #tpu.memory_space<vmem>>, %arg10: memref<3x4x8xbf16, #tpu.memory_space<vmem>>, %arg11: memref<3x128x128xbf16, #tpu.memory_space<vmem>>, %arg12: memref<1x128xf32, #tpu.memory_space<vmem>>, %arg13: memref<3x2x4xbf16, #tpu.memory_space<vmem>>, %arg14: memref<3x128x128xbf16, #tpu.memory_space<vmem>>, %arg15: memref<1x128xf32, #tpu.memory_space<vmem>>, %arg16: memref<2x2xbf16, #tpu.memory_space<vmem>>, %arg17: memref<128x1xbf16, #tpu.memory_space<vmem>>, %arg18: memref<1x1xf32, #tpu.memory_space<vmem>>, %arg19: memref<2x1xf32, #tpu.memory_space<vmem>>) attributes {dimension_semantics = [], scalar_prefetch = 0 : i64, scratch_operands = 0 : i64, tpu.core_type = #tpu.core_type<tc>} {
    %c0 = arith.constant 0 : index
    %c0_0 = arith.constant 0 : index
    %0 = vector.load %arg0[%c0, %c0_0] : memref<192x32xbf16, #tpu.memory_space<vmem>>, vector<192x32xbf16>
    %cst = arith.constant 0.000000e+00 : f32
    %1 = vector.broadcast %cst : f32 to vector<32x128xf32>
    %c0_1 = arith.constant 0 : index
    %c0_2 = arith.constant 0 : index
    %c0_3 = arith.constant 0 : index
    %2 = vector.load %arg1[%c0_1, %c0_2, %c0_3] : memref<9x32x192xbf16, #tpu.memory_space<vmem>>, vector<1x32x192xbf16>
    %3 = vector.shape_cast %2 : vector<1x32x192xbf16> to vector<32x192xbf16>
    %cst_4 = arith.constant dense<0.000000e+00> : vector<32x32xf32>
    %4 = tpu.matmul %3, %0, %cst_4 {dimension_numbers = #tpu.dot_dimension_numbers<[1], [0], [0], [1], [0, 0, 1, 1], [], []>} : vector<32x192xbf16>, vector<192x32xbf16>, vector<32x32xf32> -> vector<32x32xf32>
    %5 = arith.truncf %4 : vector<32x32xf32> to vector<32x32xbf16>
    %c0_5 = arith.constant 0 : index
    %c0_6 = arith.constant 0 : index
    %c0_7 = arith.constant 0 : index
    %6 = vector.load %arg2[%c0_5, %c0_6, %c0_7] : memref<9x32x128xbf16, #tpu.memory_space<vmem>>, vector<1x32x128xbf16>
    %7 = vector.shape_cast %6 : vector<1x32x128xbf16> to vector<32x128xbf16>
    %cst_8 = arith.constant dense<0.000000e+00> : vector<32x128xf32>
    %8 = tpu.matmul %5, %7, %cst_8 {dimension_numbers = #tpu.dot_dimension_numbers<[1], [0], [0], [1], [0, 0, 1, 1], [], []>} : vector<32x32xbf16>, vector<32x128xbf16>, vector<32x128xf32> -> vector<32x128xf32>
    %9 = arith.addf %1, %8 : vector<32x128xf32>
    %c1 = arith.constant 1 : index
    %c0_9 = arith.constant 0 : index
    %c0_10 = arith.constant 0 : index
    %10 = vector.load %arg1[%c1, %c0_9, %c0_10] : memref<9x32x192xbf16, #tpu.memory_space<vmem>>, vector<1x32x192xbf16>
    %11 = vector.shape_cast %10 : vector<1x32x192xbf16> to vector<32x192xbf16>
    %cst_11 = arith.constant dense<0.000000e+00> : vector<32x32xf32>
    %12 = tpu.matmul %11, %0, %cst_11 {dimension_numbers = #tpu.dot_dimension_numbers<[1], [0], [0], [1], [0, 0, 1, 1], [], []>} : vector<32x192xbf16>, vector<192x32xbf16>, vector<32x32xf32> -> vector<32x32xf32>
    %13 = arith.truncf %12 : vector<32x32xf32> to vector<32x32xbf16>
    %c1_12 = arith.constant 1 : index
    %c0_13 = arith.constant 0 : index
    %c0_14 = arith.constant 0 : index
    %14 = vector.load %arg2[%c1_12, %c0_13, %c0_14] : memref<9x32x128xbf16, #tpu.memory_space<vmem>>, vector<1x32x128xbf16>
    %15 = vector.shape_cast %14 : vector<1x32x128xbf16> to vector<32x128xbf16>
    %cst_15 = arith.constant dense<0.000000e+00> : vector<32x128xf32>
    %16 = tpu.matmul %13, %15, %cst_15 {dimension_numbers = #tpu.dot_dimension_numbers<[1], [0], [0], [1], [0, 0, 1, 1], [], []>} : vector<32x32xbf16>, vector<32x128xbf16>, vector<32x128xf32> -> vector<32x128xf32>
    %17 = arith.addf %9, %16 : vector<32x128xf32>
    %c2 = arith.constant 2 : index
    %c0_16 = arith.constant 0 : index
    %c0_17 = arith.constant 0 : index
    %18 = vector.load %arg1[%c2, %c0_16, %c0_17] : memref<9x32x192xbf16, #tpu.memory_space<vmem>>, vector<1x32x192xbf16>
    %19 = vector.shape_cast %18 : vector<1x32x192xbf16> to vector<32x192xbf16>
    %cst_18 = arith.constant dense<0.000000e+00> : vector<32x32xf32>
    %20 = tpu.matmul %19, %0, %cst_18 {dimension_numbers = #tpu.dot_dimension_numbers<[1], [0], [0], [1], [0, 0, 1, 1], [], []>} : vector<32x192xbf16>, vector<192x32xbf16>, vector<32x32xf32> -> vector<32x32xf32>
    %21 = arith.truncf %20 : vector<32x32xf32> to vector<32x32xbf16>
    %c2_19 = arith.constant 2 : index
    %c0_20 = arith.constant 0 : index
    %c0_21 = arith.constant 0 : index
    %22 = vector.load %arg2[%c2_19, %c0_20, %c0_21] : memref<9x32x128xbf16, #tpu.memory_space<vmem>>, vector<1x32x128xbf16>
    %23 = vector.shape_cast %22 : vector<1x32x128xbf16> to vector<32x128xbf16>
    %cst_22 = arith.constant dense<0.000000e+00> : vector<32x128xf32>
    %24 = tpu.matmul %21, %23, %cst_22 {dimension_numbers = #tpu.dot_dimension_numbers<[1], [0], [0], [1], [0, 0, 1, 1], [], []>} : vector<32x32xbf16>, vector<32x128xbf16>, vector<32x128xf32> -> vector<32x128xf32>
    %25 = arith.addf %17, %24 : vector<32x128xf32>
    %c3 = arith.constant 3 : index
    %c0_23 = arith.constant 0 : index
    %c0_24 = arith.constant 0 : index
    %26 = vector.load %arg1[%c3, %c0_23, %c0_24] : memref<9x32x192xbf16, #tpu.memory_space<vmem>>, vector<1x32x192xbf16>
    %27 = vector.shape_cast %26 : vector<1x32x192xbf16> to vector<32x192xbf16>
    %cst_25 = arith.constant dense<0.000000e+00> : vector<32x32xf32>
    %28 = tpu.matmul %27, %0, %cst_25 {dimension_numbers = #tpu.dot_dimension_numbers<[1], [0], [0], [1], [0, 0, 1, 1], [], []>} : vector<32x192xbf16>, vector<192x32xbf16>, vector<32x32xf32> -> vector<32x32xf32>
    %29 = arith.truncf %28 : vector<32x32xf32> to vector<32x32xbf16>
    %c3_26 = arith.constant 3 : index
    %c0_27 = arith.constant 0 : index
    %c0_28 = arith.constant 0 : index
    %30 = vector.load %arg2[%c3_26, %c0_27, %c0_28] : memref<9x32x128xbf16, #tpu.memory_space<vmem>>, vector<1x32x128xbf16>
    %31 = vector.shape_cast %30 : vector<1x32x128xbf16> to vector<32x128xbf16>
    %cst_29 = arith.constant dense<0.000000e+00> : vector<32x128xf32>
    %32 = tpu.matmul %29, %31, %cst_29 {dimension_numbers = #tpu.dot_dimension_numbers<[1], [0], [0], [1], [0, 0, 1, 1], [], []>} : vector<32x32xbf16>, vector<32x128xbf16>, vector<32x128xf32> -> vector<32x128xf32>
    %33 = arith.addf %25, %32 : vector<32x128xf32>
    %c4 = arith.constant 4 : index
    %c0_30 = arith.constant 0 : index
    %c0_31 = arith.constant 0 : index
    %34 = vector.load %arg1[%c4, %c0_30, %c0_31] : memref<9x32x192xbf16, #tpu.memory_space<vmem>>, vector<1x32x192xbf16>
    %35 = vector.shape_cast %34 : vector<1x32x192xbf16> to vector<32x192xbf16>
    %cst_32 = arith.constant dense<0.000000e+00> : vector<32x32xf32>
    %36 = tpu.matmul %35, %0, %cst_32 {dimension_numbers = #tpu.dot_dimension_numbers<[1], [0], [0], [1], [0, 0, 1, 1], [], []>} : vector<32x192xbf16>, vector<192x32xbf16>, vector<32x32xf32> -> vector<32x32xf32>
    %37 = arith.truncf %36 : vector<32x32xf32> to vector<32x32xbf16>
    %c4_33 = arith.constant 4 : index
    %c0_34 = arith.constant 0 : index
    %c0_35 = arith.constant 0 : index
    %38 = vector.load %arg2[%c4_33, %c0_34, %c0_35] : memref<9x32x128xbf16, #tpu.memory_space<vmem>>, vector<1x32x128xbf16>
    %39 = vector.shape_cast %38 : vector<1x32x128xbf16> to vector<32x128xbf16>
    %cst_36 = arith.constant dense<0.000000e+00> : vector<32x128xf32>
    %40 = tpu.matmul %37, %39, %cst_36 {dimension_numbers = #tpu.dot_dimension_numbers<[1], [0], [0], [1], [0, 0, 1, 1], [], []>} : vector<32x32xbf16>, vector<32x128xbf16>, vector<32x128xf32> -> vector<32x128xf32>
    %41 = arith.addf %33, %40 : vector<32x128xf32>
    %c5 = arith.constant 5 : index
    %c0_37 = arith.constant 0 : index
    %c0_38 = arith.constant 0 : index
    %42 = vector.load %arg1[%c5, %c0_37, %c0_38] : memref<9x32x192xbf16, #tpu.memory_space<vmem>>, vector<1x32x192xbf16>
    %43 = vector.shape_cast %42 : vector<1x32x192xbf16> to vector<32x192xbf16>
    %cst_39 = arith.constant dense<0.000000e+00> : vector<32x32xf32>
    %44 = tpu.matmul %43, %0, %cst_39 {dimension_numbers = #tpu.dot_dimension_numbers<[1], [0], [0], [1], [0, 0, 1, 1], [], []>} : vector<32x192xbf16>, vector<192x32xbf16>, vector<32x32xf32> -> vector<32x32xf32>
    %45 = arith.truncf %44 : vector<32x32xf32> to vector<32x32xbf16>
    %c5_40 = arith.constant 5 : index
    %c0_41 = arith.constant 0 : index
    %c0_42 = arith.constant 0 : index
    %46 = vector.load %arg2[%c5_40, %c0_41, %c0_42] : memref<9x32x128xbf16, #tpu.memory_space<vmem>>, vector<1x32x128xbf16>
    %47 = vector.shape_cast %46 : vector<1x32x128xbf16> to vector<32x128xbf16>
    %cst_43 = arith.constant dense<0.000000e+00> : vector<32x128xf32>
    %48 = tpu.matmul %45, %47, %cst_43 {dimension_numbers = #tpu.dot_dimension_numbers<[1], [0], [0], [1], [0, 0, 1, 1], [], []>} : vector<32x32xbf16>, vector<32x128xbf16>, vector<32x128xf32> -> vector<32x128xf32>
    %49 = arith.addf %41, %48 : vector<32x128xf32>
    %c6 = arith.constant 6 : index
    %c0_44 = arith.constant 0 : index
    %c0_45 = arith.constant 0 : index
    %50 = vector.load %arg1[%c6, %c0_44, %c0_45] : memref<9x32x192xbf16, #tpu.memory_space<vmem>>, vector<1x32x192xbf16>
    %51 = vector.shape_cast %50 : vector<1x32x192xbf16> to vector<32x192xbf16>
    %cst_46 = arith.constant dense<0.000000e+00> : vector<32x32xf32>
    %52 = tpu.matmul %51, %0, %cst_46 {dimension_numbers = #tpu.dot_dimension_numbers<[1], [0], [0], [1], [0, 0, 1, 1], [], []>} : vector<32x192xbf16>, vector<192x32xbf16>, vector<32x32xf32> -> vector<32x32xf32>
    %53 = arith.truncf %52 : vector<32x32xf32> to vector<32x32xbf16>
    %c6_47 = arith.constant 6 : index
    %c0_48 = arith.constant 0 : index
    %c0_49 = arith.constant 0 : index
    %54 = vector.load %arg2[%c6_47, %c0_48, %c0_49] : memref<9x32x128xbf16, #tpu.memory_space<vmem>>, vector<1x32x128xbf16>
    %55 = vector.shape_cast %54 : vector<1x32x128xbf16> to vector<32x128xbf16>
    %cst_50 = arith.constant dense<0.000000e+00> : vector<32x128xf32>
    %56 = tpu.matmul %53, %55, %cst_50 {dimension_numbers = #tpu.dot_dimension_numbers<[1], [0], [0], [1], [0, 0, 1, 1], [], []>} : vector<32x32xbf16>, vector<32x128xbf16>, vector<32x128xf32> -> vector<32x128xf32>
    %57 = arith.addf %49, %56 : vector<32x128xf32>
    %c7 = arith.constant 7 : index
    %c0_51 = arith.constant 0 : index
    %c0_52 = arith.constant 0 : index
    %58 = vector.load %arg1[%c7, %c0_51, %c0_52] : memref<9x32x192xbf16, #tpu.memory_space<vmem>>, vector<1x32x192xbf16>
    %59 = vector.shape_cast %58 : vector<1x32x192xbf16> to vector<32x192xbf16>
    %cst_53 = arith.constant dense<0.000000e+00> : vector<32x32xf32>
    %60 = tpu.matmul %59, %0, %cst_53 {dimension_numbers = #tpu.dot_dimension_numbers<[1], [0], [0], [1], [0, 0, 1, 1], [], []>} : vector<32x192xbf16>, vector<192x32xbf16>, vector<32x32xf32> -> vector<32x32xf32>
    %61 = arith.truncf %60 : vector<32x32xf32> to vector<32x32xbf16>
    %c7_54 = arith.constant 7 : index
    %c0_55 = arith.constant 0 : index
    %c0_56 = arith.constant 0 : index
    %62 = vector.load %arg2[%c7_54, %c0_55, %c0_56] : memref<9x32x128xbf16, #tpu.memory_space<vmem>>, vector<1x32x128xbf16>
    %63 = vector.shape_cast %62 : vector<1x32x128xbf16> to vector<32x128xbf16>
    %cst_57 = arith.constant dense<0.000000e+00> : vector<32x128xf32>
    %64 = tpu.matmul %61, %63, %cst_57 {dimension_numbers = #tpu.dot_dimension_numbers<[1], [0], [0], [1], [0, 0, 1, 1], [], []>} : vector<32x32xbf16>, vector<32x128xbf16>, vector<32x128xf32> -> vector<32x128xf32>
    %65 = arith.addf %57, %64 : vector<32x128xf32>
    %c8 = arith.constant 8 : index
    %c0_58 = arith.constant 0 : index
    %c0_59 = arith.constant 0 : index
    %66 = vector.load %arg1[%c8, %c0_58, %c0_59] : memref<9x32x192xbf16, #tpu.memory_space<vmem>>, vector<1x32x192xbf16>
    %67 = vector.shape_cast %66 : vector<1x32x192xbf16> to vector<32x192xbf16>
    %cst_60 = arith.constant dense<0.000000e+00> : vector<32x32xf32>
    %68 = tpu.matmul %67, %0, %cst_60 {dimension_numbers = #tpu.dot_dimension_numbers<[1], [0], [0], [1], [0, 0, 1, 1], [], []>} : vector<32x192xbf16>, vector<192x32xbf16>, vector<32x32xf32> -> vector<32x32xf32>
    %69 = arith.truncf %68 : vector<32x32xf32> to vector<32x32xbf16>
    %c8_61 = arith.constant 8 : index
    %c0_62 = arith.constant 0 : index
    %c0_63 = arith.constant 0 : index
    %70 = vector.load %arg2[%c8_61, %c0_62, %c0_63] : memref<9x32x128xbf16, #tpu.memory_space<vmem>>, vector<1x32x128xbf16>
    %71 = vector.shape_cast %70 : vector<1x32x128xbf16> to vector<32x128xbf16>
    %cst_64 = arith.constant dense<0.000000e+00> : vector<32x128xf32>
    %72 = tpu.matmul %69, %71, %cst_64 {dimension_numbers = #tpu.dot_dimension_numbers<[1], [0], [0], [1], [0, 0, 1, 1], [], []>} : vector<32x32xbf16>, vector<32x128xbf16>, vector<32x128xf32> -> vector<32x128xf32>
    %73 = arith.addf %65, %72 : vector<32x128xf32>
    %c0_65 = arith.constant 0 : index
    %c0_66 = arith.constant 0 : index
    %74 = vector.load %arg3[%c0_65, %c0_66] : memref<1x128xf32, #tpu.memory_space<vmem>>, vector<1x128xf32>
    %75 = vector.broadcast %74 : vector<1x128xf32> to vector<32x128xf32>
    %76 = arith.addf %73, %75 : vector<32x128xf32>
    %cst_67 = arith.constant 0.000000e+00 : f32
    %77 = vector.broadcast %cst_67 : f32 to vector<32x128xf32>
    %78 = arith.maximumf %76, %77 : vector<32x128xf32>
    %79 = arith.truncf %78 : vector<32x128xf32> to vector<32x128xbf16>
    %cst_68 = arith.constant 0.000000e+00 : f32
    %80 = vector.broadcast %cst_68 : f32 to vector<16x128xf32>
    %c0_69 = arith.constant 0 : index
    %c0_70 = arith.constant 0 : index
    %c0_71 = arith.constant 0 : index
    %81 = vector.load %arg4[%c0_69, %c0_70, %c0_71] : memref<3x16x32xbf16, #tpu.memory_space<vmem>>, vector<1x16x32xbf16>
    %82 = vector.shape_cast %81 : vector<1x16x32xbf16> to vector<16x32xbf16>
    %cst_72 = arith.constant dense<0.000000e+00> : vector<16x128xf32>
    %83 = tpu.matmul %82, %79, %cst_72 {dimension_numbers = #tpu.dot_dimension_numbers<[1], [0], [0], [1], [0, 0, 1, 1], [], []>} : vector<16x32xbf16>, vector<32x128xbf16>, vector<16x128xf32> -> vector<16x128xf32>
    %84 = arith.truncf %83 : vector<16x128xf32> to vector<16x128xbf16>
    %c0_73 = arith.constant 0 : index
    %c0_74 = arith.constant 0 : index
    %c0_75 = arith.constant 0 : index
    %85 = vector.load %arg5[%c0_73, %c0_74, %c0_75] : memref<3x128x128xbf16, #tpu.memory_space<vmem>>, vector<1x128x128xbf16>
    %86 = vector.shape_cast %85 : vector<1x128x128xbf16> to vector<128x128xbf16>
    %cst_76 = arith.constant dense<0.000000e+00> : vector<16x128xf32>
    %87 = tpu.matmul %84, %86, %cst_76 {dimension_numbers = #tpu.dot_dimension_numbers<[1], [0], [0], [1], [0, 0, 1, 1], [], []>} : vector<16x128xbf16>, vector<128x128xbf16>, vector<16x128xf32> -> vector<16x128xf32>
    %88 = arith.addf %80, %87 : vector<16x128xf32>
    %c1_77 = arith.constant 1 : index
    %c0_78 = arith.constant 0 : index
    %c0_79 = arith.constant 0 : index
    %89 = vector.load %arg4[%c1_77, %c0_78, %c0_79] : memref<3x16x32xbf16, #tpu.memory_space<vmem>>, vector<1x16x32xbf16>
    %90 = vector.shape_cast %89 : vector<1x16x32xbf16> to vector<16x32xbf16>
    %cst_80 = arith.constant dense<0.000000e+00> : vector<16x128xf32>
    %91 = tpu.matmul %90, %79, %cst_80 {dimension_numbers = #tpu.dot_dimension_numbers<[1], [0], [0], [1], [0, 0, 1, 1], [], []>} : vector<16x32xbf16>, vector<32x128xbf16>, vector<16x128xf32> -> vector<16x128xf32>
    %92 = arith.truncf %91 : vector<16x128xf32> to vector<16x128xbf16>
    %c1_81 = arith.constant 1 : index
    %c0_82 = arith.constant 0 : index
    %c0_83 = arith.constant 0 : index
    %93 = vector.load %arg5[%c1_81, %c0_82, %c0_83] : memref<3x128x128xbf16, #tpu.memory_space<vmem>>, vector<1x128x128xbf16>
    %94 = vector.shape_cast %93 : vector<1x128x128xbf16> to vector<128x128xbf16>
    %cst_84 = arith.constant dense<0.000000e+00> : vector<16x128xf32>
    %95 = tpu.matmul %92, %94, %cst_84 {dimension_numbers = #tpu.dot_dimension_numbers<[1], [0], [0], [1], [0, 0, 1, 1], [], []>} : vector<16x128xbf16>, vector<128x128xbf16>, vector<16x128xf32> -> vector<16x128xf32>
    %96 = arith.addf %88, %95 : vector<16x128xf32>
    %c2_85 = arith.constant 2 : index
    %c0_86 = arith.constant 0 : index
    %c0_87 = arith.constant 0 : index
    %97 = vector.load %arg4[%c2_85, %c0_86, %c0_87] : memref<3x16x32xbf16, #tpu.memory_space<vmem>>, vector<1x16x32xbf16>
    %98 = vector.shape_cast %97 : vector<1x16x32xbf16> to vector<16x32xbf16>
    %cst_88 = arith.constant dense<0.000000e+00> : vector<16x128xf32>
    %99 = tpu.matmul %98, %79, %cst_88 {dimension_numbers = #tpu.dot_dimension_numbers<[1], [0], [0], [1], [0, 0, 1, 1], [], []>} : vector<16x32xbf16>, vector<32x128xbf16>, vector<16x128xf32> -> vector<16x128xf32>
    %100 = arith.truncf %99 : vector<16x128xf32> to vector<16x128xbf16>
    %c2_89 = arith.constant 2 : index
    %c0_90 = arith.constant 0 : index
    %c0_91 = arith.constant 0 : index
    %101 = vector.load %arg5[%c2_89, %c0_90, %c0_91] : memref<3x128x128xbf16, #tpu.memory_space<vmem>>, vector<1x128x128xbf16>
    %102 = vector.shape_cast %101 : vector<1x128x128xbf16> to vector<128x128xbf16>
    %cst_92 = arith.constant dense<0.000000e+00> : vector<16x128xf32>
    %103 = tpu.matmul %100, %102, %cst_92 {dimension_numbers = #tpu.dot_dimension_numbers<[1], [0], [0], [1], [0, 0, 1, 1], [], []>} : vector<16x128xbf16>, vector<128x128xbf16>, vector<16x128xf32> -> vector<16x128xf32>
    %104 = arith.addf %96, %103 : vector<16x128xf32>
    %c0_93 = arith.constant 0 : index
    %c0_94 = arith.constant 0 : index
    %105 = vector.load %arg6[%c0_93, %c0_94] : memref<1x128xf32, #tpu.memory_space<vmem>>, vector<1x128xf32>
    %106 = vector.broadcast %105 : vector<1x128xf32> to vector<16x128xf32>
    %107 = arith.addf %104, %106 : vector<16x128xf32>
    %cst_95 = arith.constant 0.000000e+00 : f32
    %108 = vector.broadcast %cst_95 : f32 to vector<16x128xf32>
    %109 = arith.maximumf %107, %108 : vector<16x128xf32>
    %110 = arith.truncf %109 : vector<16x128xf32> to vector<16x128xbf16>
    %cst_96 = arith.constant 0.000000e+00 : f32
    %111 = vector.broadcast %cst_96 : f32 to vector<8x128xf32>
    %c0_97 = arith.constant 0 : index
    %c0_98 = arith.constant 0 : index
    %c0_99 = arith.constant 0 : index
    %112 = vector.load %arg7[%c0_97, %c0_98, %c0_99] : memref<3x8x16xbf16, #tpu.memory_space<vmem>>, vector<1x8x16xbf16>
    %113 = vector.shape_cast %112 : vector<1x8x16xbf16> to vector<8x16xbf16>
    %cst_100 = arith.constant dense<0.000000e+00> : vector<8x128xf32>
    %114 = tpu.matmul %113, %110, %cst_100 {dimension_numbers = #tpu.dot_dimension_numbers<[1], [0], [0], [1], [0, 0, 1, 1], [], []>} : vector<8x16xbf16>, vector<16x128xbf16>, vector<8x128xf32> -> vector<8x128xf32>
    %115 = arith.truncf %114 : vector<8x128xf32> to vector<8x128xbf16>
    %c0_101 = arith.constant 0 : index
    %c0_102 = arith.constant 0 : index
    %c0_103 = arith.constant 0 : index
    %116 = vector.load %arg8[%c0_101, %c0_102, %c0_103] : memref<3x128x128xbf16, #tpu.memory_space<vmem>>, vector<1x128x128xbf16>
    %117 = vector.shape_cast %116 : vector<1x128x128xbf16> to vector<128x128xbf16>
    %cst_104 = arith.constant dense<0.000000e+00> : vector<8x128xf32>
    %118 = tpu.matmul %115, %117, %cst_104 {dimension_numbers = #tpu.dot_dimension_numbers<[1], [0], [0], [1], [0, 0, 1, 1], [], []>} : vector<8x128xbf16>, vector<128x128xbf16>, vector<8x128xf32> -> vector<8x128xf32>
    %119 = arith.addf %111, %118 : vector<8x128xf32>
    %c1_105 = arith.constant 1 : index
    %c0_106 = arith.constant 0 : index
    %c0_107 = arith.constant 0 : index
    %120 = vector.load %arg7[%c1_105, %c0_106, %c0_107] : memref<3x8x16xbf16, #tpu.memory_space<vmem>>, vector<1x8x16xbf16>
    %121 = vector.shape_cast %120 : vector<1x8x16xbf16> to vector<8x16xbf16>
    %cst_108 = arith.constant dense<0.000000e+00> : vector<8x128xf32>
    %122 = tpu.matmul %121, %110, %cst_108 {dimension_numbers = #tpu.dot_dimension_numbers<[1], [0], [0], [1], [0, 0, 1, 1], [], []>} : vector<8x16xbf16>, vector<16x128xbf16>, vector<8x128xf32> -> vector<8x128xf32>
    %123 = arith.truncf %122 : vector<8x128xf32> to vector<8x128xbf16>
    %c1_109 = arith.constant 1 : index
    %c0_110 = arith.constant 0 : index
    %c0_111 = arith.constant 0 : index
    %124 = vector.load %arg8[%c1_109, %c0_110, %c0_111] : memref<3x128x128xbf16, #tpu.memory_space<vmem>>, vector<1x128x128xbf16>
    %125 = vector.shape_cast %124 : vector<1x128x128xbf16> to vector<128x128xbf16>
    %cst_112 = arith.constant dense<0.000000e+00> : vector<8x128xf32>
    %126 = tpu.matmul %123, %125, %cst_112 {dimension_numbers = #tpu.dot_dimension_numbers<[1], [0], [0], [1], [0, 0, 1, 1], [], []>} : vector<8x128xbf16>, vector<128x128xbf16>, vector<8x128xf32> -> vector<8x128xf32>
    %127 = arith.addf %119, %126 : vector<8x128xf32>
    %c2_113 = arith.constant 2 : index
    %c0_114 = arith.constant 0 : index
    %c0_115 = arith.constant 0 : index
    %128 = vector.load %arg7[%c2_113, %c0_114, %c0_115] : memref<3x8x16xbf16, #tpu.memory_space<vmem>>, vector<1x8x16xbf16>
    %129 = vector.shape_cast %128 : vector<1x8x16xbf16> to vector<8x16xbf16>
    %cst_116 = arith.constant dense<0.000000e+00> : vector<8x128xf32>
    %130 = tpu.matmul %129, %110, %cst_116 {dimension_numbers = #tpu.dot_dimension_numbers<[1], [0], [0], [1], [0, 0, 1, 1], [], []>} : vector<8x16xbf16>, vector<16x128xbf16>, vector<8x128xf32> -> vector<8x128xf32>
    %131 = arith.truncf %130 : vector<8x128xf32> to vector<8x128xbf16>
    %c2_117 = arith.constant 2 : index
    %c0_118 = arith.constant 0 : index
    %c0_119 = arith.constant 0 : index
    %132 = vector.load %arg8[%c2_117, %c0_118, %c0_119] : memref<3x128x128xbf16, #tpu.memory_space<vmem>>, vector<1x128x128xbf16>
    %133 = vector.shape_cast %132 : vector<1x128x128xbf16> to vector<128x128xbf16>
    %cst_120 = arith.constant dense<0.000000e+00> : vector<8x128xf32>
    %134 = tpu.matmul %131, %133, %cst_120 {dimension_numbers = #tpu.dot_dimension_numbers<[1], [0], [0], [1], [0, 0, 1, 1], [], []>} : vector<8x128xbf16>, vector<128x128xbf16>, vector<8x128xf32> -> vector<8x128xf32>
    %135 = arith.addf %127, %134 : vector<8x128xf32>
    %c0_121 = arith.constant 0 : index
    %c0_122 = arith.constant 0 : index
    %136 = vector.load %arg9[%c0_121, %c0_122] : memref<1x128xf32, #tpu.memory_space<vmem>>, vector<1x128xf32>
    %137 = vector.broadcast %136 : vector<1x128xf32> to vector<8x128xf32>
    %138 = arith.addf %135, %137 : vector<8x128xf32>
    %cst_123 = arith.constant 0.000000e+00 : f32
    %139 = vector.broadcast %cst_123 : f32 to vector<8x128xf32>
    %140 = arith.maximumf %138, %139 : vector<8x128xf32>
    %141 = arith.truncf %140 : vector<8x128xf32> to vector<8x128xbf16>
    %cst_124 = arith.constant 0.000000e+00 : f32
    %142 = vector.broadcast %cst_124 : f32 to vector<4x128xf32>
    %c0_125 = arith.constant 0 : index
    %c0_126 = arith.constant 0 : index
    %c0_127 = arith.constant 0 : index
    %143 = vector.load %arg10[%c0_125, %c0_126, %c0_127] : memref<3x4x8xbf16, #tpu.memory_space<vmem>>, vector<1x4x8xbf16>
    %144 = vector.shape_cast %143 : vector<1x4x8xbf16> to vector<4x8xbf16>
    %cst_128 = arith.constant dense<0.000000e+00> : vector<4x128xf32>
    %145 = tpu.matmul %144, %141, %cst_128 {dimension_numbers = #tpu.dot_dimension_numbers<[1], [0], [0], [1], [0, 0, 1, 1], [], []>} : vector<4x8xbf16>, vector<8x128xbf16>, vector<4x128xf32> -> vector<4x128xf32>
    %146 = arith.truncf %145 : vector<4x128xf32> to vector<4x128xbf16>
    %c0_129 = arith.constant 0 : index
    %c0_130 = arith.constant 0 : index
    %c0_131 = arith.constant 0 : index
    %147 = vector.load %arg11[%c0_129, %c0_130, %c0_131] : memref<3x128x128xbf16, #tpu.memory_space<vmem>>, vector<1x128x128xbf16>
    %148 = vector.shape_cast %147 : vector<1x128x128xbf16> to vector<128x128xbf16>
    %cst_132 = arith.constant dense<0.000000e+00> : vector<4x128xf32>
    %149 = tpu.matmul %146, %148, %cst_132 {dimension_numbers = #tpu.dot_dimension_numbers<[1], [0], [0], [1], [0, 0, 1, 1], [], []>} : vector<4x128xbf16>, vector<128x128xbf16>, vector<4x128xf32> -> vector<4x128xf32>
    %150 = arith.addf %142, %149 : vector<4x128xf32>
    %c1_133 = arith.constant 1 : index
    %c0_134 = arith.constant 0 : index
    %c0_135 = arith.constant 0 : index
    %151 = vector.load %arg10[%c1_133, %c0_134, %c0_135] : memref<3x4x8xbf16, #tpu.memory_space<vmem>>, vector<1x4x8xbf16>
    %152 = vector.shape_cast %151 : vector<1x4x8xbf16> to vector<4x8xbf16>
    %cst_136 = arith.constant dense<0.000000e+00> : vector<4x128xf32>
    %153 = tpu.matmul %152, %141, %cst_136 {dimension_numbers = #tpu.dot_dimension_numbers<[1], [0], [0], [1], [0, 0, 1, 1], [], []>} : vector<4x8xbf16>, vector<8x128xbf16>, vector<4x128xf32> -> vector<4x128xf32>
    %154 = arith.truncf %153 : vector<4x128xf32> to vector<4x128xbf16>
    %c1_137 = arith.constant 1 : index
    %c0_138 = arith.constant 0 : index
    %c0_139 = arith.constant 0 : index
    %155 = vector.load %arg11[%c1_137, %c0_138, %c0_139] : memref<3x128x128xbf16, #tpu.memory_space<vmem>>, vector<1x128x128xbf16>
    %156 = vector.shape_cast %155 : vector<1x128x128xbf16> to vector<128x128xbf16>
    %cst_140 = arith.constant dense<0.000000e+00> : vector<4x128xf32>
    %157 = tpu.matmul %154, %156, %cst_140 {dimension_numbers = #tpu.dot_dimension_numbers<[1], [0], [0], [1], [0, 0, 1, 1], [], []>} : vector<4x128xbf16>, vector<128x128xbf16>, vector<4x128xf32> -> vector<4x128xf32>
    %158 = arith.addf %150, %157 : vector<4x128xf32>
    %c2_141 = arith.constant 2 : index
    %c0_142 = arith.constant 0 : index
    %c0_143 = arith.constant 0 : index
    %159 = vector.load %arg10[%c2_141, %c0_142, %c0_143] : memref<3x4x8xbf16, #tpu.memory_space<vmem>>, vector<1x4x8xbf16>
    %160 = vector.shape_cast %159 : vector<1x4x8xbf16> to vector<4x8xbf16>
    %cst_144 = arith.constant dense<0.000000e+00> : vector<4x128xf32>
    %161 = tpu.matmul %160, %141, %cst_144 {dimension_numbers = #tpu.dot_dimension_numbers<[1], [0], [0], [1], [0, 0, 1, 1], [], []>} : vector<4x8xbf16>, vector<8x128xbf16>, vector<4x128xf32> -> vector<4x128xf32>
    %162 = arith.truncf %161 : vector<4x128xf32> to vector<4x128xbf16>
    %c2_145 = arith.constant 2 : index
    %c0_146 = arith.constant 0 : index
    %c0_147 = arith.constant 0 : index
    %163 = vector.load %arg11[%c2_145, %c0_146, %c0_147] : memref<3x128x128xbf16, #tpu.memory_space<vmem>>, vector<1x128x128xbf16>
    %164 = vector.shape_cast %163 : vector<1x128x128xbf16> to vector<128x128xbf16>
    %cst_148 = arith.constant dense<0.000000e+00> : vector<4x128xf32>
    %165 = tpu.matmul %162, %164, %cst_148 {dimension_numbers = #tpu.dot_dimension_numbers<[1], [0], [0], [1], [0, 0, 1, 1], [], []>} : vector<4x128xbf16>, vector<128x128xbf16>, vector<4x128xf32> -> vector<4x128xf32>
    %166 = arith.addf %158, %165 : vector<4x128xf32>
    %c0_149 = arith.constant 0 : index
    %c0_150 = arith.constant 0 : index
    %167 = vector.load %arg12[%c0_149, %c0_150] : memref<1x128xf32, #tpu.memory_space<vmem>>, vector<1x128xf32>
    %168 = vector.broadcast %167 : vector<1x128xf32> to vector<4x128xf32>
    %169 = arith.addf %166, %168 : vector<4x128xf32>
    %cst_151 = arith.constant 0.000000e+00 : f32
    %170 = vector.broadcast %cst_151 : f32 to vector<4x128xf32>
    %171 = arith.maximumf %169, %170 : vector<4x128xf32>
    %172 = arith.truncf %171 : vector<4x128xf32> to vector<4x128xbf16>
    %cst_152 = arith.constant 0.000000e+00 : f32
    %173 = vector.broadcast %cst_152 : f32 to vector<2x128xf32>
    %c0_153 = arith.constant 0 : index
    %c0_154 = arith.constant 0 : index
    %c0_155 = arith.constant 0 : index
    %174 = vector.load %arg13[%c0_153, %c0_154, %c0_155] : memref<3x2x4xbf16, #tpu.memory_space<vmem>>, vector<1x2x4xbf16>
    %175 = vector.shape_cast %174 : vector<1x2x4xbf16> to vector<2x4xbf16>
    %cst_156 = arith.constant dense<0.000000e+00> : vector<2x128xf32>
    %176 = tpu.matmul %175, %172, %cst_156 {dimension_numbers = #tpu.dot_dimension_numbers<[1], [0], [0], [1], [0, 0, 1, 1], [], []>} : vector<2x4xbf16>, vector<4x128xbf16>, vector<2x128xf32> -> vector<2x128xf32>
    %177 = arith.truncf %176 : vector<2x128xf32> to vector<2x128xbf16>
    %c0_157 = arith.constant 0 : index
    %c0_158 = arith.constant 0 : index
    %c0_159 = arith.constant 0 : index
    %178 = vector.load %arg14[%c0_157, %c0_158, %c0_159] : memref<3x128x128xbf16, #tpu.memory_space<vmem>>, vector<1x128x128xbf16>
    %179 = vector.shape_cast %178 : vector<1x128x128xbf16> to vector<128x128xbf16>
    %cst_160 = arith.constant dense<0.000000e+00> : vector<2x128xf32>
    %180 = tpu.matmul %177, %179, %cst_160 {dimension_numbers = #tpu.dot_dimension_numbers<[1], [0], [0], [1], [0, 0, 1, 1], [], []>} : vector<2x128xbf16>, vector<128x128xbf16>, vector<2x128xf32> -> vector<2x128xf32>
    %181 = arith.addf %173, %180 : vector<2x128xf32>
    %c1_161 = arith.constant 1 : index
    %c0_162 = arith.constant 0 : index
    %c0_163 = arith.constant 0 : index
    %182 = vector.load %arg13[%c1_161, %c0_162, %c0_163] : memref<3x2x4xbf16, #tpu.memory_space<vmem>>, vector<1x2x4xbf16>
    %183 = vector.shape_cast %182 : vector<1x2x4xbf16> to vector<2x4xbf16>
    %cst_164 = arith.constant dense<0.000000e+00> : vector<2x128xf32>
    %184 = tpu.matmul %183, %172, %cst_164 {dimension_numbers = #tpu.dot_dimension_numbers<[1], [0], [0], [1], [0, 0, 1, 1], [], []>} : vector<2x4xbf16>, vector<4x128xbf16>, vector<2x128xf32> -> vector<2x128xf32>
    %185 = arith.truncf %184 : vector<2x128xf32> to vector<2x128xbf16>
    %c1_165 = arith.constant 1 : index
    %c0_166 = arith.constant 0 : index
    %c0_167 = arith.constant 0 : index
    %186 = vector.load %arg14[%c1_165, %c0_166, %c0_167] : memref<3x128x128xbf16, #tpu.memory_space<vmem>>, vector<1x128x128xbf16>
    %187 = vector.shape_cast %186 : vector<1x128x128xbf16> to vector<128x128xbf16>
    %cst_168 = arith.constant dense<0.000000e+00> : vector<2x128xf32>
    %188 = tpu.matmul %185, %187, %cst_168 {dimension_numbers = #tpu.dot_dimension_numbers<[1], [0], [0], [1], [0, 0, 1, 1], [], []>} : vector<2x128xbf16>, vector<128x128xbf16>, vector<2x128xf32> -> vector<2x128xf32>
    %189 = arith.addf %181, %188 : vector<2x128xf32>
    %c2_169 = arith.constant 2 : index
    %c0_170 = arith.constant 0 : index
    %c0_171 = arith.constant 0 : index
    %190 = vector.load %arg13[%c2_169, %c0_170, %c0_171] : memref<3x2x4xbf16, #tpu.memory_space<vmem>>, vector<1x2x4xbf16>
    %191 = vector.shape_cast %190 : vector<1x2x4xbf16> to vector<2x4xbf16>
    %cst_172 = arith.constant dense<0.000000e+00> : vector<2x128xf32>
    %192 = tpu.matmul %191, %172, %cst_172 {dimension_numbers = #tpu.dot_dimension_numbers<[1], [0], [0], [1], [0, 0, 1, 1], [], []>} : vector<2x4xbf16>, vector<4x128xbf16>, vector<2x128xf32> -> vector<2x128xf32>
    %193 = arith.truncf %192 : vector<2x128xf32> to vector<2x128xbf16>
    %c2_173 = arith.constant 2 : index
    %c0_174 = arith.constant 0 : index
    %c0_175 = arith.constant 0 : index
    %194 = vector.load %arg14[%c2_173, %c0_174, %c0_175] : memref<3x128x128xbf16, #tpu.memory_space<vmem>>, vector<1x128x128xbf16>
    %195 = vector.shape_cast %194 : vector<1x128x128xbf16> to vector<128x128xbf16>
    %cst_176 = arith.constant dense<0.000000e+00> : vector<2x128xf32>
    %196 = tpu.matmul %193, %195, %cst_176 {dimension_numbers = #tpu.dot_dimension_numbers<[1], [0], [0], [1], [0, 0, 1, 1], [], []>} : vector<2x128xbf16>, vector<128x128xbf16>, vector<2x128xf32> -> vector<2x128xf32>
    %197 = arith.addf %189, %196 : vector<2x128xf32>
    %c0_177 = arith.constant 0 : index
    %c0_178 = arith.constant 0 : index
    %198 = vector.load %arg15[%c0_177, %c0_178] : memref<1x128xf32, #tpu.memory_space<vmem>>, vector<1x128xf32>
    %199 = vector.broadcast %198 : vector<1x128xf32> to vector<2x128xf32>
    %200 = arith.addf %197, %199 : vector<2x128xf32>
    %cst_179 = arith.constant 0.000000e+00 : f32
    %201 = vector.broadcast %cst_179 : f32 to vector<2x128xf32>
    %202 = arith.maximumf %200, %201 : vector<2x128xf32>
    %203 = arith.truncf %202 : vector<2x128xf32> to vector<2x128xbf16>
    %c0_180 = arith.constant 0 : index
    %c0_181 = arith.constant 0 : index
    %204 = vector.load %arg16[%c0_180, %c0_181] : memref<2x2xbf16, #tpu.memory_space<vmem>>, vector<2x2xbf16>
    %cst_182 = arith.constant dense<0.000000e+00> : vector<2x128xf32>
    %205 = tpu.matmul %204, %203, %cst_182 {dimension_numbers = #tpu.dot_dimension_numbers<[1], [0], [0], [1], [0, 0, 1, 1], [], []>} : vector<2x2xbf16>, vector<2x128xbf16>, vector<2x128xf32> -> vector<2x128xf32>
    %206 = arith.truncf %205 : vector<2x128xf32> to vector<2x128xbf16>
    %c0_183 = arith.constant 0 : index
    %c0_184 = arith.constant 0 : index
    %207 = vector.load %arg17[%c0_183, %c0_184] : memref<128x1xbf16, #tpu.memory_space<vmem>>, vector<128x1xbf16>
    %cst_185 = arith.constant dense<0.000000e+00> : vector<2x1xf32>
    %208 = tpu.matmul %206, %207, %cst_185 {dimension_numbers = #tpu.dot_dimension_numbers<[1], [0], [0], [1], [0, 0, 1, 1], [], []>} : vector<2x128xbf16>, vector<128x1xbf16>, vector<2x1xf32> -> vector<2x1xf32>
    %c0_186 = arith.constant 0 : index
    %c0_187 = arith.constant 0 : index
    %209 = vector.load %arg18[%c0_186, %c0_187] : memref<1x1xf32, #tpu.memory_space<vmem>>, vector<1x1xf32>
    %210 = vector.broadcast %209 : vector<1x1xf32> to vector<2x1xf32>
    %211 = arith.addf %208, %210 : vector<2x1xf32>
    %c0_188 = arith.constant 0 : index
    %c0_189 = arith.constant 0 : index
    %212 = vector.load %arg19[%c0_188, %c0_189] : memref<2x1xf32, #tpu.memory_space<vmem>>, vector<2x1xf32>
    tpu.vector_store %arg19[%c0_188, %c0_189], %211 {strides = array<i32>} : memref<2x1xf32, #tpu.memory_space<vmem>>, vector<2x1xf32>,
    return
  }
}

</mosaic_0001>

<llo_original>
// kernel: value_model_forward.1
$region0: #{value_model_forward.1}
  #allocation0 [shape = 'u32[]', space=smem, size = 0x4, offset = 0x4, fixed_abs, tag = 'smem constant byte address 0x4 - core index']
  #allocation1 [shape = 'u32[144,128]{1,0:T(1,128)}', space=vmem, size = 0x12000, scoped, tag = 'internal scratch']
  #allocation2 [shape = 'f32[1,1]{1,0:T(1,128)S(1)}', space=vmem, size = 0x200, scoped, tag = 'scoped memory for value_model_forward.1']
  %s0 = inlined_call_operand.vmem [shape: bf16[192,32], index: 0, kind: input, shape index: {}]
  %s1 = inlined_call_operand.hbm [shape: bf16[9,32,192], index: 1, kind: input, shape index: {}]
  %s2 = inlined_call_operand.hbm [shape: bf16[9,32,128], index: 2, kind: input, shape index: {}]
  %s3 = inlined_call_operand.vmem [shape: f32[1,128], index: 3, kind: input, shape index: {}]
  %s4 = inlined_call_operand.vmem [shape: bf16[3,16,32], index: 4, kind: input, shape index: {}]
  %s5 = inlined_call_operand.vmem [shape: bf16[3,128,128], index: 5, kind: input, shape index: {}]
  %s6 = inlined_call_operand.hbm [shape: f32[1,128], index: 6, kind: input, shape index: {}]
  %s7 = inlined_call_operand.vmem [shape: bf16[3,8,16], index: 7, kind: input, shape index: {}]
  %s8 = inlined_call_operand.hbm [shape: bf16[3,128,128], index: 8, kind: input, shape index: {}]
  %s9 = inlined_call_operand.vmem [shape: f32[1,128], index: 9, kind: input, shape index: {}]
  %s10 = inlined_call_operand.vmem [shape: bf16[3,4,8], index: 10, kind: input, shape index: {}]
  %s11 = inlined_call_operand.hbm [shape: bf16[3,128,128], index: 11, kind: input, shape index: {}]
  %s12 = inlined_call_operand.vmem [shape: f32[1,128], index: 12, kind: input, shape index: {}]
  %s13 = inlined_call_operand.vmem [shape: bf16[3,2,4], index: 13, kind: input, shape index: {}]
  %s14 = inlined_call_operand.hbm [shape: bf16[3,128,128], index: 14, kind: input, shape index: {}]
  %s15 = inlined_call_operand.vmem [shape: f32[1,128], index: 15, kind: input, shape index: {}]
  %s16 = inlined_call_operand.vmem [shape: bf16[2,2], index: 16, kind: input, shape index: {}]
  %s17 = inlined_call_operand.vmem [shape: bf16[128,1], index: 17, kind: input, shape index: {}]
  %s18 = inlined_call_operand.<no memory space> [shape: f32[1,1], index: 18, kind: input, shape index: {}]
  %s19 = inlined_call_operand.vmem [shape: f32[2,1], index: 19, kind: output, shape index: {}]
  %s20 = sld [smem:[#allocation0]]
  $region110: #{value_model_forward.1} parent=0
    _
  %s22 = ssub.s32 1, %s20
  %s23 = scalar_select 0, %s22, %s20
  %v24 = vstv %s18
  %25 = vst [vmem:[#allocation2] sm:$0x1] %v24
  $region1: #{value_model_forward.1} parent=0
    #allocation3 [shape = 'u8[147456]{0}', space=vmem, size = 0x24000, scoped, tag = 'input window, operand 1, single buffered']
    #allocation4 [shape = 's32[1]{0}', space=sflag, size = 0x4, scoped, tag = 'scoped memory for value_model_forward.1']
    #allocation5 [shape = 'u8[73728]{0}', space=vmem, size = 0x12000, scoped, tag = 'input window, operand 2, single buffered']
    #allocation6 [shape = 's32[1]{0}', space=sflag, size = 0x4, scoped, tag = 'scoped memory for value_model_forward.1']
    #allocation7 [shape = 'u8[512]{0}', space=vmem, size = 0x400, scoped, tag = 'input window, operand 6, single buffered']
    #allocation8 [shape = 'u8[98304]{0}', space=vmem, size = 0x18000, scoped, tag = 'input window, operand 8, single buffered']
    #allocation9 [shape = 's32[1]{0}', space=sflag, size = 0x4, scoped, tag = 'scoped memory for value_model_forward.1']
    #allocation10 [shape = 'u8[98304]{0}', space=vmem, size = 0x18000, scoped, tag = 'input window, operand 11, single buffered']
    #allocation11 [shape = 'u8[98304]{0}', space=vmem, size = 0x18000, scoped, tag = 'input window, operand 14, single buffered']
    #allocation12 [shape = 's32[1]{0}', space=sflag, size = 0x4, scoped, tag = 'scoped memory for value_model_forward.1']
    %26 = vsyncpa [#allocation4], 0
    %27 = vsyncpa [#allocation6], 0
    %28 = vsyncpa [#allocation9], 0
    %29 = vsyncpa [#allocation12], 0
    // Predicated region
    $region2: #{value_model_forward.1} parent=1 // pred_check
      _
    $region3: #{value_model_forward.1} parent=1 // pred_check_branch
      %31 = sbr.rel (0) target = $region5
    $region4: #{value_model_forward.1} parent=1 // pred_region
      _
    $region5: #{value_model_forward.1} parent=1 // pred_fallthru
      _
    // Predicated region
    $region6: #{value_model_forward.1} parent=1 // pred_check
      _
    $region7: #{value_model_forward.1} parent=1 // pred_check_branch
      %33 = sbr.rel (0) target = $region9
    $region8: #{value_model_forward.1} parent=1 // pred_region
      %s35 = ssub.s32 4608, 4608
      %36 = vsyncadd [#allocation4], %s35
      %s37 = sshll.u32 [#allocation3], 4
      %s38 = int_to_ptr.vmem [resolvable:$true] %s37
      %43 = dma.hbm_to_vmem [thread:$0]  %s1, 4608, %s38, [#allocation4], 128, 128, 8
    $region9: #{value_model_forward.1} parent=1 // pred_fallthru
      _
    // Predicated region
    $region10: #{value_model_forward.1} parent=1 // pred_check
      _
    $region11: #{value_model_forward.1} parent=1 // pred_check_branch
      %45 = sbr.rel (0) target = $region13
    $region12: #{value_model_forward.1} parent=1 // pred_region
      %s47 = ssub.s32 2304, 2304
      %48 = vsyncadd [#allocation6], %s47
      %s49 = sshll.u32 [#allocation5], 4
      %s50 = int_to_ptr.vmem [resolvable:$true] %s49
      %55 = dma.hbm_to_vmem [thread:$0]  %s2, 2304, %s50, [#allocation6], 64, 64, 4
    $region13: #{value_model_forward.1} parent=1 // pred_fallthru
      _
    // Predicated region
    $region14: #{value_model_forward.1} parent=1 // pred_check
      _
    $region15: #{value_model_forward.1} parent=1 // pred_check_branch
      %57 = sbr.rel (0) target = $region17
    $region16: #{value_model_forward.1} parent=1 // pred_region
      _
    $region17: #{value_model_forward.1} parent=1 // pred_fallthru
      _
    // Predicated region
    $region18: #{value_model_forward.1} parent=1 // pred_check
      _
    $region19: #{value_model_forward.1} parent=1 // pred_check_branch
      %59 = sbr.rel (0) target = $region21
    $region20: #{value_model_forward.1} parent=1 // pred_region
      _
    $region21: #{value_model_forward.1} parent=1 // pred_fallthru
      _
    // Predicated region
    $region22: #{value_model_forward.1} parent=1 // pred_check
      _
    $region23: #{value_model_forward.1} parent=1 // pred_check_branch
      %61 = sbr.rel (0) target = $region25
    $region24: #{value_model_forward.1} parent=1 // pred_region
      _
    $region25: #{value_model_forward.1} parent=1 // pred_fallthru
      _
    // Predicated region
    $region26: #{value_model_forward.1} parent=1 // pred_check
      _
    $region27: #{value_model_forward.1} parent=1 // pred_check_branch
      %63 = sbr.rel (0) target = $region29
    $region28: #{value_model_forward.1} parent=1 // pred_region
      %s65 = ssub.s32 16, 16
      %66 = vsyncadd [#allocation6], %s65
      %s68 = sshll.u32 [#allocation7], 4
      %s69 = int_to_ptr.vmem [resolvable:$true] %s68
      %71 = dma.hbm_to_vmem [thread:$0]  %s6, 16, %s69, [#allocation6]
    $region29: #{value_model_forward.1} parent=1 // pred_fallthru
      _
    // Predicated region
    $region30: #{value_model_forward.1} parent=1 // pred_check
      _
    $region31: #{value_model_forward.1} parent=1 // pred_check_branch
      %73 = sbr.rel (0) target = $region33
    $region32: #{value_model_forward.1} parent=1 // pred_region
      _
    $region33: #{value_model_forward.1} parent=1 // pred_fallthru
      _
    // Predicated region
    $region34: #{value_model_forward.1} parent=1 // pred_check
      _
    $region35: #{value_model_forward.1} parent=1 // pred_check_branch
      %75 = sbr.rel (0) target = $region37
    $region36: #{value_model_forward.1} parent=1 // pred_region
      %s77 = ssub.s32 3072, 3072
      %78 = vsyncadd [#allocation9], %s77
      %s79 = sshll.u32 [#allocation8], 4
      %s80 = int_to_ptr.vmem [resolvable:$true] %s79
      %85 = dma.hbm_to_vmem [thread:$0]  %s8, 3072, %s80, [#allocation9], 64, 64, 4
    $region37: #{value_model_forward.1} parent=1 // pred_fallthru
      _
    // Predicated region
    $region38: #{value_model_forward.1} parent=1 // pred_check
      _
    $region39: #{value_model_forward.1} parent=1 // pred_check_branch
      %87 = sbr.rel (0) target = $region41
    $region40: #{value_model_forward.1} parent=1 // pred_region
      _
    $region41: #{value_model_forward.1} parent=1 // pred_fallthru
      _
    // Predicated region
    $region42: #{value_model_forward.1} parent=1 // pred_check
      _
    $region43: #{value_model_forward.1} parent=1 // pred_check_branch
      %89 = sbr.rel (0) target = $region45
    $region44: #{value_model_forward.1} parent=1 // pred_region
      _
    $region45: #{value_model_forward.1} parent=1 // pred_fallthru
      _
    // Predicated region
    $region46: #{value_model_forward.1} parent=1 // pred_check
      _
    $region47: #{value_model_forward.1} parent=1 // pred_check_branch
      %91 = sbr.rel (0) target = $region49
    $region48: #{value_model_forward.1} parent=1 // pred_region
      %s93 = ssub.s32 3072, 3072
      %94 = vsyncadd [#allocation9], %s93
      %s95 = sshll.u32 [#allocation10], 4
      %s96 = int_to_ptr.vmem [resolvable:$true] %s95
      %101 = dma.hbm_to_vmem [thread:$0]  %s11, 3072, %s96, [#allocation9], 64, 64, 4
    $region49: #{value_model_forward.1} parent=1 // pred_fallthru
      _
    // Predicated region
    $region50: #{value_model_forward.1} parent=1 // pred_check
      _
    $region51: #{value_model_forward.1} parent=1 // pred_check_branch
      %103 = sbr.rel (0) target = $region53
    $region52: #{value_model_forward.1} parent=1 // pred_region
      _
    $region53: #{value_model_forward.1} parent=1 // pred_fallthru
      _
    // Predicated region
    $region54: #{value_model_forward.1} parent=1 // pred_check
      _
    $region55: #{value_model_forward.1} parent=1 // pred_check_branch
      %105 = sbr.rel (0) target = $region57
    $region56: #{value_model_forward.1} parent=1 // pred_region
      _
    $region57: #{value_model_forward.1} parent=1 // pred_fallthru
      _
    // Predicated region
    $region58: #{value_model_forward.1} parent=1 // pred_check
      _
    $region59: #{value_model_forward.1} parent=1 // pred_check_branch
      %107 = sbr.rel (0) target = $region61
    $region60: #{value_model_forward.1} parent=1 // pred_region
      %s109 = ssub.s32 3072, 3072
      %110 = vsyncadd [#allocation12], %s109
      %s111 = sshll.u32 [#allocation11], 4
      %s112 = int_to_ptr.vmem [resolvable:$true] %s111
      %117 = dma.hbm_to_vmem [thread:$0]  %s14, 3072, %s112, [#allocation12], 64, 64, 4
    $region61: #{value_model_forward.1} parent=1 // pred_fallthru
      _
    // Predicated region
    $region62: #{value_model_forward.1} parent=1 // pred_check
      _
    $region63: #{value_model_forward.1} parent=1 // pred_check_branch
      %119 = sbr.rel (0) target = $region65
    $region64: #{value_model_forward.1} parent=1 // pred_region
      _
    $region65: #{value_model_forward.1} parent=1 // pred_fallthru
      _
    // Predicated region
    $region66: #{value_model_forward.1} parent=1 // pred_check
      _
    $region67: #{value_model_forward.1} parent=1 // pred_check_branch
      %121 = sbr.rel (0) target = $region69
    $region68: #{value_model_forward.1} parent=1 // pred_region
      _
    $region69: #{value_model_forward.1} parent=1 // pred_fallthru
      _
    // Predicated region
    $region70: #{value_model_forward.1} parent=1 // pred_check
      _
    $region71: #{value_model_forward.1} parent=1 // pred_check_branch
      %123 = sbr.rel (0) target = $region73
    $region72: #{value_model_forward.1} parent=1 // pred_region
      _
    $region73: #{value_model_forward.1} parent=1 // pred_fallthru
      _
    // Predicated region
    $region74: #{value_model_forward.1} parent=1 // pred_check
      _
    $region75: #{value_model_forward.1} parent=1 // pred_check_branch
      %125 = sbr.rel (0) target = $region77
    $region76: #{value_model_forward.1} parent=1 // pred_region
      _
    $region77: #{value_model_forward.1} parent=1 // pred_fallthru
      _
    // Predicated region
    $region78: #{value_model_forward.1} parent=1 // pred_check
      _
    $region79: #{value_model_forward.1} parent=1 // pred_check_branch
      %127 = sbr.rel (0) target = $region81
    $region80: #{value_model_forward.1} parent=1 // pred_region
      %128 = dma.done [#allocation4], 4608
    $region81: #{value_model_forward.1} parent=1 // pred_fallthru
      _
    // Predicated region
    $region82: #{value_model_forward.1} parent=1 // pred_check
      _
    $region83: #{value_model_forward.1} parent=1 // pred_check_branch
      %130 = sbr.rel (0) target = $region85
    $region84: #{value_model_forward.1} parent=1 // pred_region
      %131 = dma.done [#allocation6], 2304
    $region85: #{value_model_forward.1} parent=1 // pred_fallthru
      _
    // Predicated region
    $region86: #{value_model_forward.1} parent=1 // pred_check
      _
    $region87: #{value_model_forward.1} parent=1 // pred_check_branch
      %133 = sbr.rel (0) target = $region89
    $region88: #{value_model_forward.1} parent=1 // pred_region
      %134 = dma.done [#allocation6], 16
    $region89: #{value_model_forward.1} parent=1 // pred_fallthru
      _
    // Predicated region
    $region90: #{value_model_forward.1} parent=1 // pred_check
      _
    $region91: #{value_model_forward.1} parent=1 // pred_check_branch
      %136 = sbr.rel (0) target = $region93
    $region92: #{value_model_forward.1} parent=1 // pred_region
      %137 = dma.done [#allocation9], 3072
    $region93: #{value_model_forward.1} parent=1 // pred_fallthru
      _
    // Predicated region
    $region94: #{value_model_forward.1} parent=1 // pred_check
      _
    $region95: #{value_model_forward.1} parent=1 // pred_check_branch
      %139 = sbr.rel (0) target = $region97
    $region96: #{value_model_forward.1} parent=1 // pred_region
      %140 = dma.done [#allocation9], 3072
    $region97: #{value_model_forward.1} parent=1 // pred_fallthru
      _
    // Predicated region
    $region98: #{value_model_forward.1} parent=1 // pred_check
      _
    $region99: #{value_model_forward.1} parent=1 // pred_check_branch
      %142 = sbr.rel (0) target = $region101
    $region100: #{value_model_forward.1} parent=1 // pred_region
      %143 = dma.done [#allocation12], 3072
    $region101: #{value_model_forward.1} parent=1 // pred_fallthru
      _
    %v145 = vld [vmem:[%s0] sm:$0xf]
    %v146 = vld [vmem:[%s0 + $0x4] sm:$0xf]
    %v147 = vld [vmem:[%s0 + $0x8] sm:$0xf]
    %v148 = vld [vmem:[%s0 + $0xc] sm:$0xf]
    %v149 = vld [vmem:[%s0 + $0x10] sm:$0xf]
    %v150 = vld [vmem:[%s0 + $0x14] sm:$0xf]
    %v151 = vld [vmem:[%s0 + $0x18] sm:$0xf]
    %v152 = vld [vmem:[%s0 + $0x1c] sm:$0xf]
    %v153 = vld [vmem:[%s0 + $0x20] sm:$0xf]
    %v154 = vld [vmem:[%s0 + $0x24] sm:$0xf]
    %v155 = vld [vmem:[%s0 + $0x28] sm:$0xf]
    %v156 = vld [vmem:[%s0 + $0x2c] sm:$0xf]
    %v157 = vld [vmem:[%s0 + $0x30] sm:$0xf]
    %v158 = vld [vmem:[%s0 + $0x34] sm:$0xf]
    %v159 = vld [vmem:[%s0 + $0x38] sm:$0xf]
    %v160 = vld [vmem:[%s0 + $0x3c] sm:$0xf]
    %v161 = vld [vmem:[%s0 + $0x40] sm:$0xf]
    %v162 = vld [vmem:[%s0 + $0x44] sm:$0xf]
    %v163 = vld [vmem:[%s0 + $0x48] sm:$0xf]
    %v164 = vld [vmem:[%s0 + $0x4c] sm:$0xf]
    %v165 = vld [vmem:[%s0 + $0x50] sm:$0xf]
    %v166 = vld [vmem:[%s0 + $0x54] sm:$0xf]
    %v167 = vld [vmem:[%s0 + $0x58] sm:$0xf]
    %v168 = vld [vmem:[%s0 + $0x5c] sm:$0xf]
    %v169 = vld [vmem:[#allocation3] sm:$0xff]
    %v170 = vld [vmem:[#allocation3 + $0x8] sm:$0xff]
    %v171 = vld [vmem:[#allocation3 + $0x10] sm:$0xff]
    %v172 = vld [vmem:[#allocation3 + $0x18] sm:$0xff]
    %v177 = vunpack.c.l.b16 %v169
    %v178 = vunpack.c.h.b16 %v169
    %v179 = vunpack.c.l.b16 %v170
    %v180 = vunpack.c.h.b16 %v170
    %v181 = vunpack.c.l.b16 %v171
    %v182 = vunpack.c.h.b16 %v171
    %v183 = vunpack.c.l.b16 %v172
    %v184 = vunpack.c.h.b16 %v172
    %v185 = vpack.c.b16 %v179, %v177
    %v186 = vpack.c.b16 %v180, %v178
    %v187 = vpack.c.b16 %v183, %v181
    %v188 = vpack.c.b16 %v184, %v182
    %v215 = vunpack.c.l.b16 %v145
    %v216 = vunpack.c.l.b16 %v146
    %v217 = vunpack.c.l.b16 %v147
    %v218 = vunpack.c.l.b16 %v148
    %v219 = vunpack.c.l.b16 %v149
    %v220 = vunpack.c.l.b16 %v150
    %v221 = vunpack.c.l.b16 %v151
    %v222 = vunpack.c.l.b16 %v152
    %v223 = vunpack.c.l.b16 %v153
    %v224 = vunpack.c.l.b16 %v154
    %v225 = vunpack.c.l.b16 %v155
    %v226 = vunpack.c.l.b16 %v156
    %v227 = vunpack.c.l.b16 %v157
    %v228 = vunpack.c.l.b16 %v158
    %v229 = vunpack.c.l.b16 %v159
    %v230 = vunpack.c.l.b16 %v160
    %v231 = vunpack.c.l.b16 %v161
    %v232 = vunpack.c.l.b16 %v162
    %v233 = vunpack.c.l.b16 %v163
    %v234 = vunpack.c.l.b16 %v164
    %v235 = vunpack.c.l.b16 %v165
    %v236 = vunpack.c.l.b16 %v166
    %v237 = vunpack.c.l.b16 %v167
    %v238 = vunpack.c.l.b16 %v168
    %v239 = vpack.c.b16 %v216, %v215
    %v240 = vpack.c.b16 %v218, %v217
    %v241 = vpack.c.b16 %v220, %v219
    %v242 = vpack.c.b16 %v222, %v221
    %v243 = vpack.c.b16 %v224, %v223
    %v244 = vpack.c.b16 %v226, %v225
    %v245 = vpack.c.b16 %v228, %v227
    %v246 = vpack.c.b16 %v230, %v229
    %v247 = vpack.c.b16 %v232, %v231
    %v248 = vpack.c.b16 %v234, %v233
    %v249 = vpack.c.b16 %v236, %v235
    %v250 = vpack.c.b16 %v238, %v237
    %vm263 = vcmask 523264
    %v265 = vsel %vm263, %v186, 0
    %v268 = vsel %vm263, %v188, 0
    %270 = vmatprep.subr.bf16.mxu0 0
    %271 = vmatpush1.bf16.msra.mxu0 %v239
    %272 = vmatprep.subr.bf16.mxu0 0
    %273 = vmatpush1.bf16.msra.mxu0 %v240
    %274 = vmatprep.subr.bf16.mxu0 0
    %275 = vmatpush1.bf16.msra.mxu0 %v241
    %276 = vmatprep.subr.bf16.mxu0 0
    %277 = vmatpush1.bf16.msra.mxu0 %v242
    %278 = vmatprep.subr.bf16.mxu0 0
    %279 = vmatpush1.bf16.msra.mxu0 %v243
    %280 = vmatprep.subr.bf16.mxu0 0
    %281 = vmatpush1.bf16.msra.mxu0 %v244
    %282 = vmatprep.subr.bf16.mxu0 0
    %283 = vmatpush1.bf16.msra.mxu0 %v245
    %284 = vmatprep.subr.bf16.mxu0 0
    %285 = vmatpush1.bf16.msra.mxu0 %v246
    %286 = vmatprep.subr.bf16.mxu0 0
    %287 = vmatpush1.bf16.msra.mxu0 %v247
    %288 = vmatprep.subr.bf16.mxu0 0
    %289 = vmatpush1.bf16.msra.mxu0 %v248
    %290 = vmatprep.subr.bf16.mxu0 0
    %291 = vmatpush1.bf16.msra.mxu0 %v249
    %292 = vmatprep.subr.bf16.mxu0 0
    %293 = vmatpush1.bf16.msra.mxu0 %v250
    %294 = vmatprep.subr.bf16.mxu0 0
    %295 = vmatpush1.bf16.msra.mxu0 0
    %296 = vmatprep.subr.bf16.mxu0 0
    %297 = vmatpush1.bf16.msra.mxu0 0
    %298 = vmatprep.subr.bf16.mxu0 0
    %299 = vmatpush1.bf16.msra.mxu0 0
    %300 = vmatprep.subr.bf16.mxu0 0
    %301 = vmatpush1.bf16.msra.mxu0 0
    %302 = vmatprep.mubr.bf16.mxu0 %v265
    %303 = vmatmul.mubr.bf16.gmra.mrb[0].mxu0 %v185
    %v304 = vpop.f32.mrb[0].mxu0
    %v305 = vadd.f32 0.0, %v304
    %v306 = vpop.f32.mrb[0].mxu0
    %v307 = vpop.f32.mrb[0].mxu0
    %v308 = vadd.f32 0.0, %v307
    %v309 = vpop.f32.mrb[0].mxu0
    %310 = vmatprep.mubr.bf16.mxu0 %v268
    %311 = vmatmul.mubr.bf16.gmra.mrb[0].mxu0 %v187
    %v312 = vpop.f32.mrb[0].mxu0
    %v313 = vadd.f32 0.0, %v312
    %v314 = vpop.f32.mrb[0].mxu0
    %v315 = vpop.f32.mrb[0].mxu0
    %v316 = vadd.f32 0.0, %v315
    %v317 = vpop.f32.mrb[0].mxu0
    %318 = vdwg.mxu0
    %v319 = vpack.c.bf16 %v308, %v305
    %v320 = vpack.c.bf16 %v316, %v313
    %v321 = vld [vmem:[#allocation5] sm:$0xf]
    %v322 = vld [vmem:[#allocation5 + $0x4] sm:$0xf]
    %v323 = vld [vmem:[#allocation5 + $0x8] sm:$0xf]
    %v324 = vld [vmem:[#allocation5 + $0xc] sm:$0xf]
    %s325 = scalar_lea.vmem [#allocation3], 32
    %v326 = vld [vmem:[%s325] sm:$0xff]
    %v327 = vld [vmem:[%s325 + $0x8] sm:$0xff]
    %v328 = vld [vmem:[%s325 + $0x10] sm:$0xff]
    %v329 = vld [vmem:[%s325 + $0x18] sm:$0xff]
    %v334 = vunpack.c.l.b16 %v326
    %v335 = vunpack.c.h.b16 %v326
    %v336 = vunpack.c.l.b16 %v327
    %v337 = vunpack.c.h.b16 %v327
    %v338 = vunpack.c.l.b16 %v328
    %v339 = vunpack.c.h.b16 %v328
    %v340 = vunpack.c.l.b16 %v329
    %v341 = vunpack.c.h.b16 %v329
    %v342 = vpack.c.b16 %v336, %v334
    %v343 = vpack.c.b16 %v337, %v335
    %v344 = vpack.c.b16 %v340, %v338
    %v345 = vpack.c.b16 %v341, %v339
    %v349 = vsel %vm263, %v343, 0
    %v352 = vsel %vm263, %v345, 0
    %354 = vmatprep.subr.bf16.mxu0 0
    %355 = vmatpush1.bf16.msra.mxu0 %v239
    %356 = vmatprep.subr.bf16.mxu0 0
    %357 = vmatpush1.bf16.msra.mxu0 %v240
    %358 = vmatprep.subr.bf16.mxu0 0
    %359 = vmatpush1.bf16.msra.mxu0 %v241
    %360 = vmatprep.subr.bf16.mxu0 0
    %361 = vmatpush1.bf16.msra.mxu0 %v242
    %362 = vmatprep.subr.bf16.mxu0 0
    %363 = vmatpush1.bf16.msra.mxu0 %v243
    %364 = vmatprep.subr.bf16.mxu0 0
    %365 = vmatpush1.bf16.msra.mxu0 %v244
    %366 = vmatprep.subr.bf16.mxu0 0
    %367 = vmatpush1.bf16.msra.mxu0 %v245
    %368 = vmatprep.subr.bf16.mxu0 0
    %369 = vmatpush1.bf16.msra.mxu0 %v246
    %370 = vmatprep.subr.bf16.mxu0 0
    %371 = vmatpush1.bf16.msra.mxu0 %v247
    %372 = vmatprep.subr.bf16.mxu0 0
    %373 = vmatpush1.bf16.msra.mxu0 %v248
    %374 = vmatprep.subr.bf16.mxu0 0
    %375 = vmatpush1.bf16.msra.mxu0 %v249
    %376 = vmatprep.subr.bf16.mxu0 0
    %377 = vmatpush1.bf16.msra.mxu0 %v250
    %378 = vmatprep.subr.bf16.mxu0 0
    %379 = vmatpush1.bf16.msra.mxu0 0
    %380 = vmatprep.subr.bf16.mxu0 0
    %381 = vmatpush1.bf16.msra.mxu0 0
    %382 = vmatprep.subr.bf16.mxu0 0
    %383 = vmatpush1.bf16.msra.mxu0 0
    %384 = vmatprep.subr.bf16.mxu0 0
    %385 = vmatpush1.bf16.msra.mxu0 0
    %386 = vmatprep.mubr.bf16.mxu0 %v349
    %387 = vmatmul.mubr.bf16.gmra.mrb[0].mxu0 %v342
    %v388 = vpop.f32.mrb[0].mxu0
    %v389 = vadd.f32 0.0, %v388
    %v390 = vpop.f32.mrb[0].mxu0
    %v391 = vpop.f32.mrb[0].mxu0
    %v392 = vadd.f32 0.0, %v391
    %v393 = vpop.f32.mrb[0].mxu0
    %394 = vmatprep.mubr.bf16.mxu0 %v352
    %395 = vmatmul.mubr.bf16.gmra.mrb[0].mxu0 %v344
    %v396 = vpop.f32.mrb[0].mxu0
    %v397 = vadd.f32 0.0, %v396
    %v398 = vpop.f32.mrb[0].mxu0
    %v399 = vpop.f32.mrb[0].mxu0
    %v400 = vadd.f32 0.0, %v399
    %v401 = vpop.f32.mrb[0].mxu0
    %402 = vdwg.mxu0
    %v403 = vpack.c.bf16 %v392, %v389
    %v404 = vpack.c.bf16 %v400, %v397
    %s405 = scalar_lea.vmem [#allocation5], 16
    %v406 = vld [vmem:[%s405] sm:$0xf]
    %v407 = vld [vmem:[%s405 + $0x4] sm:$0xf]
    %v408 = vld [vmem:[%s405 + $0x8] sm:$0xf]
    %v409 = vld [vmem:[%s405 + $0xc] sm:$0xf]
    %v414 = vunpack.c.l.b16 %v406
    %v415 = vunpack.c.l.b16 %v407
    %v416 = vunpack.c.l.b16 %v408
    %v417 = vunpack.c.l.b16 %v409
    %v418 = vpack.c.b16 %v415, %v414
    %v419 = vpack.c.b16 %v417, %v416
    %vm422 = vcmask 261120
    %v424 = vsel %vm422, %v403, 0
    %v427 = vsel %vm422, %v404, 0
    %429 = vmatprep.subr.bf16.mxu0 0
    %430 = vmatpush1.bf16.msra.mxu0 %v418
    %431 = vmatprep.subr.bf16.mxu0 0
    %432 = vmatpush1.bf16.msra.mxu0 %v419
    %433 = vmatprep.subr.bf16.mxu0 0
    %434 = vmatpush1.bf16.msra.mxu0 0
    %435 = vmatprep.subr.bf16.mxu0 0
    %436 = vmatpush1.bf16.msra.mxu0 0
    %437 = vmatprep.subr.bf16.mxu0 0
    %438 = vmatpush1.bf16.msra.mxu0 0
    %439 = vmatprep.subr.bf16.mxu0 0
    %440 = vmatpush1.bf16.msra.mxu0 0
    %441 = vmatprep.subr.bf16.mxu0 0
    %442 = vmatpush1.bf16.msra.mxu0 0
    %443 = vmatprep.subr.bf16.mxu0 0
    %444 = vmatpush1.bf16.msra.mxu0 0
    %445 = vmatprep.subr.bf16.mxu0 0
    %446 = vmatpush1.bf16.msra.mxu0 0
    %447 = vmatprep.subr.bf16.mxu0 0
    %448 = vmatpush1.bf16.msra.mxu0 0
    %449 = vmatprep.subr.bf16.mxu0 0
    %450 = vmatpush1.bf16.msra.mxu0 0
    %451 = vmatprep.subr.bf16.mxu0 0
    %452 = vmatpush1.bf16.msra.mxu0 0
    %453 = vmatprep.subr.bf16.mxu0 0
    %454 = vmatpush1.bf16.msra.mxu0 0
    %455 = vmatprep.subr.bf16.mxu0 0
    %456 = vmatpush1.bf16.msra.mxu0 0
    %457 = vmatprep.subr.bf16.mxu0 0
    %458 = vmatpush1.bf16.msra.mxu0 0
    %459 = vmatprep.subr.bf16.mxu0 0
    %460 = vmatpush1.bf16.msra.mxu0 0
    %461 = vmatprep.mubr.bf16.mxu0 0
    %462 = vmatmul.mubr.bf16.gmra.mrb[0].mxu0 %v424
    %v463 = vpop.f32.mrb[0].mxu0
    %v464 = vadd.f32 0.0, %v463
    %v465 = vpop.f32.mrb[0].mxu0
    %v466 = vpop.f32.mrb[0].mxu0
    %v467 = vadd.f32 0.0, %v466
    %v468 = vpop.f32.mrb[0].mxu0
    %469 = vmatprep.mubr.bf16.mxu0 0
    %470 = vmatmul.mubr.bf16.gmra.mrb[0].mxu0 %v427
    %v471 = vpop.f32.mrb[0].mxu0
    %v472 = vadd.f32 0.0, %v471
    %v473 = vpop.f32.mrb[0].mxu0
    %v474 = vpop.f32.mrb[0].mxu0
    %v475 = vadd.f32 0.0, %v474
    %v476 = vpop.f32.mrb[0].mxu0
    %477 = vdwg.mxu0
    %v482 = vunpack.c.l.b16 %v321
    %v483 = vunpack.c.l.b16 %v322
    %v484 = vunpack.c.l.b16 %v323
    %v485 = vunpack.c.l.b16 %v324
    %v486 = vpack.c.b16 %v483, %v482
    %v487 = vpack.c.b16 %v485, %v484
    %v491 = vsel %vm422, %v319, 0
    %v494 = vsel %vm422, %v320, 0
    %496 = vmatprep.subr.bf16.mxu0 0
    %497 = vmatpush1.bf16.msra.mxu0 %v486
    %498 = vmatprep.subr.bf16.mxu0 0
    %499 = vmatpush1.bf16.msra.mxu0 %v487
    %500 = vmatprep.subr.bf16.mxu0 0
    %501 = vmatpush1.bf16.msra.mxu0 0
    %502 = vmatprep.subr.bf16.mxu0 0
    %503 = vmatpush1.bf16.msra.mxu0 0
    %504 = vmatprep.subr.bf16.mxu0 0
    %505 = vmatpush1.bf16.msra.mxu0 0
    %506 = vmatprep.subr.bf16.mxu0 0
    %507 = vmatpush1.bf16.msra.mxu0 0
    %508 = vmatprep.subr.bf16.mxu0 0
    %509 = vmatpush1.bf16.msra.mxu0 0
    %510 = vmatprep.subr.bf16.mxu0 0
    %511 = vmatpush1.bf16.msra.mxu0 0
    %512 = vmatprep.subr.bf16.mxu0 0
    %513 = vmatpush1.bf16.msra.mxu0 0
    %514 = vmatprep.subr.bf16.mxu0 0
    %515 = vmatpush1.bf16.msra.mxu0 0
    %516 = vmatprep.subr.bf16.mxu0 0
    %517 = vmatpush1.bf16.msra.mxu0 0
    %518 = vmatprep.subr.bf16.mxu0 0
    %519 = vmatpush1.bf16.msra.mxu0 0
    %520 = vmatprep.subr.bf16.mxu0 0
    %521 = vmatpush1.bf16.msra.mxu0 0
    %522 = vmatprep.subr.bf16.mxu0 0
    %523 = vmatpush1.bf16.msra.mxu0 0
    %524 = vmatprep.subr.bf16.mxu0 0
    %525 = vmatpush1.bf16.msra.mxu0 0
    %526 = vmatprep.subr.bf16.mxu0 0
    %527 = vmatpush1.bf16.msra.mxu0 0
    %528 = vmatprep.mubr.bf16.mxu0 0
    %529 = vmatmul.mubr.bf16.gmra.mrb[0].mxu0 %v491
    %v530 = vpop.f32.mrb[0].mxu0
    %v531 = vadd.f32 %v464, %v530
    %v532 = vpop.f32.mrb[0].mxu0
    %v533 = vpop.f32.mrb[0].mxu0
    %v534 = vadd.f32 %v467, %v533
    %v535 = vpop.f32.mrb[0].mxu0
    %536 = vmatprep.mubr.bf16.mxu0 0
    %537 = vmatmul.mubr.bf16.gmra.mrb[0].mxu0 %v494
    %v538 = vpop.f32.mrb[0].mxu0
    %v539 = vadd.f32 %v472, %v538
    %v540 = vpop.f32.mrb[0].mxu0
    %v541 = vpop.f32.mrb[0].mxu0
    %v542 = vadd.f32 %v475, %v541
    %v543 = vpop.f32.mrb[0].mxu0
    %544 = vdwg.mxu0
    %s545 = scalar_lea.vmem [#allocation3], 64
    %v546 = vld [vmem:[%s545] sm:$0xff]
    %v547 = vld [vmem:[%s545 + $0x8] sm:$0xff]
    %v548 = vld [vmem:[%s545 + $0x10] sm:$0xff]
    %v549 = vld [vmem:[%s545 + $0x18] sm:$0xff]
    %v554 = vunpack.c.l.b16 %v546
    %v555 = vunpack.c.h.b16 %v546
    %v556 = vunpack.c.l.b16 %v547
    %v557 = vunpack.c.h.b16 %v547
    %v558 = vunpack.c.l.b16 %v548
    %v559 = vunpack.c.h.b16 %v548
    %v560 = vunpack.c.l.b16 %v549
    %v561 = vunpack.c.h.b16 %v549
    %v562 = vpack.c.b16 %v556, %v554
    %v563 = vpack.c.b16 %v557, %v555
    %v564 = vpack.c.b16 %v560, %v558
    %v565 = vpack.c.b16 %v561, %v559
    %v569 = vsel %vm263, %v563, 0
    %v572 = vsel %vm263, %v565, 0
    %574 = vmatprep.subr.bf16.mxu0 0
    %575 = vmatpush1.bf16.msra.mxu0 %v239
    %576 = vmatprep.subr.bf16.mxu0 0
    %577 = vmatpush1.bf16.msra.mxu0 %v240
    %578 = vmatprep.subr.bf16.mxu0 0
    %579 = vmatpush1.bf16.msra.mxu0 %v241
    %580 = vmatprep.subr.bf16.mxu0 0
    %581 = vmatpush1.bf16.msra.mxu0 %v242
    %582 = vmatprep.subr.bf16.mxu0 0
    %583 = vmatpush1.bf16.msra.mxu0 %v243
    %584 = vmatprep.subr.bf16.mxu0 0
    %585 = vmatpush1.bf16.msra.mxu0 %v244
    %586 = vmatprep.subr.bf16.mxu0 0
    %587 = vmatpush1.bf16.msra.mxu0 %v245
    %588 = vmatprep.subr.bf16.mxu0 0
    %589 = vmatpush1.bf16.msra.mxu0 %v246
    %590 = vmatprep.subr.bf16.mxu0 0
    %591 = vmatpush1.bf16.msra.mxu0 %v247
    %592 = vmatprep.subr.bf16.mxu0 0
    %593 = vmatpush1.bf16.msra.mxu0 %v248
    %594 = vmatprep.subr.bf16.mxu0 0
    %595 = vmatpush1.bf16.msra.mxu0 %v249
    %596 = vmatprep.subr.bf16.mxu0 0
    %597 = vmatpush1.bf16.msra.mxu0 %v250
    %598 = vmatprep.subr.bf16.mxu0 0
    %599 = vmatpush1.bf16.msra.mxu0 0
    %600 = vmatprep.subr.bf16.mxu0 0
    %601 = vmatpush1.bf16.msra.mxu0 0
    %602 = vmatprep.subr.bf16.mxu0 0
    %603 = vmatpush1.bf16.msra.mxu0 0
    %604 = vmatprep.subr.bf16.mxu0 0
    %605 = vmatpush1.bf16.msra.mxu0 0
    %606 = vmatprep.mubr.bf16.mxu0 %v569
    %607 = vmatmul.mubr.bf16.gmra.mrb[0].mxu0 %v562
    %v608 = vpop.f32.mrb[0].mxu0
    %v609 = vadd.f32 0.0, %v608
    %v610 = vpop.f32.mrb[0].mxu0
    %v611 = vpop.f32.mrb[0].mxu0
    %v612 = vadd.f32 0.0, %v611
    %v613 = vpop.f32.mrb[0].mxu0
    %614 = vmatprep.mubr.bf16.mxu0 %v572
    %615 = vmatmul.mubr.bf16.gmra.mrb[0].mxu0 %v564
    %v616 = vpop.f32.mrb[0].mxu0
    %v617 = vadd.f32 0.0, %v616
    %v618 = vpop.f32.mrb[0].mxu0
    %v619 = vpop.f32.mrb[0].mxu0
    %v620 = vadd.f32 0.0, %v619
    %v621 = vpop.f32.mrb[0].mxu0
    %622 = vdwg.mxu0
    %v623 = vpack.c.bf16 %v612, %v609
    %v624 = vpack.c.bf16 %v620, %v617
    %s625 = scalar_lea.vmem [#allocation5], 32
    %v626 = vld [vmem:[%s625] sm:$0xf]
    %v627 = vld [vmem:[%s625 + $0x4] sm:$0xf]
    %v628 = vld [vmem:[%s625 + $0x8] sm:$0xf]
    %v629 = vld [vmem:[%s625 + $0xc] sm:$0xf]
    %v634 = vunpack.c.l.b16 %v626
    %v635 = vunpack.c.l.b16 %v627
    %v636 = vunpack.c.l.b16 %v628
    %v637 = vunpack.c.l.b16 %v629
    %v638 = vpack.c.b16 %v635, %v634
    %v639 = vpack.c.b16 %v637, %v636
    %v643 = vsel %vm422, %v623, 0
    %v646 = vsel %vm422, %v624, 0
    %648 = vmatprep.subr.bf16.mxu0 0
    %649 = vmatpush1.bf16.msra.mxu0 %v638
    %650 = vmatprep.subr.bf16.mxu0 0
    %651 = vmatpush1.bf16.msra.mxu0 %v639
    %652 = vmatprep.subr.bf16.mxu0 0
    %653 = vmatpush1.bf16.msra.mxu0 0
    %654 = vmatprep.subr.bf16.mxu0 0
    %655 = vmatpush1.bf16.msra.mxu0 0
    %656 = vmatprep.subr.bf16.mxu0 0
    %657 = vmatpush1.bf16.msra.mxu0 0
    %658 = vmatprep.subr.bf16.mxu0 0
    %659 = vmatpush1.bf16.msra.mxu0 0
    %660 = vmatprep.subr.bf16.mxu0 0
    %661 = vmatpush1.bf16.msra.mxu0 0
    %662 = vmatprep.subr.bf16.mxu0 0
    %663 = vmatpush1.bf16.msra.mxu0 0
    %664 = vmatprep.subr.bf16.mxu0 0
    %665 = vmatpush1.bf16.msra.mxu0 0
    %666 = vmatprep.subr.bf16.mxu0 0
    %667 = vmatpush1.bf16.msra.mxu0 0
    %668 = vmatprep.subr.bf16.mxu0 0
    %669 = vmatpush1.bf16.msra.mxu0 0
    %670 = vmatprep.subr.bf16.mxu0 0
    %671 = vmatpush1.bf16.msra.mxu0 0
    %672 = vmatprep.subr.bf16.mxu0 0
    %673 = vmatpush1.bf16.msra.mxu0 0
    %674 = vmatprep.subr.bf16.mxu0 0
    %675 = vmatpush1.bf16.msra.mxu0 0
    %676 = vmatprep.subr.bf16.mxu0 0
    %677 = vmatpush1.bf16.msra.mxu0 0
    %678 = vmatprep.subr.bf16.mxu0 0
    %679 = vmatpush1.bf16.msra.mxu0 0
    %680 = vmatprep.mubr.bf16.mxu0 0
    %681 = vmatmul.mubr.bf16.gmra.mrb[0].mxu0 %v643
    %v682 = vpop.f32.mrb[0].mxu0
    %v683 = vadd.f32 0.0, %v682
    %v684 = vpop.f32.mrb[0].mxu0
    %v685 = vpop.f32.mrb[0].mxu0
    %v686 = vadd.f32 0.0, %v685
    %v687 = vpop.f32.mrb[0].mxu0
    %688 = vmatprep.mubr.bf16.mxu0 0
    %689 = vmatmul.mubr.bf16.gmra.mrb[0].mxu0 %v646
    %v690 = vpop.f32.mrb[0].mxu0
    %v691 = vadd.f32 0.0, %v690
    %v692 = vpop.f32.mrb[0].mxu0
    %v693 = vpop.f32.mrb[0].mxu0
    %v694 = vadd.f32 0.0, %v693
    %v695 = vpop.f32.mrb[0].mxu0
    %696 = vdwg.mxu0
    %v697 = vadd.f32 %v531, %v683
    %v698 = vadd.f32 %v534, %v686
    %v699 = vadd.f32 %v539, %v691
    %v700 = vadd.f32 %v542, %v694
    %s701 = scalar_lea.vmem [#allocation3], 96
    %v702 = vld [vmem:[%s701] sm:$0xff]
    %v703 = vld [vmem:[%s701 + $0x8] sm:$0xff]
    %v704 = vld [vmem:[%s701 + $0x10] sm:$0xff]
    %v705 = vld [vmem:[%s701 + $0x18] sm:$0xff]
    %v710 = vunpack.c.l.b16 %v702
    %v711 = vunpack.c.h.b16 %v702
    %v712 = vunpack.c.l.b16 %v703
    %v713 = vunpack.c.h.b16 %v703
    %v714 = vunpack.c.l.b16 %v704
    %v715 = vunpack.c.h.b16 %v704
    %v716 = vunpack.c.l.b16 %v705
    %v717 = vunpack.c.h.b16 %v705
    %v718 = vpack.c.b16 %v712, %v710
    %v719 = vpack.c.b16 %v713, %v711
    %v720 = vpack.c.b16 %v716, %v714
    %v721 = vpack.c.b16 %v717, %v715
    %v725 = vsel %vm263, %v719, 0
    %v728 = vsel %vm263, %v721, 0
    %730 = vmatprep.subr.bf16.mxu0 0
    %731 = vmatpush1.bf16.msra.mxu0 %v239
    %732 = vmatprep.subr.bf16.mxu0 0
    %733 = vmatpush1.bf16.msra.mxu0 %v240
    %734 = vmatprep.subr.bf16.mxu0 0
    %735 = vmatpush1.bf16.msra.mxu0 %v241
    %736 = vmatprep.subr.bf16.mxu0 0
    %737 = vmatpush1.bf16.msra.mxu0 %v242
    %738 = vmatprep.subr.bf16.mxu0 0
    %739 = vmatpush1.bf16.msra.mxu0 %v243
    %740 = vmatprep.subr.bf16.mxu0 0
    %741 = vmatpush1.bf16.msra.mxu0 %v244
    %742 = vmatprep.subr.bf16.mxu0 0
    %743 = vmatpush1.bf16.msra.mxu0 %v245
    %744 = vmatprep.subr.bf16.mxu0 0
    %745 = vmatpush1.bf16.msra.mxu0 %v246
    %746 = vmatprep.subr.bf16.mxu0 0
    %747 = vmatpush1.bf16.msra.mxu0 %v247
    %748 = vmatprep.subr.bf16.mxu0 0
    %749 = vmatpush1.bf16.msra.mxu0 %v248
    %750 = vmatprep.subr.bf16.mxu0 0
    %751 = vmatpush1.bf16.msra.mxu0 %v249
    %752 = vmatprep.subr.bf16.mxu0 0
    %753 = vmatpush1.bf16.msra.mxu0 %v250
    %754 = vmatprep.subr.bf16.mxu0 0
    %755 = vmatpush1.bf16.msra.mxu0 0
    %756 = vmatprep.subr.bf16.mxu0 0
    %757 = vmatpush1.bf16.msra.mxu0 0
    %758 = vmatprep.subr.bf16.mxu0 0
    %759 = vmatpush1.bf16.msra.mxu0 0
    %760 = vmatprep.subr.bf16.mxu0 0
    %761 = vmatpush1.bf16.msra.mxu0 0
    %762 = vmatprep.mubr.bf16.mxu0 %v725
    %763 = vmatmul.mubr.bf16.gmra.mrb[0].mxu0 %v718
    %v764 = vpop.f32.mrb[0].mxu0
    %v765 = vadd.f32 0.0, %v764
    %v766 = vpop.f32.mrb[0].mxu0
    %v767 = vpop.f32.mrb[0].mxu0
    %v768 = vadd.f32 0.0, %v767
    %v769 = vpop.f32.mrb[0].mxu0
    %770 = vmatprep.mubr.bf16.mxu0 %v728
    %771 = vmatmul.mubr.bf16.gmra.mrb[0].mxu0 %v720
    %v772 = vpop.f32.mrb[0].mxu0
    %v773 = vadd.f32 0.0, %v772
    %v774 = vpop.f32.mrb[0].mxu0
    %v775 = vpop.f32.mrb[0].mxu0
    %v776 = vadd.f32 0.0, %v775
    %v777 = vpop.f32.mrb[0].mxu0
    %778 = vdwg.mxu0
    %v779 = vpack.c.bf16 %v768, %v765
    %v780 = vpack.c.bf16 %v776, %v773
    %s781 = scalar_lea.vmem [#allocation5], 48
    %v782 = vld [vmem:[%s781] sm:$0xf]
    %v783 = vld [vmem:[%s781 + $0x4] sm:$0xf]
    %v784 = vld [vmem:[%s781 + $0x8] sm:$0xf]
    %v785 = vld [vmem:[%s781 + $0xc] sm:$0xf]
    %v790 = vunpack.c.l.b16 %v782
    %v791 = vunpack.c.l.b16 %v783
    %v792 = vunpack.c.l.b16 %v784
    %v793 = vunpack.c.l.b16 %v785
    %v794 = vpack.c.b16 %v791, %v790
    %v795 = vpack.c.b16 %v793, %v792
    %v799 = vsel %vm422, %v779, 0
    %v802 = vsel %vm422, %v780, 0
    %804 = vmatprep.subr.bf16.mxu0 0
    %805 = vmatpush1.bf16.msra.mxu0 %v794
    %806 = vmatprep.subr.bf16.mxu0 0
    %807 = vmatpush1.bf16.msra.mxu0 %v795
    %808 = vmatprep.subr.bf16.mxu0 0
    %809 = vmatpush1.bf16.msra.mxu0 0
    %810 = vmatprep.subr.bf16.mxu0 0
    %811 = vmatpush1.bf16.msra.mxu0 0
    %812 = vmatprep.subr.bf16.mxu0 0
    %813 = vmatpush1.bf16.msra.mxu0 0
    %814 = vmatprep.subr.bf16.mxu0 0
    %815 = vmatpush1.bf16.msra.mxu0 0
    %816 = vmatprep.subr.bf16.mxu0 0
    %817 = vmatpush1.bf16.msra.mxu0 0
    %818 = vmatprep.subr.bf16.mxu0 0
    %819 = vmatpush1.bf16.msra.mxu0 0
    %820 = vmatprep.subr.bf16.mxu0 0
    %821 = vmatpush1.bf16.msra.mxu0 0
    %822 = vmatprep.subr.bf16.mxu0 0
    %823 = vmatpush1.bf16.msra.mxu0 0
    %824 = vmatprep.subr.bf16.mxu0 0
    %825 = vmatpush1.bf16.msra.mxu0 0
    %826 = vmatprep.subr.bf16.mxu0 0
    %827 = vmatpush1.bf16.msra.mxu0 0
    %828 = vmatprep.subr.bf16.mxu0 0
    %829 = vmatpush1.bf16.msra.mxu0 0
    %830 = vmatprep.subr.bf16.mxu0 0
    %831 = vmatpush1.bf16.msra.mxu0 0
    %832 = vmatprep.subr.bf16.mxu0 0
    %833 = vmatpush1.bf16.msra.mxu0 0
    %834 = vmatprep.subr.bf16.mxu0 0
    %835 = vmatpush1.bf16.msra.mxu0 0
    %836 = vmatprep.mubr.bf16.mxu0 0
    %837 = vmatmul.mubr.bf16.gmra.mrb[0].mxu0 %v799
    %v838 = vpop.f32.mrb[0].mxu0
    %v839 = vadd.f32 0.0, %v838
    %v840 = vpop.f32.mrb[0].mxu0
    %v841 = vpop.f32.mrb[0].mxu0
    %v842 = vadd.f32 0.0, %v841
    %v843 = vpop.f32.mrb[0].mxu0
    %844 = vmatprep.mubr.bf16.mxu0 0
    %845 = vmatmul.mubr.bf16.gmra.mrb[0].mxu0 %v802
    %v846 = vpop.f32.mrb[0].mxu0
    %v847 = vadd.f32 0.0, %v846
    %v848 = vpop.f32.mrb[0].mxu0
    %v849 = vpop.f32.mrb[0].mxu0
    %v850 = vadd.f32 0.0, %v849
    %v851 = vpop.f32.mrb[0].mxu0
    %852 = vdwg.mxu0
    %v853 = vadd.f32 %v697, %v839
    %v854 = vadd.f32 %v698, %v842
    %v855 = vadd.f32 %v699, %v847
    %v856 = vadd.f32 %v700, %v850
    %s857 = scalar_lea.vmem [#allocation3], 128
    %v858 = vld [vmem:[%s857] sm:$0xff]
    %v859 = vld [vmem:[%s857 + $0x8] sm:$0xff]
    %v860 = vld [vmem:[%s857 + $0x10] sm:$0xff]
    %v861 = vld [vmem:[%s857 + $0x18] sm:$0xff]
    %v866 = vunpack.c.l.b16 %v858
    %v867 = vunpack.c.h.b16 %v858
    %v868 = vunpack.c.l.b16 %v859
    %v869 = vunpack.c.h.b16 %v859
    %v870 = vunpack.c.l.b16 %v860
    %v871 = vunpack.c.h.b16 %v860
    %v872 = vunpack.c.l.b16 %v861
    %v873 = vunpack.c.h.b16 %v861
    %v874 = vpack.c.b16 %v868, %v866
    %v875 = vpack.c.b16 %v869, %v867
    %v876 = vpack.c.b16 %v872, %v870
    %v877 = vpack.c.b16 %v873, %v871
    %v881 = vsel %vm263, %v875, 0
    %v884 = vsel %vm263, %v877, 0
    %886 = vmatprep.subr.bf16.mxu0 0
    %887 = vmatpush1.bf16.msra.mxu0 %v239
    %888 = vmatprep.subr.bf16.mxu0 0
    %889 = vmatpush1.bf16.msra.mxu0 %v240
    %890 = vmatprep.subr.bf16.mxu0 0
    %891 = vmatpush1.bf16.msra.mxu0 %v241
    %892 = vmatprep.subr.bf16.mxu0 0
    %893 = vmatpush1.bf16.msra.mxu0 %v242
    %894 = vmatprep.subr.bf16.mxu0 0
    %895 = vmatpush1.bf16.msra.mxu0 %v243
    %896 = vmatprep.subr.bf16.mxu0 0
    %897 = vmatpush1.bf16.msra.mxu0 %v244
    %898 = vmatprep.subr.bf16.mxu0 0
    %899 = vmatpush1.bf16.msra.mxu0 %v245
    %900 = vmatprep.subr.bf16.mxu0 0
    %901 = vmatpush1.bf16.msra.mxu0 %v246
    %902 = vmatprep.subr.bf16.mxu0 0
    %903 = vmatpush1.bf16.msra.mxu0 %v247
    %904 = vmatprep.subr.bf16.mxu0 0
    %905 = vmatpush1.bf16.msra.mxu0 %v248
    %906 = vmatprep.subr.bf16.mxu0 0
    %907 = vmatpush1.bf16.msra.mxu0 %v249
    %908 = vmatprep.subr.bf16.mxu0 0
    %909 = vmatpush1.bf16.msra.mxu0 %v250
    %910 = vmatprep.subr.bf16.mxu0 0
    %911 = vmatpush1.bf16.msra.mxu0 0
    %912 = vmatprep.subr.bf16.mxu0 0
    %913 = vmatpush1.bf16.msra.mxu0 0
    %914 = vmatprep.subr.bf16.mxu0 0
    %915 = vmatpush1.bf16.msra.mxu0 0
    %916 = vmatprep.subr.bf16.mxu0 0
    %917 = vmatpush1.bf16.msra.mxu0 0
    %918 = vmatprep.mubr.bf16.mxu0 %v881
    %919 = vmatmul.mubr.bf16.gmra.mrb[0].mxu0 %v874
    %v920 = vpop.f32.mrb[0].mxu0
    %v921 = vadd.f32 0.0, %v920
    %v922 = vpop.f32.mrb[0].mxu0
    %v923 = vpop.f32.mrb[0].mxu0
    %v924 = vadd.f32 0.0, %v923
    %v925 = vpop.f32.mrb[0].mxu0
    %926 = vmatprep.mubr.bf16.mxu0 %v884
    %927 = vmatmul.mubr.bf16.gmra.mrb[0].mxu0 %v876
    %v928 = vpop.f32.mrb[0].mxu0
    %v929 = vadd.f32 0.0, %v928
    %v930 = vpop.f32.mrb[0].mxu0
    %v931 = vpop.f32.mrb[0].mxu0
    %v932 = vadd.f32 0.0, %v931
    %v933 = vpop.f32.mrb[0].mxu0
    %934 = vdwg.mxu0
    %v935 = vpack.c.bf16 %v924, %v921
    %v936 = vpack.c.bf16 %v932, %v929
    %s937 = scalar_lea.vmem [#allocation5], 64
    %v938 = vld [vmem:[%s937] sm:$0xf]
    %v939 = vld [vmem:[%s937 + $0x4] sm:$0xf]
    %v940 = vld [vmem:[%s937 + $0x8] sm:$0xf]
    %v941 = vld [vmem:[%s937 + $0xc] sm:$0xf]
    %v946 = vunpack.c.l.b16 %v938
    %v947 = vunpack.c.l.b16 %v939
    %v948 = vunpack.c.l.b16 %v940
    %v949 = vunpack.c.l.b16 %v941
    %v950 = vpack.c.b16 %v947, %v946
    %v951 = vpack.c.b16 %v949, %v948
    %v955 = vsel %vm422, %v935, 0
    %v958 = vsel %vm422, %v936, 0
    %960 = vmatprep.subr.bf16.mxu0 0
    %961 = vmatpush1.bf16.msra.mxu0 %v950
    %962 = vmatprep.subr.bf16.mxu0 0
    %963 = vmatpush1.bf16.msra.mxu0 %v951
    %964 = vmatprep.subr.bf16.mxu0 0
    %965 = vmatpush1.bf16.msra.mxu0 0
    %966 = vmatprep.subr.bf16.mxu0 0
    %967 = vmatpush1.bf16.msra.mxu0 0
    %968 = vmatprep.subr.bf16.mxu0 0
    %969 = vmatpush1.bf16.msra.mxu0 0
    %970 = vmatprep.subr.bf16.mxu0 0
    %971 = vmatpush1.bf16.msra.mxu0 0
    %972 = vmatprep.subr.bf16.mxu0 0
    %973 = vmatpush1.bf16.msra.mxu0 0
    %974 = vmatprep.subr.bf16.mxu0 0
    %975 = vmatpush1.bf16.msra.mxu0 0
    %976 = vmatprep.subr.bf16.mxu0 0
    %977 = vmatpush1.bf16.msra.mxu0 0
    %978 = vmatprep.subr.bf16.mxu0 0
    %979 = vmatpush1.bf16.msra.mxu0 0
    %980 = vmatprep.subr.bf16.mxu0 0
    %981 = vmatpush1.bf16.msra.mxu0 0
    %982 = vmatprep.subr.bf16.mxu0 0
    %983 = vmatpush1.bf16.msra.mxu0 0
    %984 = vmatprep.subr.bf16.mxu0 0
    %985 = vmatpush1.bf16.msra.mxu0 0
    %986 = vmatprep.subr.bf16.mxu0 0
    %987 = vmatpush1.bf16.msra.mxu0 0
    %988 = vmatprep.subr.bf16.mxu0 0
    %989 = vmatpush1.bf16.msra.mxu0 0
    %990 = vmatprep.subr.bf16.mxu0 0
    %991 = vmatpush1.bf16.msra.mxu0 0
    %992 = vmatprep.mubr.bf16.mxu0 0
    %993 = vmatmul.mubr.bf16.gmra.mrb[0].mxu0 %v955
    %v994 = vpop.f32.mrb[0].mxu0
    %v995 = vadd.f32 0.0, %v994
    %v996 = vpop.f32.mrb[0].mxu0
    %v997 = vpop.f32.mrb[0].mxu0
    %v998 = vadd.f32 0.0, %v997
    %v999 = vpop.f32.mrb[0].mxu0
    %1000 = vmatprep.mubr.bf16.mxu0 0
    %1001 = vmatmul.mubr.bf16.gmra.mrb[0].mxu0 %v958
    %v1002 = vpop.f32.mrb[0].mxu0
    %v1003 = vadd.f32 0.0, %v1002
    %v1004 = vpop.f32.mrb[0].mxu0
    %v1005 = vpop.f32.mrb[0].mxu0
    %v1006 = vadd.f32 0.0, %v1005
    %v1007 = vpop.f32.mrb[0].mxu0
    %1008 = vdwg.mxu0
    %v1009 = vadd.f32 %v853, %v995
    %v1010 = vadd.f32 %v854, %v998
    %v1011 = vadd.f32 %v855, %v1003
    %v1012 = vadd.f32 %v856, %v1006
    %s1013 = scalar_lea.vmem [#allocation3], 160
    %v1014 = vld [vmem:[%s1013] sm:$0xff]
    %v1015 = vld [vmem:[%s1013 + $0x8] sm:$0xff]
    %v1016 = vld [vmem:[%s1013 + $0x10] sm:$0xff]
    %v1017 = vld [vmem:[%s1013 + $0x18] sm:$0xff]
    %v1022 = vunpack.c.l.b16 %v1014
    %v1023 = vunpack.c.h.b16 %v1014
    %v1024 = vunpack.c.l.b16 %v1015
    %v1025 = vunpack.c.h.b16 %v1015
    %v1026 = vunpack.c.l.b16 %v1016
    %v1027 = vunpack.c.h.b16 %v1016
    %v1028 = vunpack.c.l.b16 %v1017
    %v1029 = vunpack.c.h.b16 %v1017
    %v1030 = vpack.c.b16 %v1024, %v1022
    %v1031 = vpack.c.b16 %v1025, %v1023
    %v1032 = vpack.c.b16 %v1028, %v1026
    %v1033 = vpack.c.b16 %v1029, %v1027
    %v1037 = vsel %vm263, %v1031, 0
    %v1040 = vsel %vm263, %v1033, 0
    %1042 = vmatprep.subr.bf16.mxu0 0
    %1043 = vmatpush1.bf16.msra.mxu0 %v239
    %1044 = vmatprep.subr.bf16.mxu0 0
    %1045 = vmatpush1.bf16.msra.mxu0 %v240
    %1046 = vmatprep.subr.bf16.mxu0 0
    %1047 = vmatpush1.bf16.msra.mxu0 %v241
    %1048 = vmatprep.subr.bf16.mxu0 0
    %1049 = vmatpush1.bf16.msra.mxu0 %v242
    %1050 = vmatprep.subr.bf16.mxu0 0
    %1051 = vmatpush1.bf16.msra.mxu0 %v243
    %1052 = vmatprep.subr.bf16.mxu0 0
    %1053 = vmatpush1.bf16.msra.mxu0 %v244
    %1054 = vmatprep.subr.bf16.mxu0 0
    %1055 = vmatpush1.bf16.msra.mxu0 %v245
    %1056 = vmatprep.subr.bf16.mxu0 0
    %1057 = vmatpush1.bf16.msra.mxu0 %v246
    %1058 = vmatprep.subr.bf16.mxu0 0
    %1059 = vmatpush1.bf16.msra.mxu0 %v247
    %1060 = vmatprep.subr.bf16.mxu0 0
    %1061 = vmatpush1.bf16.msra.mxu0 %v248
    %1062 = vmatprep.subr.bf16.mxu0 0
    %1063 = vmatpush1.bf16.msra.mxu0 %v249
    %1064 = vmatprep.subr.bf16.mxu0 0
    %1065 = vmatpush1.bf16.msra.mxu0 %v250
    %1066 = vmatprep.subr.bf16.mxu0 0
    %1067 = vmatpush1.bf16.msra.mxu0 0
    %1068 = vmatprep.subr.bf16.mxu0 0
    %1069 = vmatpush1.bf16.msra.mxu0 0
    %1070 = vmatprep.subr.bf16.mxu0 0
    %1071 = vmatpush1.bf16.msra.mxu0 0
    %1072 = vmatprep.subr.bf16.mxu0 0
    %1073 = vmatpush1.bf16.msra.mxu0 0
    %1074 = vmatprep.mubr.bf16.mxu0 %v1037
    %1075 = vmatmul.mubr.bf16.gmra.mrb[0].mxu0 %v1030
    %v1076 = vpop.f32.mrb[0].mxu0
    %v1077 = vadd.f32 0.0, %v1076
    %v1078 = vpop.f32.mrb[0].mxu0
    %v1079 = vpop.f32.mrb[0].mxu0
    %v1080 = vadd.f32 0.0, %v1079
    %v1081 = vpop.f32.mrb[0].mxu0
    %1082 = vmatprep.mubr.bf16.mxu0 %v1040
    %1083 = vmatmul.mubr.bf16.gmra.mrb[0].mxu0 %v1032
    %v1084 = vpop.f32.mrb[0].mxu0
    %v1085 = vadd.f32 0.0, %v1084
    %v1086 = vpop.f32.mrb[0].mxu0
    %v1087 = vpop.f32.mrb[0].mxu0
    %v1088 = vadd.f32 0.0, %v1087
    %v1089 = vpop.f32.mrb[0].mxu0
    %1090 = vdwg.mxu0
    %v1091 = vpack.c.bf16 %v1080, %v1077
    %v1092 = vpack.c.bf16 %v1088, %v1085
    %s1093 = scalar_lea.vmem [#allocation5], 80
    %v1094 = vld [vmem:[%s1093] sm:$0xf]
    %v1095 = vld [vmem:[%s1093 + $0x4] sm:$0xf]
    %v1096 = vld [vmem:[%s1093 + $0x8] sm:$0xf]
    %v1097 = vld [vmem:[%s1093 + $0xc] sm:$0xf]
    %v1102 = vunpack.c.l.b16 %v1094
    %v1103 = vunpack.c.l.b16 %v1095
    %v1104 = vunpack.c.l.b16 %v1096
    %v1105 = vunpack.c.l.b16 %v1097
    %v1106 = vpack.c.b16 %v1103, %v1102
    %v1107 = vpack.c.b16 %v1105, %v1104
    %v1111 = vsel %vm422, %v1091, 0
    %v1114 = vsel %vm422, %v1092, 0
    %1116 = vmatprep.subr.bf16.mxu0 0
    %1117 = vmatpush1.bf16.msra.mxu0 %v1106
    %1118 = vmatprep.subr.bf16.mxu0 0
    %1119 = vmatpush1.bf16.msra.mxu0 %v1107
    %1120 = vmatprep.subr.bf16.mxu0 0
    %1121 = vmatpush1.bf16.msra.mxu0 0
    %1122 = vmatprep.subr.bf16.mxu0 0
    %1123 = vmatpush1.bf16.msra.mxu0 0
    %1124 = vmatprep.subr.bf16.mxu0 0
    %1125 = vmatpush1.bf16.msra.mxu0 0
    %1126 = vmatprep.subr.bf16.mxu0 0
    %1127 = vmatpush1.bf16.msra.mxu0 0
    %1128 = vmatprep.subr.bf16.mxu0 0
    %1129 = vmatpush1.bf16.msra.mxu0 0
    %1130 = vmatprep.subr.bf16.mxu0 0
    %1131 = vmatpush1.bf16.msra.mxu0 0
    %1132 = vmatprep.subr.bf16.mxu0 0
    %1133 = vmatpush1.bf16.msra.mxu0 0
    %1134 = vmatprep.subr.bf16.mxu0 0
    %1135 = vmatpush1.bf16.msra.mxu0 0
    %1136 = vmatprep.subr.bf16.mxu0 0
    %1137 = vmatpush1.bf16.msra.mxu0 0
    %1138 = vmatprep.subr.bf16.mxu0 0
    %1139 = vmatpush1.bf16.msra.mxu0 0
    %1140 = vmatprep.subr.bf16.mxu0 0
    %1141 = vmatpush1.bf16.msra.mxu0 0
    %1142 = vmatprep.subr.bf16.mxu0 0
    %1143 = vmatpush1.bf16.msra.mxu0 0
    %1144 = vmatprep.subr.bf16.mxu0 0
    %1145 = vmatpush1.bf16.msra.mxu0 0
    %1146 = vmatprep.subr.bf16.mxu0 0
    %1147 = vmatpush1.bf16.msra.mxu0 0
    %1148 = vmatprep.mubr.bf16.mxu0 0
    %1149 = vmatmul.mubr.bf16.gmra.mrb[0].mxu0 %v1111
    %v1150 = vpop.f32.mrb[0].mxu0
    %v1151 = vadd.f32 0.0, %v1150
    %v1152 = vpop.f32.mrb[0].mxu0
    %v1153 = vpop.f32.mrb[0].mxu0
    %v1154 = vadd.f32 0.0, %v1153
    %v1155 = vpop.f32.mrb[0].mxu0
    %1156 = vmatprep.mubr.bf16.mxu0 0
    %1157 = vmatmul.mubr.bf16.gmra.mrb[0].mxu0 %v1114
    %v1158 = vpop.f32.mrb[0].mxu0
    %v1159 = vadd.f32 0.0, %v1158
    %v1160 = vpop.f32.mrb[0].mxu0
    %v1161 = vpop.f32.mrb[0].mxu0
    %v1162 = vadd.f32 0.0, %v1161
    %v1163 = vpop.f32.mrb[0].mxu0
    %1164 = vdwg.mxu0
    %v1165 = vadd.f32 %v1009, %v1151
    %v1166 = vadd.f32 %v1010, %v1154
    %v1167 = vadd.f32 %v1011, %v1159
    %v1168 = vadd.f32 %v1012, %v1162
    %s1169 = scalar_lea.vmem [#allocation3], 192
    %v1170 = vld [vmem:[%s1169] sm:$0xff]
    %v1171 = vld [vmem:[%s1169 + $0x8] sm:$0xff]
    %v1172 = vld [vmem:[%s1169 + $0x10] sm:$0xff]
    %v1173 = vld [vmem:[%s1169 + $0x18] sm:$0xff]
    %v1178 = vunpack.c.l.b16 %v1170
    %v1179 = vunpack.c.h.b16 %v1170
    %v1180 = vunpack.c.l.b16 %v1171
    %v1181 = vunpack.c.h.b16 %v1171
    %v1182 = vunpack.c.l.b16 %v1172
    %v1183 = vunpack.c.h.b16 %v1172
    %v1184 = vunpack.c.l.b16 %v1173
    %v1185 = vunpack.c.h.b16 %v1173
    %v1186 = vpack.c.b16 %v1180, %v1178
    %v1187 = vpack.c.b16 %v1181, %v1179
    %v1188 = vpack.c.b16 %v1184, %v1182
    %v1189 = vpack.c.b16 %v1185, %v1183
    %v1193 = vsel %vm263, %v1187, 0
    %v1196 = vsel %vm263, %v1189, 0
    %1198 = vmatprep.subr.bf16.mxu0 0
    %1199 = vmatpush1.bf16.msra.mxu0 %v239
    %1200 = vmatprep.subr.bf16.mxu0 0
    %1201 = vmatpush1.bf16.msra.mxu0 %v240
    %1202 = vmatprep.subr.bf16.mxu0 0
    %1203 = vmatpush1.bf16.msra.mxu0 %v241
    %1204 = vmatprep.subr.bf16.mxu0 0
    %1205 = vmatpush1.bf16.msra.mxu0 %v242
    %1206 = vmatprep.subr.bf16.mxu0 0
    %1207 = vmatpush1.bf16.msra.mxu0 %v243
    %1208 = vmatprep.subr.bf16.mxu0 0
    %1209 = vmatpush1.bf16.msra.mxu0 %v244
    %1210 = vmatprep.subr.bf16.mxu0 0
    %1211 = vmatpush1.bf16.msra.mxu0 %v245
    %1212 = vmatprep.subr.bf16.mxu0 0
    %1213 = vmatpush1.bf16.msra.mxu0 %v246
    %1214 = vmatprep.subr.bf16.mxu0 0
    %1215 = vmatpush1.bf16.msra.mxu0 %v247
    %1216 = vmatprep.subr.bf16.mxu0 0
    %1217 = vmatpush1.bf16.msra.mxu0 %v248
    %1218 = vmatprep.subr.bf16.mxu0 0
    %1219 = vmatpush1.bf16.msra.mxu0 %v249
    %1220 = vmatprep.subr.bf16.mxu0 0
    %1221 = vmatpush1.bf16.msra.mxu0 %v250
    %1222 = vmatprep.subr.bf16.mxu0 0
    %1223 = vmatpush1.bf16.msra.mxu0 0
    %1224 = vmatprep.subr.bf16.mxu0 0
    %1225 = vmatpush1.bf16.msra.mxu0 0
    %1226 = vmatprep.subr.bf16.mxu0 0
    %1227 = vmatpush1.bf16.msra.mxu0 0
    %1228 = vmatprep.subr.bf16.mxu0 0
    %1229 = vmatpush1.bf16.msra.mxu0 0
    %1230 = vmatprep.mubr.bf16.mxu0 %v1193
    %1231 = vmatmul.mubr.bf16.gmra.mrb[0].mxu0 %v1186
    %v1232 = vpop.f32.mrb[0].mxu0
    %v1233 = vadd.f32 0.0, %v1232
    %v1234 = vpop.f32.mrb[0].mxu0
    %v1235 = vpop.f32.mrb[0].mxu0
    %v1236 = vadd.f32 0.0, %v1235
    %v1237 = vpop.f32.mrb[0].mxu0
    %1238 = vmatprep.mubr.bf16.mxu0 %v1196
    %1239 = vmatmul.mubr.bf16.gmra.mrb[0].mxu0 %v1188
    %v1240 = vpop.f32.mrb[0].mxu0
    %v1241 = vadd.f32 0.0, %v1240
    %v1242 = vpop.f32.mrb[0].mxu0
    %v1243 = vpop.f32.mrb[0].mxu0
    %v1244 = vadd.f32 0.0, %v1243
    %v1245 = vpop.f32.mrb[0].mxu0
    %1246 = vdwg.mxu0
    %v1247 = vpack.c.bf16 %v1236, %v1233
    %v1248 = vpack.c.bf16 %v1244, %v1241
    %s1249 = scalar_lea.vmem [#allocation5], 96
    %v1250 = vld [vmem:[%s1249] sm:$0xf]
    %v1251 = vld [vmem:[%s1249 + $0x4] sm:$0xf]
    %v1252 = vld [vmem:[%s1249 + $0x8] sm:$0xf]
    %v1253 = vld [vmem:[%s1249 + $0xc] sm:$0xf]
    %v1258 = vunpack.c.l.b16 %v1250
    %v1259 = vunpack.c.l.b16 %v1251
    %v1260 = vunpack.c.l.b16 %v1252
    %v1261 = vunpack.c.l.b16 %v1253
    %v1262 = vpack.c.b16 %v1259, %v1258
    %v1263 = vpack.c.b16 %v1261, %v1260
    %v1267 = vsel %vm422, %v1247, 0
    %v1270 = vsel %vm422, %v1248, 0
    %1272 = vmatprep.subr.bf16.mxu0 0
    %1273 = vmatpush1.bf16.msra.mxu0 %v1262
    %1274 = vmatprep.subr.bf16.mxu0 0
    %1275 = vmatpush1.bf16.msra.mxu0 %v1263
    %1276 = vmatprep.subr.bf16.mxu0 0
    %1277 = vmatpush1.bf16.msra.mxu0 0
    %1278 = vmatprep.subr.bf16.mxu0 0
    %1279 = vmatpush1.bf16.msra.mxu0 0
    %1280 = vmatprep.subr.bf16.mxu0 0
    %1281 = vmatpush1.bf16.msra.mxu0 0
    %1282 = vmatprep.subr.bf16.mxu0 0
    %1283 = vmatpush1.bf16.msra.mxu0 0
    %1284 = vmatprep.subr.bf16.mxu0 0
    %1285 = vmatpush1.bf16.msra.mxu0 0
    %1286 = vmatprep.subr.bf16.mxu0 0
    %1287 = vmatpush1.bf16.msra.mxu0 0
    %1288 = vmatprep.subr.bf16.mxu0 0
    %1289 = vmatpush1.bf16.msra.mxu0 0
    %1290 = vmatprep.subr.bf16.mxu0 0
    %1291 = vmatpush1.bf16.msra.mxu0 0
    %1292 = vmatprep.subr.bf16.mxu0 0
    %1293 = vmatpush1.bf16.msra.mxu0 0
    %1294 = vmatprep.subr.bf16.mxu0 0
    %1295 = vmatpush1.bf16.msra.mxu0 0
    %1296 = vmatprep.subr.bf16.mxu0 0
    %1297 = vmatpush1.bf16.msra.mxu0 0
    %1298 = vmatprep.subr.bf16.mxu0 0
    %1299 = vmatpush1.bf16.msra.mxu0 0
    %1300 = vmatprep.subr.bf16.mxu0 0
    %1301 = vmatpush1.bf16.msra.mxu0 0
    %1302 = vmatprep.subr.bf16.mxu0 0
    %1303 = vmatpush1.bf16.msra.mxu0 0
    %1304 = vmatprep.mubr.bf16.mxu0 0
    %1305 = vmatmul.mubr.bf16.gmra.mrb[0].mxu0 %v1267
    %v1306 = vpop.f32.mrb[0].mxu0
    %v1307 = vadd.f32 0.0, %v1306
    %v1308 = vpop.f32.mrb[0].mxu0
    %v1309 = vpop.f32.mrb[0].mxu0
    %v1310 = vadd.f32 0.0, %v1309
    %v1311 = vpop.f32.mrb[0].mxu0
    %1312 = vmatprep.mubr.bf16.mxu0 0
    %1313 = vmatmul.mubr.bf16.gmra.mrb[0].mxu0 %v1270
    %v1314 = vpop.f32.mrb[0].mxu0
    %v1315 = vadd.f32 0.0, %v1314
    %v1316 = vpop.f32.mrb[0].mxu0
    %v1317 = vpop.f32.mrb[0].mxu0
    %v1318 = vadd.f32 0.0, %v1317
    %v1319 = vpop.f32.mrb[0].mxu0
    %1320 = vdwg.mxu0
    %v1321 = vadd.f32 %v1165, %v1307
    %v1322 = vadd.f32 %v1166, %v1310
    %v1323 = vadd.f32 %v1167, %v1315
    %v1324 = vadd.f32 %v1168, %v1318
    %s1325 = scalar_lea.vmem [#allocation3], 224
    %v1326 = vld [vmem:[%s1325] sm:$0xff]
    %v1327 = vld [vmem:[%s1325 + $0x8] sm:$0xff]
    %v1328 = vld [vmem:[%s1325 + $0x10] sm:$0xff]
    %v1329 = vld [vmem:[%s1325 + $0x18] sm:$0xff]
    %v1334 = vunpack.c.l.b16 %v1326
    %v1335 = vunpack.c.h.b16 %v1326
    %v1336 = vunpack.c.l.b16 %v1327
    %v1337 = vunpack.c.h.b16 %v1327
    %v1338 = vunpack.c.l.b16 %v1328
    %v1339 = vunpack.c.h.b16 %v1328
    %v1340 = vunpack.c.l.b16 %v1329
    %v1341 = vunpack.c.h.b16 %v1329
    %v1342 = vpack.c.b16 %v1336, %v1334
    %v1343 = vpack.c.b16 %v1337, %v1335
    %v1344 = vpack.c.b16 %v1340, %v1338
    %v1345 = vpack.c.b16 %v1341, %v1339
    %v1349 = vsel %vm263, %v1343, 0
    %v1352 = vsel %vm263, %v1345, 0
    %1354 = vmatprep.subr.bf16.mxu0 0
    %1355 = vmatpush1.bf16.msra.mxu0 %v239
    %1356 = vmatprep.subr.bf16.mxu0 0
    %1357 = vmatpush1.bf16.msra.mxu0 %v240
    %1358 = vmatprep.subr.bf16.mxu0 0
    %1359 = vmatpush1.bf16.msra.mxu0 %v241
    %1360 = vmatprep.subr.bf16.mxu0 0
    %1361 = vmatpush1.bf16.msra.mxu0 %v242
    %1362 = vmatprep.subr.bf16.mxu0 0
    %1363 = vmatpush1.bf16.msra.mxu0 %v243
    %1364 = vmatprep.subr.bf16.mxu0 0
    %1365 = vmatpush1.bf16.msra.mxu0 %v244
    %1366 = vmatprep.subr.bf16.mxu0 0
    %1367 = vmatpush1.bf16.msra.mxu0 %v245
    %1368 = vmatprep.subr.bf16.mxu0 0
    %1369 = vmatpush1.bf16.msra.mxu0 %v246
    %1370 = vmatprep.subr.bf16.mxu0 0
    %1371 = vmatpush1.bf16.msra.mxu0 %v247
    %1372 = vmatprep.subr.bf16.mxu0 0
    %1373 = vmatpush1.bf16.msra.mxu0 %v248
    %1374 = vmatprep.subr.bf16.mxu0 0
    %1375 = vmatpush1.bf16.msra.mxu0 %v249
    %1376 = vmatprep.subr.bf16.mxu0 0
    %1377 = vmatpush1.bf16.msra.mxu0 %v250
    %1378 = vmatprep.subr.bf16.mxu0 0
    %1379 = vmatpush1.bf16.msra.mxu0 0
    %1380 = vmatprep.subr.bf16.mxu0 0
    %1381 = vmatpush1.bf16.msra.mxu0 0
    %1382 = vmatprep.subr.bf16.mxu0 0
    %1383 = vmatpush1.bf16.msra.mxu0 0
    %1384 = vmatprep.subr.bf16.mxu0 0
    %1385 = vmatpush1.bf16.msra.mxu0 0
    %1386 = vmatprep.mubr.bf16.mxu0 %v1349
    %1387 = vmatmul.mubr.bf16.gmra.mrb[0].mxu0 %v1342
    %v1388 = vpop.f32.mrb[0].mxu0
    %v1389 = vadd.f32 0.0, %v1388
    %v1390 = vpop.f32.mrb[0].mxu0
    %v1391 = vpop.f32.mrb[0].mxu0
    %v1392 = vadd.f32 0.0, %v1391
    %v1393 = vpop.f32.mrb[0].mxu0
    %1394 = vmatprep.mubr.bf16.mxu0 %v1352
    %1395 = vmatmul.mubr.bf16.gmra.mrb[0].mxu0 %v1344
    %v1396 = vpop.f32.mrb[0].mxu0
    %v1397 = vadd.f32 0.0, %v1396
    %v1398 = vpop.f32.mrb[0].mxu0
    %v1399 = vpop.f32.mrb[0].mxu0
    %v1400 = vadd.f32 0.0, %v1399
    %v1401 = vpop.f32.mrb[0].mxu0
    %1402 = vdwg.mxu0
    %v1403 = vpack.c.bf16 %v1392, %v1389
    %v1404 = vpack.c.bf16 %v1400, %v1397
    %s1405 = scalar_lea.vmem [#allocation5], 112
    %v1406 = vld [vmem:[%s1405] sm:$0xf]
    %v1407 = vld [vmem:[%s1405 + $0x4] sm:$0xf]
    %v1408 = vld [vmem:[%s1405 + $0x8] sm:$0xf]
    %v1409 = vld [vmem:[%s1405 + $0xc] sm:$0xf]
    %v1414 = vunpack.c.l.b16 %v1406
    %v1415 = vunpack.c.l.b16 %v1407
    %v1416 = vunpack.c.l.b16 %v1408
    %v1417 = vunpack.c.l.b16 %v1409
    %v1418 = vpack.c.b16 %v1415, %v1414
    %v1419 = vpack.c.b16 %v1417, %v1416
    %v1423 = vsel %vm422, %v1403, 0
    %v1426 = vsel %vm422, %v1404, 0
    %1428 = vmatprep.subr.bf16.mxu0 0
    %1429 = vmatpush1.bf16.msra.mxu0 %v1418
    %1430 = vmatprep.subr.bf16.mxu0 0
    %1431 = vmatpush1.bf16.msra.mxu0 %v1419
    %1432 = vmatprep.subr.bf16.mxu0 0
    %1433 = vmatpush1.bf16.msra.mxu0 0
    %1434 = vmatprep.subr.bf16.mxu0 0
    %1435 = vmatpush1.bf16.msra.mxu0 0
    %1436 = vmatprep.subr.bf16.mxu0 0
    %1437 = vmatpush1.bf16.msra.mxu0 0
    %1438 = vmatprep.subr.bf16.mxu0 0
    %1439 = vmatpush1.bf16.msra.mxu0 0
    %1440 = vmatprep.subr.bf16.mxu0 0
    %1441 = vmatpush1.bf16.msra.mxu0 0
    %1442 = vmatprep.subr.bf16.mxu0 0
    %1443 = vmatpush1.bf16.msra.mxu0 0
    %1444 = vmatprep.subr.bf16.mxu0 0
    %1445 = vmatpush1.bf16.msra.mxu0 0
    %1446 = vmatprep.subr.bf16.mxu0 0
    %1447 = vmatpush1.bf16.msra.mxu0 0
    %1448 = vmatprep.subr.bf16.mxu0 0
    %1449 = vmatpush1.bf16.msra.mxu0 0
    %1450 = vmatprep.subr.bf16.mxu0 0
    %1451 = vmatpush1.bf16.msra.mxu0 0
    %1452 = vmatprep.subr.bf16.mxu0 0
    %1453 = vmatpush1.bf16.msra.mxu0 0
    %1454 = vmatprep.subr.bf16.mxu0 0
    %1455 = vmatpush1.bf16.msra.mxu0 0
    %1456 = vmatprep.subr.bf16.mxu0 0
    %1457 = vmatpush1.bf16.msra.mxu0 0
    %1458 = vmatprep.subr.bf16.mxu0 0
    %1459 = vmatpush1.bf16.msra.mxu0 0
    %1460 = vmatprep.mubr.bf16.mxu0 0
    %1461 = vmatmul.mubr.bf16.gmra.mrb[0].mxu0 %v1423
    %v1462 = vpop.f32.mrb[0].mxu0
    %v1463 = vadd.f32 0.0, %v1462
    %v1464 = vpop.f32.mrb[0].mxu0
    %v1465 = vpop.f32.mrb[0].mxu0
    %v1466 = vadd.f32 0.0, %v1465
    %v1467 = vpop.f32.mrb[0].mxu0
    %1468 = vmatprep.mubr.bf16.mxu0 0
    %1469 = vmatmul.mubr.bf16.gmra.mrb[0].mxu0 %v1426
    %v1470 = vpop.f32.mrb[0].mxu0
    %v1471 = vadd.f32 0.0, %v1470
    %v1472 = vpop.f32.mrb[0].mxu0
    %v1473 = vpop.f32.mrb[0].mxu0
    %v1474 = vadd.f32 0.0, %v1473
    %v1475 = vpop.f32.mrb[0].mxu0
    %1476 = vdwg.mxu0
    %v1477 = vadd.f32 %v1321, %v1463
    %v1478 = vadd.f32 %v1322, %v1466
    %v1479 = vadd.f32 %v1323, %v1471
    %v1480 = vadd.f32 %v1324, %v1474
    %s1481 = scalar_lea.vmem [#allocation3], 256
    %v1482 = vld [vmem:[%s1481] sm:$0xff]
    %v1483 = vld [vmem:[%s1481 + $0x8] sm:$0xff]
    %v1484 = vld [vmem:[%s1481 + $0x10] sm:$0xff]
    %v1485 = vld [vmem:[%s1481 + $0x18] sm:$0xff]
    %v1490 = vunpack.c.l.b16 %v1482
    %v1491 = vunpack.c.h.b16 %v1482
    %v1492 = vunpack.c.l.b16 %v1483
    %v1493 = vunpack.c.h.b16 %v1483
    %v1494 = vunpack.c.l.b16 %v1484
    %v1495 = vunpack.c.h.b16 %v1484
    %v1496 = vunpack.c.l.b16 %v1485
    %v1497 = vunpack.c.h.b16 %v1485
    %v1498 = vpack.c.b16 %v1492, %v1490
    %v1499 = vpack.c.b16 %v1493, %v1491
    %v1500 = vpack.c.b16 %v1496, %v1494
    %v1501 = vpack.c.b16 %v1497, %v1495
    %v1505 = vsel %vm263, %v1499, 0
    %v1508 = vsel %vm263, %v1501, 0
    %1510 = vmatprep.subr.bf16.mxu0 0
    %1511 = vmatpush1.bf16.msra.mxu0 %v239
    %1512 = vmatprep.subr.bf16.mxu0 0
    %1513 = vmatpush1.bf16.msra.mxu0 %v240
    %1514 = vmatprep.subr.bf16.mxu0 0
    %1515 = vmatpush1.bf16.msra.mxu0 %v241
    %1516 = vmatprep.subr.bf16.mxu0 0
    %1517 = vmatpush1.bf16.msra.mxu0 %v242
    %1518 = vmatprep.subr.bf16.mxu0 0
    %1519 = vmatpush1.bf16.msra.mxu0 %v243
    %1520 = vmatprep.subr.bf16.mxu0 0
    %1521 = vmatpush1.bf16.msra.mxu0 %v244
    %1522 = vmatprep.subr.bf16.mxu0 0
    %1523 = vmatpush1.bf16.msra.mxu0 %v245
    %1524 = vmatprep.subr.bf16.mxu0 0
    %1525 = vmatpush1.bf16.msra.mxu0 %v246
    %1526 = vmatprep.subr.bf16.mxu0 0
    %1527 = vmatpush1.bf16.msra.mxu0 %v247
    %1528 = vmatprep.subr.bf16.mxu0 0
    %1529 = vmatpush1.bf16.msra.mxu0 %v248
    %1530 = vmatprep.subr.bf16.mxu0 0
    %1531 = vmatpush1.bf16.msra.mxu0 %v249
    %1532 = vmatprep.subr.bf16.mxu0 0
    %1533 = vmatpush1.bf16.msra.mxu0 %v250
    %1534 = vmatprep.subr.bf16.mxu0 0
    %1535 = vmatpush1.bf16.msra.mxu0 0
    %1536 = vmatprep.subr.bf16.mxu0 0
    %1537 = vmatpush1.bf16.msra.mxu0 0
    %1538 = vmatprep.subr.bf16.mxu0 0
    %1539 = vmatpush1.bf16.msra.mxu0 0
    %1540 = vmatprep.subr.bf16.mxu0 0
    %1541 = vmatpush1.bf16.msra.mxu0 0
    %1542 = vmatprep.mubr.bf16.mxu0 %v1505
    %1543 = vmatmul.mubr.bf16.gmra.mrb[0].mxu0 %v1498
    %v1544 = vpop.f32.mrb[0].mxu0
    %v1545 = vadd.f32 0.0, %v1544
    %v1546 = vpop.f32.mrb[0].mxu0
    %v1547 = vpop.f32.mrb[0].mxu0
    %v1548 = vadd.f32 0.0, %v1547
    %v1549 = vpop.f32.mrb[0].mxu0
    %1550 = vmatprep.mubr.bf16.mxu0 %v1508
    %1551 = vmatmul.mubr.bf16.gmra.mrb[0].mxu0 %v1500
    %v1552 = vpop.f32.mrb[0].mxu0
    %v1553 = vadd.f32 0.0, %v1552
    %v1554 = vpop.f32.mrb[0].mxu0
    %v1555 = vpop.f32.mrb[0].mxu0
    %v1556 = vadd.f32 0.0, %v1555
    %v1557 = vpop.f32.mrb[0].mxu0
    %1558 = vdwg.mxu0
    %v1559 = vpack.c.bf16 %v1548, %v1545
    %v1560 = vpack.c.bf16 %v1556, %v1553
    %s1561 = scalar_lea.vmem [#allocation5], 128
    %v1562 = vld [vmem:[%s1561] sm:$0xf]
    %v1563 = vld [vmem:[%s1561 + $0x4] sm:$0xf]
    %v1564 = vld [vmem:[%s1561 + $0x8] sm:$0xf]
    %v1565 = vld [vmem:[%s1561 + $0xc] sm:$0xf]
    %v1570 = vunpack.c.l.b16 %v1562
    %v1571 = vunpack.c.l.b16 %v1563
    %v1572 = vunpack.c.l.b16 %v1564
    %v1573 = vunpack.c.l.b16 %v1565
    %v1574 = vpack.c.b16 %v1571, %v1570
    %v1575 = vpack.c.b16 %v1573, %v1572
    %v1579 = vsel %vm422, %v1559, 0
    %v1582 = vsel %vm422, %v1560, 0
    %1584 = vmatprep.subr.bf16.mxu0 0
    %1585 = vmatpush1.bf16.msra.mxu0 %v1574
    %1586 = vmatprep.subr.bf16.mxu0 0
    %1587 = vmatpush1.bf16.msra.mxu0 %v1575
    %1588 = vmatprep.subr.bf16.mxu0 0
    %1589 = vmatpush1.bf16.msra.mxu0 0
    %1590 = vmatprep.subr.bf16.mxu0 0
    %1591 = vmatpush1.bf16.msra.mxu0 0
    %1592 = vmatprep.subr.bf16.mxu0 0
    %1593 = vmatpush1.bf16.msra.mxu0 0
    %1594 = vmatprep.subr.bf16.mxu0 0
    %1595 = vmatpush1.bf16.msra.mxu0 0
    %1596 = vmatprep.subr.bf16.mxu0 0
    %1597 = vmatpush1.bf16.msra.mxu0 0
    %1598 = vmatprep.subr.bf16.mxu0 0
    %1599 = vmatpush1.bf16.msra.mxu0 0
    %1600 = vmatprep.subr.bf16.mxu0 0
    %1601 = vmatpush1.bf16.msra.mxu0 0
    %1602 = vmatprep.subr.bf16.mxu0 0
    %1603 = vmatpush1.bf16.msra.mxu0 0
    %1604 = vmatprep.subr.bf16.mxu0 0
    %1605 = vmatpush1.bf16.msra.mxu0 0
    %1606 = vmatprep.subr.bf16.mxu0 0
    %1607 = vmatpush1.bf16.msra.mxu0 0
    %1608 = vmatprep.subr.bf16.mxu0 0
    %1609 = vmatpush1.bf16.msra.mxu0 0
    %1610 = vmatprep.subr.bf16.mxu0 0
    %1611 = vmatpush1.bf16.msra.mxu0 0
    %1612 = vmatprep.subr.bf16.mxu0 0
    %1613 = vmatpush1.bf16.msra.mxu0 0
    %1614 = vmatprep.subr.bf16.mxu0 0
    %1615 = vmatpush1.bf16.msra.mxu0 0
    %1616 = vmatprep.mubr.bf16.mxu0 0
    %1617 = vmatmul.mubr.bf16.gmra.mrb[0].mxu0 %v1579
    %v1618 = vpop.f32.mrb[0].mxu0
    %v1619 = vadd.f32 0.0, %v1618
    %v1620 = vpop.f32.mrb[0].mxu0
    %v1621 = vpop.f32.mrb[0].mxu0
    %v1622 = vadd.f32 0.0, %v1621
    %v1623 = vpop.f32.mrb[0].mxu0
    %1624 = vmatprep.mubr.bf16.mxu0 0
    %1625 = vmatmul.mubr.bf16.gmra.mrb[0].mxu0 %v1582
    %v1626 = vpop.f32.mrb[0].mxu0
    %v1627 = vadd.f32 0.0, %v1626
    %v1628 = vpop.f32.mrb[0].mxu0
    %v1629 = vpop.f32.mrb[0].mxu0
    %v1630 = vadd.f32 0.0, %v1629
    %v1631 = vpop.f32.mrb[0].mxu0
    %1632 = vdwg.mxu0
    %v1633 = vadd.f32 %v1477, %v1619
    %v1634 = vadd.f32 %v1478, %v1622
    %v1635 = vadd.f32 %v1479, %v1627
    %v1636 = vadd.f32 %v1480, %v1630
    %v1637 = vld [vmem:[%s3] sm:$0x1]
    %v1639 = vlaneseq
    %v1640 = vshrl.u32 %v1639, 7
    %v1641 = vsub.s32 0, %v1640
    %v1642 = vrot.slane %v1637, %v1641
    %v1644 = vadd.f32 %v1633, %v1642
    %v1645 = vadd.f32 %v1634, %v1642
    %v1646 = vadd.f32 %v1635, %v1642
    %v1647 = vadd.f32 %v1636, %v1642
    %v1648 = vmax.f32 %v1644, 0.0
    %v1649 = vmax.f32 %v1645, 0.0
    %v1650 = vmax.f32 %v1646, 0.0
    %v1651 = vmax.f32 %v1647, 0.0
    %v1652 = vpack.c.bf16 %v1649, %v1648
    %v1653 = vpack.c.bf16 %v1651, %v1650
    %v1654 = vld [vmem:[%s4] sm:$0xf]
    %v1655 = vld [vmem:[%s4 + $0x4] sm:$0xf]
    %v1658 = vunpack.c.l.b16 %v1654
    %v1659 = vunpack.c.l.b16 %v1655
    %v1660 = vpack.c.b16 %v1659, %v1658
    %v1662 = vsel %vm422, %v1660, 0
    %1664 = vmatprep.subr.bf16.mxu0 0
    %1665 = vmatpush1.bf16.msra.mxu0 %v1652
    %1666 = vmatprep.subr.bf16.mxu0 0
    %1667 = vmatpush1.bf16.msra.mxu0 %v1653
    %1668 = vmatprep.subr.bf16.mxu0 0
    %1669 = vmatpush1.bf16.msra.mxu0 0
    %1670 = vmatprep.subr.bf16.mxu0 0
    %1671 = vmatpush1.bf16.msra.mxu0 0
    %1672 = vmatprep.subr.bf16.mxu0 0
    %1673 = vmatpush1.bf16.msra.mxu0 0
    %1674 = vmatprep.subr.bf16.mxu0 0
    %1675 = vmatpush1.bf16.msra.mxu0 0
    %1676 = vmatprep.subr.bf16.mxu0 0
    %1677 = vmatpush1.bf16.msra.mxu0 0
    %1678 = vmatprep.subr.bf16.mxu0 0
    %1679 = vmatpush1.bf16.msra.mxu0 0
    %1680 = vmatprep.subr.bf16.mxu0 0
    %1681 = vmatpush1.bf16.msra.mxu0 0
    %1682 = vmatprep.subr.bf16.mxu0 0
    %1683 = vmatpush1.bf16.msra.mxu0 0
    %1684 = vmatprep.subr.bf16.mxu0 0
    %1685 = vmatpush1.bf16.msra.mxu0 0
    %1686 = vmatprep.subr.bf16.mxu0 0
    %1687 = vmatpush1.bf16.msra.mxu0 0
    %1688 = vmatprep.subr.bf16.mxu0 0
    %1689 = vmatpush1.bf16.msra.mxu0 0
    %1690 = vmatprep.subr.bf16.mxu0 0
    %1691 = vmatpush1.bf16.msra.mxu0 0
    %1692 = vmatprep.subr.bf16.mxu0 0
    %1693 = vmatpush1.bf16.msra.mxu0 0
    %1694 = vmatprep.subr.bf16.mxu0 0
    %1695 = vmatpush1.bf16.msra.mxu0 0
    %1696 = vmatprep.mubr.bf16.mxu0 0
    %1697 = vmatmul.mubr.bf16.gmra.mrb[0].mxu0 %v1662
    %v1698 = vpop.f32.mrb[0].mxu0
    %v1699 = vadd.f32 0.0, %v1698
    %v1700 = vpop.f32.mrb[0].mxu0
    %v1701 = vpop.f32.mrb[0].mxu0
    %v1702 = vadd.f32 0.0, %v1701
    %v1703 = vpop.f32.mrb[0].mxu0
    %1704 = vdwg.mxu0
    %v1705 = vpack.c.bf16 %v1702, %v1699
    %v1706 = vld [vmem:[%s5] sm:$0xf]
    %v1707 = vld [vmem:[%s5 + $0x4] sm:$0xf]
    %v1708 = vld [vmem:[%s5 + $0x8] sm:$0xf]
    %v1709 = vld [vmem:[%s5 + $0xc] sm:$0xf]
    %v1710 = vld [vmem:[%s5 + $0x10] sm:$0xf]
    %v1711 = vld [vmem:[%s5 + $0x14] sm:$0xf]
    %v1712 = vld [vmem:[%s5 + $0x18] sm:$0xf]
    %v1713 = vld [vmem:[%s5 + $0x1c] sm:$0xf]
    %v1714 = vld [vmem:[%s5 + $0x20] sm:$0xf]
    %v1715 = vld [vmem:[%s5 + $0x24] sm:$0xf]
    %v1716 = vld [vmem:[%s5 + $0x28] sm:$0xf]
    %v1717 = vld [vmem:[%s5 + $0x2c] sm:$0xf]
    %v1718 = vld [vmem:[%s5 + $0x30] sm:$0xf]
    %v1719 = vld [vmem:[%s5 + $0x34] sm:$0xf]
    %v1720 = vld [vmem:[%s5 + $0x38] sm:$0xf]
    %v1721 = vld [vmem:[%s5 + $0x3c] sm:$0xf]
    %s1722 = scalar_lea.vmem %s4, 8
    %v1723 = vld [vmem:[%s1722] sm:$0xf]
    %v1724 = vld [vmem:[%s1722 + $0x4] sm:$0xf]
    %v1727 = vunpack.c.l.b16 %v1723
    %v1728 = vunpack.c.l.b16 %v1724
    %v1729 = vpack.c.b16 %v1728, %v1727
    %v1731 = vsel %vm422, %v1729, 0
    %1733 = vmatprep.subr.bf16.mxu0 0
    %1734 = vmatpush1.bf16.msra.mxu0 %v1652
    %1735 = vmatprep.subr.bf16.mxu0 0
    %1736 = vmatpush1.bf16.msra.mxu0 %v1653
    %1737 = vmatprep.subr.bf16.mxu0 0
    %1738 = vmatpush1.bf16.msra.mxu0 0
    %1739 = vmatprep.subr.bf16.mxu0 0
    %1740 = vmatpush1.bf16.msra.mxu0 0
    %1741 = vmatprep.subr.bf16.mxu0 0
    %1742 = vmatpush1.bf16.msra.mxu0 0
    %1743 = vmatprep.subr.bf16.mxu0 0
    %1744 = vmatpush1.bf16.msra.mxu0 0
    %1745 = vmatprep.subr.bf16.mxu0 0
    %1746 = vmatpush1.bf16.msra.mxu0 0
    %1747 = vmatprep.subr.bf16.mxu0 0
    %1748 = vmatpush1.bf16.msra.mxu0 0
    %1749 = vmatprep.subr.bf16.mxu0 0
    %1750 = vmatpush1.bf16.msra.mxu0 0
    %1751 = vmatprep.subr.bf16.mxu0 0
    %1752 = vmatpush1.bf16.msra.mxu0 0
    %1753 = vmatprep.subr.bf16.mxu0 0
    %1754 = vmatpush1.bf16.msra.mxu0 0
    %1755 = vmatprep.subr.bf16.mxu0 0
    %1756 = vmatpush1.bf16.msra.mxu0 0
    %1757 = vmatprep.subr.bf16.mxu0 0
    %1758 = vmatpush1.bf16.msra.mxu0 0
    %1759 = vmatprep.subr.bf16.mxu0 0
    %1760 = vmatpush1.bf16.msra.mxu0 0
    %1761 = vmatprep.subr.bf16.mxu0 0
    %1762 = vmatpush1.bf16.msra.mxu0 0
    %1763 = vmatprep.subr.bf16.mxu0 0
    %1764 = vmatpush1.bf16.msra.mxu0 0
    %1765 = vmatprep.mubr.bf16.mxu0 0
    %1766 = vmatmul.mubr.bf16.gmra.mrb[0].mxu0 %v1731
    %v1767 = vpop.f32.mrb[0].mxu0
    %v1768 = vadd.f32 0.0, %v1767
    %v1769 = vpop.f32.mrb[0].mxu0
    %v1770 = vpop.f32.mrb[0].mxu0
    %v1771 = vadd.f32 0.0, %v1770
    %v1772 = vpop.f32.mrb[0].mxu0
    %1773 = vdwg.mxu0
    %v1774 = vpack.c.bf16 %v1771, %v1768
    %s1775 = scalar_lea.vmem %s5, 64
    %v1776 = vld [vmem:[%s1775] sm:$0xf]
    %v1777 = vld [vmem:[%s1775 + $0x4] sm:$0xf]
    %v1778 = vld [vmem:[%s1775 + $0x8] sm:$0xf]
    %v1779 = vld [vmem:[%s1775 + $0xc] sm:$0xf]
    %v1780 = vld [vmem:[%s1775 + $0x10] sm:$0xf]
    %v1781 = vld [vmem:[%s1775 + $0x14] sm:$0xf]
    %v1782 = vld [vmem:[%s1775 + $0x18] sm:$0xf]
    %v1783 = vld [vmem:[%s1775 + $0x1c] sm:$0xf]
    %v1784 = vld [vmem:[%s1775 + $0x20] sm:$0xf]
    %v1785 = vld [vmem:[%s1775 + $0x24] sm:$0xf]
    %v1786 = vld [vmem:[%s1775 + $0x28] sm:$0xf]
    %v1787 = vld [vmem:[%s1775 + $0x2c] sm:$0xf]
    %v1788 = vld [vmem:[%s1775 + $0x30] sm:$0xf]
    %v1789 = vld [vmem:[%s1775 + $0x34] sm:$0xf]
    %v1790 = vld [vmem:[%s1775 + $0x38] sm:$0xf]
    %v1791 = vld [vmem:[%s1775 + $0x3c] sm:$0xf]
    %v1808 = vunpack.c.l.b16 %v1776
    %v1809 = vunpack.c.l.b16 %v1777
    %v1810 = vunpack.c.l.b16 %v1778
    %v1811 = vunpack.c.l.b16 %v1779
    %v1812 = vunpack.c.l.b16 %v1780
    %v1813 = vunpack.c.l.b16 %v1781
    %v1814 = vunpack.c.l.b16 %v1782
    %v1815 = vunpack.c.l.b16 %v1783
    %v1816 = vunpack.c.l.b16 %v1784
    %v1817 = vunpack.c.l.b16 %v1785
    %v1818 = vunpack.c.l.b16 %v1786
    %v1819 = vunpack.c.l.b16 %v1787
    %v1820 = vunpack.c.l.b16 %v1788
    %v1821 = vunpack.c.l.b16 %v1789
    %v1822 = vunpack.c.l.b16 %v1790
    %v1823 = vunpack.c.l.b16 %v1791
    %v1824 = vpack.c.b16 %v1809, %v1808
    %v1825 = vpack.c.b16 %v1811, %v1810
    %v1826 = vpack.c.b16 %v1813, %v1812
    %v1827 = vpack.c.b16 %v1815, %v1814
    %v1828 = vpack.c.b16 %v1817, %v1816
    %v1829 = vpack.c.b16 %v1819, %v1818
    %v1830 = vpack.c.b16 %v1821, %v1820
    %v1831 = vpack.c.b16 %v1823, %v1822
    %1840 = vmatprep.subr.bf16.mxu0 0
    %1841 = vmatpush1.bf16.msra.mxu0 %v1824
    %1842 = vmatprep.subr.bf16.mxu0 0
    %1843 = vmatpush1.bf16.msra.mxu0 %v1825
    %1844 = vmatprep.subr.bf16.mxu0 0
    %1845 = vmatpush1.bf16.msra.mxu0 %v1826
    %1846 = vmatprep.subr.bf16.mxu0 0
    %1847 = vmatpush1.bf16.msra.mxu0 %v1827
    %1848 = vmatprep.subr.bf16.mxu0 0
    %1849 = vmatpush1.bf16.msra.mxu0 %v1828
    %1850 = vmatprep.subr.bf16.mxu0 0
    %1851 = vmatpush1.bf16.msra.mxu0 %v1829
    %1852 = vmatprep.subr.bf16.mxu0 0
    %1853 = vmatpush1.bf16.msra.mxu0 %v1830
    %1854 = vmatprep.subr.bf16.mxu0 0
    %1855 = vmatpush1.bf16.msra.mxu0 %v1831
    %1856 = vmatprep.subr.bf16.mxu0 0
    %1857 = vmatpush1.bf16.msra.mxu0 0
    %1858 = vmatprep.subr.bf16.mxu0 0
    %1859 = vmatpush1.bf16.msra.mxu0 0
    %1860 = vmatprep.subr.bf16.mxu0 0
    %1861 = vmatpush1.bf16.msra.mxu0 0
    %1862 = vmatprep.subr.bf16.mxu0 0
    %1863 = vmatpush1.bf16.msra.mxu0 0
    %1864 = vmatprep.subr.bf16.mxu0 0
    %1865 = vmatpush1.bf16.msra.mxu0 0
    %1866 = vmatprep.subr.bf16.mxu0 0
    %1867 = vmatpush1.bf16.msra.mxu0 0
    %1868 = vmatprep.subr.bf16.mxu0 0
    %1869 = vmatpush1.bf16.msra.mxu0 0
    %1870 = vmatprep.subr.bf16.mxu0 0
    %1871 = vmatpush1.bf16.msra.mxu0 0
    %1872 = vmatprep.mubr.bf16.mxu0 0
    %1873 = vmatmul.mubr.bf16.gmra.mrb[0].mxu0 %v1774
    %v1874 = vpop.f32.mrb[0].mxu0
    %v1875 = vadd.f32 0.0, %v1874
    %v1876 = vpop.f32.mrb[0].mxu0
    %v1877 = vpop.f32.mrb[0].mxu0
    %v1878 = vadd.f32 0.0, %v1877
    %v1879 = vpop.f32.mrb[0].mxu0
    %1880 = vdwg.mxu0
    %v1897 = vunpack.c.l.b16 %v1706
    %v1898 = vunpack.c.l.b16 %v1707
    %v1899 = vunpack.c.l.b16 %v1708
    %v1900 = vunpack.c.l.b16 %v1709
    %v1901 = vunpack.c.l.b16 %v1710
    %v1902 = vunpack.c.l.b16 %v1711
    %v1903 = vunpack.c.l.b16 %v1712
    %v1904 = vunpack.c.l.b16 %v1713
    %v1905 = vunpack.c.l.b16 %v1714
    %v1906 = vunpack.c.l.b16 %v1715
    %v1907 = vunpack.c.l.b16 %v1716
    %v1908 = vunpack.c.l.b16 %v1717
    %v1909 = vunpack.c.l.b16 %v1718
    %v1910 = vunpack.c.l.b16 %v1719
    %v1911 = vunpack.c.l.b16 %v1720
    %v1912 = vunpack.c.l.b16 %v1721
    %v1913 = vpack.c.b16 %v1898, %v1897
    %v1914 = vpack.c.b16 %v1900, %v1899
    %v1915 = vpack.c.b16 %v1902, %v1901
    %v1916 = vpack.c.b16 %v1904, %v1903
    %v1917 = vpack.c.b16 %v1906, %v1905
    %v1918 = vpack.c.b16 %v1908, %v1907
    %v1919 = vpack.c.b16 %v1910, %v1909
    %v1920 = vpack.c.b16 %v1912, %v1911
    %1929 = vmatprep.subr.bf16.mxu0 0
    %1930 = vmatpush1.bf16.msra.mxu0 %v1913
    %1931 = vmatprep.subr.bf16.mxu0 0
    %1932 = vmatpush1.bf16.msra.mxu0 %v1914
    %1933 = vmatprep.subr.bf16.mxu0 0
    %1934 = vmatpush1.bf16.msra.mxu0 %v1915
    %1935 = vmatprep.subr.bf16.mxu0 0
    %1936 = vmatpush1.bf16.msra.mxu0 %v1916
    %1937 = vmatprep.subr.bf16.mxu0 0
    %1938 = vmatpush1.bf16.msra.mxu0 %v1917
    %1939 = vmatprep.subr.bf16.mxu0 0
    %1940 = vmatpush1.bf16.msra.mxu0 %v1918
    %1941 = vmatprep.subr.bf16.mxu0 0
    %1942 = vmatpush1.bf16.msra.mxu0 %v1919
    %1943 = vmatprep.subr.bf16.mxu0 0
    %1944 = vmatpush1.bf16.msra.mxu0 %v1920
    %1945 = vmatprep.subr.bf16.mxu0 0
    %1946 = vmatpush1.bf16.msra.mxu0 0
    %1947 = vmatprep.subr.bf16.mxu0 0
    %1948 = vmatpush1.bf16.msra.mxu0 0
    %1949 = vmatprep.subr.bf16.mxu0 0
    %1950 = vmatpush1.bf16.msra.mxu0 0
    %1951 = vmatprep.subr.bf16.mxu0 0
    %1952 = vmatpush1.bf16.msra.mxu0 0
    %1953 = vmatprep.subr.bf16.mxu0 0
    %1954 = vmatpush1.bf16.msra.mxu0 0
    %1955 = vmatprep.subr.bf16.mxu0 0
    %1956 = vmatpush1.bf16.msra.mxu0 0
    %1957 = vmatprep.subr.bf16.mxu0 0
    %1958 = vmatpush1.bf16.msra.mxu0 0
    %1959 = vmatprep.subr.bf16.mxu0 0
    %1960 = vmatpush1.bf16.msra.mxu0 0
    %1961 = vmatprep.mubr.bf16.mxu0 0
    %1962 = vmatmul.mubr.bf16.gmra.mrb[0].mxu0 %v1705
    %v1963 = vpop.f32.mrb[0].mxu0
    %v1964 = vadd.f32 %v1875, %v1963
    %v1965 = vpop.f32.mrb[0].mxu0
    %v1966 = vpop.f32.mrb[0].mxu0
    %v1967 = vadd.f32 %v1878, %v1966
    %v1968 = vpop.f32.mrb[0].mxu0
    %1969 = vdwg.mxu0
    %s1970 = scalar_lea.vmem %s4, 16
    %v1971 = vld [vmem:[%s1970] sm:$0xf]
    %v1972 = vld [vmem:[%s1970 + $0x4] sm:$0xf]
    %v1975 = vunpack.c.l.b16 %v1971
    %v1976 = vunpack.c.l.b16 %v1972
    %v1977 = vpack.c.b16 %v1976, %v1975
    %v1979 = vsel %vm422, %v1977, 0
    %1981 = vmatprep.subr.bf16.mxu0 0
    %1982 = vmatpush1.bf16.msra.mxu0 %v1652
    %1983 = vmatprep.subr.bf16.mxu0 0
    %1984 = vmatpush1.bf16.msra.mxu0 %v1653
    %1985 = vmatprep.subr.bf16.mxu0 0
    %1986 = vmatpush1.bf16.msra.mxu0 0
    %1987 = vmatprep.subr.bf16.mxu0 0
    %1988 = vmatpush1.bf16.msra.mxu0 0
    %1989 = vmatprep.subr.bf16.mxu0 0
    %1990 = vmatpush1.bf16.msra.mxu0 0
    %1991 = vmatprep.subr.bf16.mxu0 0
    %1992 = vmatpush1.bf16.msra.mxu0 0
    %1993 = vmatprep.subr.bf16.mxu0 0
    %1994 = vmatpush1.bf16.msra.mxu0 0
    %1995 = vmatprep.subr.bf16.mxu0 0
    %1996 = vmatpush1.bf16.msra.mxu0 0
    %1997 = vmatprep.subr.bf16.mxu0 0
    %1998 = vmatpush1.bf16.msra.mxu0 0
    %1999 = vmatprep.subr.bf16.mxu0 0
    %2000 = vmatpush1.bf16.msra.mxu0 0
    %2001 = vmatprep.subr.bf16.mxu0 0
    %2002 = vmatpush1.bf16.msra.mxu0 0
    %2003 = vmatprep.subr.bf16.mxu0 0
    %2004 = vmatpush1.bf16.msra.mxu0 0
    %2005 = vmatprep.subr.bf16.mxu0 0
    %2006 = vmatpush1.bf16.msra.mxu0 0
    %2007 = vmatprep.subr.bf16.mxu0 0
    %2008 = vmatpush1.bf16.msra.mxu0 0
    %2009 = vmatprep.subr.bf16.mxu0 0
    %2010 = vmatpush1.bf16.msra.mxu0 0
    %2011 = vmatprep.subr.bf16.mxu0 0
    %2012 = vmatpush1.bf16.msra.mxu0 0
    %2013 = vmatprep.mubr.bf16.mxu0 0
    %2014 = vmatmul.mubr.bf16.gmra.mrb[0].mxu0 %v1979
    %v2015 = vpop.f32.mrb[0].mxu0
    %v2016 = vadd.f32 0.0, %v2015
    %v2017 = vpop.f32.mrb[0].mxu0
    %v2018 = vpop.f32.mrb[0].mxu0
    %v2019 = vadd.f32 0.0, %v2018
    %v2020 = vpop.f32.mrb[0].mxu0
    %2021 = vdwg.mxu0
    %v2022 = vpack.c.bf16 %v2019, %v2016
    %s2023 = scalar_lea.vmem %s5, 128
    %v2024 = vld [vmem:[%s2023] sm:$0xf]
    %v2025 = vld [vmem:[%s2023 + $0x4] sm:$0xf]
    %v2026 = vld [vmem:[%s2023 + $0x8] sm:$0xf]
    %v2027 = vld [vmem:[%s2023 + $0xc] sm:$0xf]
    %v2028 = vld [vmem:[%s2023 + $0x10] sm:$0xf]
    %v2029 = vld [vmem:[%s2023 + $0x14] sm:$0xf]
    %v2030 = vld [vmem:[%s2023 + $0x18] sm:$0xf]
    %v2031 = vld [vmem:[%s2023 + $0x1c] sm:$0xf]
    %v2032 = vld [vmem:[%s2023 + $0x20] sm:$0xf]
    %v2033 = vld [vmem:[%s2023 + $0x24] sm:$0xf]
    %v2034 = vld [vmem:[%s2023 + $0x28] sm:$0xf]
    %v2035 = vld [vmem:[%s2023 + $0x2c] sm:$0xf]
    %v2036 = vld [vmem:[%s2023 + $0x30] sm:$0xf]
    %v2037 = vld [vmem:[%s2023 + $0x34] sm:$0xf]
    %v2038 = vld [vmem:[%s2023 + $0x38] sm:$0xf]
    %v2039 = vld [vmem:[%s2023 + $0x3c] sm:$0xf]
    %v2056 = vunpack.c.l.b16 %v2024
    %v2057 = vunpack.c.l.b16 %v2025
    %v2058 = vunpack.c.l.b16 %v2026
    %v2059 = vunpack.c.l.b16 %v2027
    %v2060 = vunpack.c.l.b16 %v2028
    %v2061 = vunpack.c.l.b16 %v2029
    %v2062 = vunpack.c.l.b16 %v2030
    %v2063 = vunpack.c.l.b16 %v2031
    %v2064 = vunpack.c.l.b16 %v2032
    %v2065 = vunpack.c.l.b16 %v2033
    %v2066 = vunpack.c.l.b16 %v2034
    %v2067 = vunpack.c.l.b16 %v2035
    %v2068 = vunpack.c.l.b16 %v2036
    %v2069 = vunpack.c.l.b16 %v2037
    %v2070 = vunpack.c.l.b16 %v2038
    %v2071 = vunpack.c.l.b16 %v2039
    %v2072 = vpack.c.b16 %v2057, %v2056
    %v2073 = vpack.c.b16 %v2059, %v2058
    %v2074 = vpack.c.b16 %v2061, %v2060
    %v2075 = vpack.c.b16 %v2063, %v2062
    %v2076 = vpack.c.b16 %v2065, %v2064
    %v2077 = vpack.c.b16 %v2067, %v2066
    %v2078 = vpack.c.b16 %v2069, %v2068
    %v2079 = vpack.c.b16 %v2071, %v2070
    %2088 = vmatprep.subr.bf16.mxu0 0
    %2089 = vmatpush1.bf16.msra.mxu0 %v2072
    %2090 = vmatprep.subr.bf16.mxu0 0
    %2091 = vmatpush1.bf16.msra.mxu0 %v2073
    %2092 = vmatprep.subr.bf16.mxu0 0
    %2093 = vmatpush1.bf16.msra.mxu0 %v2074
    %2094 = vmatprep.subr.bf16.mxu0 0
    %2095 = vmatpush1.bf16.msra.mxu0 %v2075
    %2096 = vmatprep.subr.bf16.mxu0 0
    %2097 = vmatpush1.bf16.msra.mxu0 %v2076
    %2098 = vmatprep.subr.bf16.mxu0 0
    %2099 = vmatpush1.bf16.msra.mxu0 %v2077
    %2100 = vmatprep.subr.bf16.mxu0 0
    %2101 = vmatpush1.bf16.msra.mxu0 %v2078
    %2102 = vmatprep.subr.bf16.mxu0 0
    %2103 = vmatpush1.bf16.msra.mxu0 %v2079
    %2104 = vmatprep.subr.bf16.mxu0 0
    %2105 = vmatpush1.bf16.msra.mxu0 0
    %2106 = vmatprep.subr.bf16.mxu0 0
    %2107 = vmatpush1.bf16.msra.mxu0 0
    %2108 = vmatprep.subr.bf16.mxu0 0
    %2109 = vmatpush1.bf16.msra.mxu0 0
    %2110 = vmatprep.subr.bf16.mxu0 0
    %2111 = vmatpush1.bf16.msra.mxu0 0
    %2112 = vmatprep.subr.bf16.mxu0 0
    %2113 = vmatpush1.bf16.msra.mxu0 0
    %2114 = vmatprep.subr.bf16.mxu0 0
    %2115 = vmatpush1.bf16.msra.mxu0 0
    %2116 = vmatprep.subr.bf16.mxu0 0
    %2117 = vmatpush1.bf16.msra.mxu0 0
    %2118 = vmatprep.subr.bf16.mxu0 0
    %2119 = vmatpush1.bf16.msra.mxu0 0
    %2120 = vmatprep.mubr.bf16.mxu0 0
    %2121 = vmatmul.mubr.bf16.gmra.mrb[0].mxu0 %v2022
    %v2122 = vpop.f32.mrb[0].mxu0
    %v2123 = vadd.f32 0.0, %v2122
    %v2124 = vpop.f32.mrb[0].mxu0
    %v2125 = vpop.f32.mrb[0].mxu0
    %v2126 = vadd.f32 0.0, %v2125
    %v2127 = vpop.f32.mrb[0].mxu0
    %2128 = vdwg.mxu0
    %v2129 = vadd.f32 %v1964, %v2123
    %v2130 = vadd.f32 %v1967, %v2126
    %v2131 = vld [vmem:[#allocation7] sm:$0x1]
    %v2133 = vlaneseq
    %v2134 = vshrl.u32 %v2133, 7
    %v2135 = vsub.s32 0, %v2134
    %v2136 = vrot.slane %v2131, %v2135
    %v2138 = vadd.f32 %v2129, %v2136
    %v2139 = vadd.f32 %v2130, %v2136
    %v2140 = vmax.f32 %v2138, 0.0
    %v2141 = vmax.f32 %v2139, 0.0
    %v2142 = vpack.c.bf16 %v2141, %v2140
    %v2143 = vld [vmem:[%s7] sm:$0xf]
    %vm2144 = vcmask 130048
    %v2146 = vsel %vm2144, %v2143, 0
    %2148 = vmatprep.subr.bf16.mxu0 0
    %2149 = vmatpush1.bf16.msra.mxu0 %v2142
    %2150 = vmatprep.subr.bf16.mxu0 0
    %2151 = vmatpush1.bf16.msra.mxu0 0
    %2152 = vmatprep.subr.bf16.mxu0 0
    %2153 = vmatpush1.bf16.msra.mxu0 0
    %2154 = vmatprep.subr.bf16.mxu0 0
    %2155 = vmatpush1.bf16.msra.mxu0 0
    %2156 = vmatprep.subr.bf16.mxu0 0
    %2157 = vmatpush1.bf16.msra.mxu0 0
    %2158 = vmatprep.subr.bf16.mxu0 0
    %2159 = vmatpush1.bf16.msra.mxu0 0
    %2160 = vmatprep.subr.bf16.mxu0 0
    %2161 = vmatpush1.bf16.msra.mxu0 0
    %2162 = vmatprep.subr.bf16.mxu0 0
    %2163 = vmatpush1.bf16.msra.mxu0 0
    %2164 = vmatprep.subr.bf16.mxu0 0
    %2165 = vmatpush1.bf16.msra.mxu0 0
    %2166 = vmatprep.subr.bf16.mxu0 0
    %2167 = vmatpush1.bf16.msra.mxu0 0
    %2168 = vmatprep.subr.bf16.mxu0 0
    %2169 = vmatpush1.bf16.msra.mxu0 0
    %2170 = vmatprep.subr.bf16.mxu0 0
    %2171 = vmatpush1.bf16.msra.mxu0 0
    %2172 = vmatprep.subr.bf16.mxu0 0
    %2173 = vmatpush1.bf16.msra.mxu0 0
    %2174 = vmatprep.subr.bf16.mxu0 0
    %2175 = vmatpush1.bf16.msra.mxu0 0
    %2176 = vmatprep.subr.bf16.mxu0 0
    %2177 = vmatpush1.bf16.msra.mxu0 0
    %2178 = vmatprep.subr.bf16.mxu0 0
    %2179 = vmatpush1.bf16.msra.mxu0 0
    %2180 = vmatprep.mubr.bf16.mxu0 0
    %2181 = vmatmul.mubr.bf16.gmra.mrb[0].mxu0 %v2146
    %v2182 = vpop.f32.mrb[0].mxu0
    %v2183 = vadd.f32 0.0, %v2182
    %v2184 = vpop.f32.mrb[0].mxu0
    %v2185 = vpop.f32.mrb[0].mxu0
    %v2186 = vpop.f32.mrb[0].mxu0
    %2187 = vdwg.mxu0
    %v2188 = vpack.c.bf16 %v2183, %v2183
    %v2189 = vld [vmem:[#allocation8] sm:$0xf]
    %v2190 = vld [vmem:[#allocation8 + $0x4] sm:$0xf]
    %v2191 = vld [vmem:[#allocation8 + $0x8] sm:$0xf]
    %v2192 = vld [vmem:[#allocation8 + $0xc] sm:$0xf]
    %v2193 = vld [vmem:[#allocation8 + $0x10] sm:$0xf]
    %v2194 = vld [vmem:[#allocation8 + $0x14] sm:$0xf]
    %v2195 = vld [vmem:[#allocation8 + $0x18] sm:$0xf]
    %v2196 = vld [vmem:[#allocation8 + $0x1c] sm:$0xf]
    %v2197 = vld [vmem:[#allocation8 + $0x20] sm:$0xf]
    %v2198 = vld [vmem:[#allocation8 + $0x24] sm:$0xf]
    %v2199 = vld [vmem:[#allocation8 + $0x28] sm:$0xf]
    %v2200 = vld [vmem:[#allocation8 + $0x2c] sm:$0xf]
    %v2201 = vld [vmem:[#allocation8 + $0x30] sm:$0xf]
    %v2202 = vld [vmem:[#allocation8 + $0x34] sm:$0xf]
    %v2203 = vld [vmem:[#allocation8 + $0x38] sm:$0xf]
    %v2204 = vld [vmem:[#allocation8 + $0x3c] sm:$0xf]
    %s2205 = scalar_lea.vmem %s7, 4
    %v2206 = vld [vmem:[%s2205] sm:$0xf]
    %v2208 = vsel %vm2144, %v2206, 0
    %2210 = vmatprep.subr.bf16.mxu0 0
    %2211 = vmatpush1.bf16.msra.mxu0 %v2142
    %2212 = vmatprep.subr.bf16.mxu0 0
    %2213 = vmatpush1.bf16.msra.mxu0 0
    %2214 = vmatprep.subr.bf16.mxu0 0
    %2215 = vmatpush1.bf16.msra.mxu0 0
    %2216 = vmatprep.subr.bf16.mxu0 0
    %2217 = vmatpush1.bf16.msra.mxu0 0
    %2218 = vmatprep.subr.bf16.mxu0 0
    %2219 = vmatpush1.bf16.msra.mxu0 0
    %2220 = vmatprep.subr.bf16.mxu0 0
    %2221 = vmatpush1.bf16.msra.mxu0 0
    %2222 = vmatprep.subr.bf16.mxu0 0
    %2223 = vmatpush1.bf16.msra.mxu0 0
    %2224 = vmatprep.subr.bf16.mxu0 0
    %2225 = vmatpush1.bf16.msra.mxu0 0
    %2226 = vmatprep.subr.bf16.mxu0 0
    %2227 = vmatpush1.bf16.msra.mxu0 0
    %2228 = vmatprep.subr.bf16.mxu0 0
    %2229 = vmatpush1.bf16.msra.mxu0 0
    %2230 = vmatprep.subr.bf16.mxu0 0
    %2231 = vmatpush1.bf16.msra.mxu0 0
    %2232 = vmatprep.subr.bf16.mxu0 0
    %2233 = vmatpush1.bf16.msra.mxu0 0
    %2234 = vmatprep.subr.bf16.mxu0 0
    %2235 = vmatpush1.bf16.msra.mxu0 0
    %2236 = vmatprep.subr.bf16.mxu0 0
    %2237 = vmatpush1.bf16.msra.mxu0 0
    %2238 = vmatprep.subr.bf16.mxu0 0
    %2239 = vmatpush1.bf16.msra.mxu0 0
    %2240 = vmatprep.subr.bf16.mxu0 0
    %2241 = vmatpush1.bf16.msra.mxu0 0
    %2242 = vmatprep.mubr.bf16.mxu0 0
    %2243 = vmatmul.mubr.bf16.gmra.mrb[0].mxu0 %v2208
    %v2244 = vpop.f32.mrb[0].mxu0
    %v2245 = vadd.f32 0.0, %v2244
    %v2246 = vpop.f32.mrb[0].mxu0
    %v2247 = vpop.f32.mrb[0].mxu0
    %v2248 = vpop.f32.mrb[0].mxu0
    %2249 = vdwg.mxu0
    %v2250 = vpack.c.bf16 %v2245, %v2245
    %s2251 = scalar_lea.vmem [#allocation8], 64
    %v2252 = vld [vmem:[%s2251] sm:$0xf]
    %v2253 = vld [vmem:[%s2251 + $0x4] sm:$0xf]
    %v2254 = vld [vmem:[%s2251 + $0x8] sm:$0xf]
    %v2255 = vld [vmem:[%s2251 + $0xc] sm:$0xf]
    %v2256 = vld [vmem:[%s2251 + $0x10] sm:$0xf]
    %v2257 = vld [vmem:[%s2251 + $0x14] sm:$0xf]
    %v2258 = vld [vmem:[%s2251 + $0x18] sm:$0xf]
    %v2259 = vld [vmem:[%s2251 + $0x1c] sm:$0xf]
    %v2260 = vld [vmem:[%s2251 + $0x20] sm:$0xf]
    %v2261 = vld [vmem:[%s2251 + $0x24] sm:$0xf]
    %v2262 = vld [vmem:[%s2251 + $0x28] sm:$0xf]
    %v2263 = vld [vmem:[%s2251 + $0x2c] sm:$0xf]
    %v2264 = vld [vmem:[%s2251 + $0x30] sm:$0xf]
    %v2265 = vld [vmem:[%s2251 + $0x34] sm:$0xf]
    %v2266 = vld [vmem:[%s2251 + $0x38] sm:$0xf]
    %v2267 = vld [vmem:[%s2251 + $0x3c] sm:$0xf]
    %v2284 = vunpack.c.l.b16 %v2252
    %v2285 = vunpack.c.l.b16 %v2253
    %v2286 = vunpack.c.l.b16 %v2254
    %v2287 = vunpack.c.l.b16 %v2255
    %v2288 = vunpack.c.l.b16 %v2256
    %v2289 = vunpack.c.l.b16 %v2257
    %v2290 = vunpack.c.l.b16 %v2258
    %v2291 = vunpack.c.l.b16 %v2259
    %v2292 = vunpack.c.l.b16 %v2260
    %v2293 = vunpack.c.l.b16 %v2261
    %v2294 = vunpack.c.l.b16 %v2262
    %v2295 = vunpack.c.l.b16 %v2263
    %v2296 = vunpack.c.l.b16 %v2264
    %v2297 = vunpack.c.l.b16 %v2265
    %v2298 = vunpack.c.l.b16 %v2266
    %v2299 = vunpack.c.l.b16 %v2267
    %v2300 = vpack.c.b16 %v2285, %v2284
    %v2301 = vpack.c.b16 %v2287, %v2286
    %v2302 = vpack.c.b16 %v2289, %v2288
    %v2303 = vpack.c.b16 %v2291, %v2290
    %v2304 = vpack.c.b16 %v2293, %v2292
    %v2305 = vpack.c.b16 %v2295, %v2294
    %v2306 = vpack.c.b16 %v2297, %v2296
    %v2307 = vpack.c.b16 %v2299, %v2298
    %2316 = vmatprep.subr.bf16.mxu0 0
    %2317 = vmatpush1.bf16.msra.mxu0 %v2300
    %2318 = vmatprep.subr.bf16.mxu0 0
    %2319 = vmatpush1.bf16.msra.mxu0 %v2301
    %2320 = vmatprep.subr.bf16.mxu0 0
    %2321 = vmatpush1.bf16.msra.mxu0 %v2302
    %2322 = vmatprep.subr.bf16.mxu0 0
    %2323 = vmatpush1.bf16.msra.mxu0 %v2303
    %2324 = vmatprep.subr.bf16.mxu0 0
    %2325 = vmatpush1.bf16.msra.mxu0 %v2304
    %2326 = vmatprep.subr.bf16.mxu0 0
    %2327 = vmatpush1.bf16.msra.mxu0 %v2305
    %2328 = vmatprep.subr.bf16.mxu0 0
    %2329 = vmatpush1.bf16.msra.mxu0 %v2306
    %2330 = vmatprep.subr.bf16.mxu0 0
    %2331 = vmatpush1.bf16.msra.mxu0 %v2307
    %2332 = vmatprep.subr.bf16.mxu0 0
    %2333 = vmatpush1.bf16.msra.mxu0 0
    %2334 = vmatprep.subr.bf16.mxu0 0
    %2335 = vmatpush1.bf16.msra.mxu0 0
    %2336 = vmatprep.subr.bf16.mxu0 0
    %2337 = vmatpush1.bf16.msra.mxu0 0
    %2338 = vmatprep.subr.bf16.mxu0 0
    %2339 = vmatpush1.bf16.msra.mxu0 0
    %2340 = vmatprep.subr.bf16.mxu0 0
    %2341 = vmatpush1.bf16.msra.mxu0 0
    %2342 = vmatprep.subr.bf16.mxu0 0
    %2343 = vmatpush1.bf16.msra.mxu0 0
    %2344 = vmatprep.subr.bf16.mxu0 0
    %2345 = vmatpush1.bf16.msra.mxu0 0
    %2346 = vmatprep.subr.bf16.mxu0 0
    %2347 = vmatpush1.bf16.msra.mxu0 0
    %2348 = vmatprep.mubr.bf16.mxu0 0
    %2349 = vmatmul.mubr.bf16.gmra.mrb[0].mxu0 %v2250
    %v2350 = vpop.f32.mrb[0].mxu0
    %v2351 = vadd.f32 0.0, %v2350
    %v2352 = vpop.f32.mrb[0].mxu0
    %v2353 = vpop.f32.mrb[0].mxu0
    %v2354 = vpop.f32.mrb[0].mxu0
    %2355 = vdwg.mxu0
    %v2372 = vunpack.c.l.b16 %v2189
    %v2373 = vunpack.c.l.b16 %v2190
    %v2374 = vunpack.c.l.b16 %v2191
    %v2375 = vunpack.c.l.b16 %v2192
    %v2376 = vunpack.c.l.b16 %v2193
    %v2377 = vunpack.c.l.b16 %v2194
    %v2378 = vunpack.c.l.b16 %v2195
    %v2379 = vunpack.c.l.b16 %v2196
    %v2380 = vunpack.c.l.b16 %v2197
    %v2381 = vunpack.c.l.b16 %v2198
    %v2382 = vunpack.c.l.b16 %v2199
    %v2383 = vunpack.c.l.b16 %v2200
    %v2384 = vunpack.c.l.b16 %v2201
    %v2385 = vunpack.c.l.b16 %v2202
    %v2386 = vunpack.c.l.b16 %v2203
    %v2387 = vunpack.c.l.b16 %v2204
    %v2388 = vpack.c.b16 %v2373, %v2372
    %v2389 = vpack.c.b16 %v2375, %v2374
    %v2390 = vpack.c.b16 %v2377, %v2376
    %v2391 = vpack.c.b16 %v2379, %v2378
    %v2392 = vpack.c.b16 %v2381, %v2380
    %v2393 = vpack.c.b16 %v2383, %v2382
    %v2394 = vpack.c.b16 %v2385, %v2384
    %v2395 = vpack.c.b16 %v2387, %v2386
    %2404 = vmatprep.subr.bf16.mxu0 0
    %2405 = vmatpush1.bf16.msra.mxu0 %v2388
    %2406 = vmatprep.subr.bf16.mxu0 0
    %2407 = vmatpush1.bf16.msra.mxu0 %v2389
    %2408 = vmatprep.subr.bf16.mxu0 0
    %2409 = vmatpush1.bf16.msra.mxu0 %v2390
    %2410 = vmatprep.subr.bf16.mxu0 0
    %2411 = vmatpush1.bf16.msra.mxu0 %v2391
    %2412 = vmatprep.subr.bf16.mxu0 0
    %2413 = vmatpush1.bf16.msra.mxu0 %v2392
    %2414 = vmatprep.subr.bf16.mxu0 0
    %2415 = vmatpush1.bf16.msra.mxu0 %v2393
    %2416 = vmatprep.subr.bf16.mxu0 0
    %2417 = vmatpush1.bf16.msra.mxu0 %v2394
    %2418 = vmatprep.subr.bf16.mxu0 0
    %2419 = vmatpush1.bf16.msra.mxu0 %v2395
    %2420 = vmatprep.subr.bf16.mxu0 0
    %2421 = vmatpush1.bf16.msra.mxu0 0
    %2422 = vmatprep.subr.bf16.mxu0 0
    %2423 = vmatpush1.bf16.msra.mxu0 0
    %2424 = vmatprep.subr.bf16.mxu0 0
    %2425 = vmatpush1.bf16.msra.mxu0 0
    %2426 = vmatprep.subr.bf16.mxu0 0
    %2427 = vmatpush1.bf16.msra.mxu0 0
    %2428 = vmatprep.subr.bf16.mxu0 0
    %2429 = vmatpush1.bf16.msra.mxu0 0
    %2430 = vmatprep.subr.bf16.mxu0 0
    %2431 = vmatpush1.bf16.msra.mxu0 0
    %2432 = vmatprep.subr.bf16.mxu0 0
    %2433 = vmatpush1.bf16.msra.mxu0 0
    %2434 = vmatprep.subr.bf16.mxu0 0
    %2435 = vmatpush1.bf16.msra.mxu0 0
    %2436 = vmatprep.mubr.bf16.mxu0 0
    %2437 = vmatmul.mubr.bf16.gmra.mrb[0].mxu0 %v2188
    %v2438 = vpop.f32.mrb[0].mxu0
    %v2439 = vadd.f32 %v2351, %v2438
    %v2440 = vpop.f32.mrb[0].mxu0
    %v2441 = vpop.f32.mrb[0].mxu0
    %v2442 = vpop.f32.mrb[0].mxu0
    %2443 = vdwg.mxu0
    %s2444 = scalar_lea.vmem %s7, 8
    %v2445 = vld [vmem:[%s2444] sm:$0xf]
    %v2447 = vsel %vm2144, %v2445, 0
    %2449 = vmatprep.subr.bf16.mxu0 0
    %2450 = vmatpush1.bf16.msra.mxu0 %v2142
    %2451 = vmatprep.subr.bf16.mxu0 0
    %2452 = vmatpush1.bf16.msra.mxu0 0
    %2453 = vmatprep.subr.bf16.mxu0 0
    %2454 = vmatpush1.bf16.msra.mxu0 0
    %2455 = vmatprep.subr.bf16.mxu0 0
    %2456 = vmatpush1.bf16.msra.mxu0 0
    %2457 = vmatprep.subr.bf16.mxu0 0
    %2458 = vmatpush1.bf16.msra.mxu0 0
    %2459 = vmatprep.subr.bf16.mxu0 0
    %2460 = vmatpush1.bf16.msra.mxu0 0
    %2461 = vmatprep.subr.bf16.mxu0 0
    %2462 = vmatpush1.bf16.msra.mxu0 0
    %2463 = vmatprep.subr.bf16.mxu0 0
    %2464 = vmatpush1.bf16.msra.mxu0 0
    %2465 = vmatprep.subr.bf16.mxu0 0
    %2466 = vmatpush1.bf16.msra.mxu0 0
    %2467 = vmatprep.subr.bf16.mxu0 0
    %2468 = vmatpush1.bf16.msra.mxu0 0
    %2469 = vmatprep.subr.bf16.mxu0 0
    %2470 = vmatpush1.bf16.msra.mxu0 0
    %2471 = vmatprep.subr.bf16.mxu0 0
    %2472 = vmatpush1.bf16.msra.mxu0 0
    %2473 = vmatprep.subr.bf16.mxu0 0
    %2474 = vmatpush1.bf16.msra.mxu0 0
    %2475 = vmatprep.subr.bf16.mxu0 0
    %2476 = vmatpush1.bf16.msra.mxu0 0
    %2477 = vmatprep.subr.bf16.mxu0 0
    %2478 = vmatpush1.bf16.msra.mxu0 0
    %2479 = vmatprep.subr.bf16.mxu0 0
    %2480 = vmatpush1.bf16.msra.mxu0 0
    %2481 = vmatprep.mubr.bf16.mxu0 0
    %2482 = vmatmul.mubr.bf16.gmra.mrb[0].mxu0 %v2447
    %v2483 = vpop.f32.mrb[0].mxu0
    %v2484 = vadd.f32 0.0, %v2483
    %v2485 = vpop.f32.mrb[0].mxu0
    %v2486 = vpop.f32.mrb[0].mxu0
    %v2487 = vpop.f32.mrb[0].mxu0
    %2488 = vdwg.mxu0
    %v2489 = vpack.c.bf16 %v2484, %v2484
    %s2490 = scalar_lea.vmem [#allocation8], 128
    %v2491 = vld [vmem:[%s2490] sm:$0xf]
    %v2492 = vld [vmem:[%s2490 + $0x4] sm:$0xf]
    %v2493 = vld [vmem:[%s2490 + $0x8] sm:$0xf]
    %v2494 = vld [vmem:[%s2490 + $0xc] sm:$0xf]
    %v2495 = vld [vmem:[%s2490 + $0x10] sm:$0xf]
    %v2496 = vld [vmem:[%s2490 + $0x14] sm:$0xf]
    %v2497 = vld [vmem:[%s2490 + $0x18] sm:$0xf]
    %v2498 = vld [vmem:[%s2490 + $0x1c] sm:$0xf]
    %v2499 = vld [vmem:[%s2490 + $0x20] sm:$0xf]
    %v2500 = vld [vmem:[%s2490 + $0x24] sm:$0xf]
    %v2501 = vld [vmem:[%s2490 + $0x28] sm:$0xf]
    %v2502 = vld [vmem:[%s2490 + $0x2c] sm:$0xf]
    %v2503 = vld [vmem:[%s2490 + $0x30] sm:$0xf]
    %v2504 = vld [vmem:[%s2490 + $0x34] sm:$0xf]
    %v2505 = vld [vmem:[%s2490 + $0x38] sm:$0xf]
    %v2506 = vld [vmem:[%s2490 + $0x3c] sm:$0xf]
    %v2523 = vunpack.c.l.b16 %v2491
    %v2524 = vunpack.c.l.b16 %v2492
    %v2525 = vunpack.c.l.b16 %v2493
    %v2526 = vunpack.c.l.b16 %v2494
    %v2527 = vunpack.c.l.b16 %v2495
    %v2528 = vunpack.c.l.b16 %v2496
    %v2529 = vunpack.c.l.b16 %v2497
    %v2530 = vunpack.c.l.b16 %v2498
    %v2531 = vunpack.c.l.b16 %v2499
    %v2532 = vunpack.c.l.b16 %v2500
    %v2533 = vunpack.c.l.b16 %v2501
    %v2534 = vunpack.c.l.b16 %v2502
    %v2535 = vunpack.c.l.b16 %v2503
    %v2536 = vunpack.c.l.b16 %v2504
    %v2537 = vunpack.c.l.b16 %v2505
    %v2538 = vunpack.c.l.b16 %v2506
    %v2539 = vpack.c.b16 %v2524, %v2523
    %v2540 = vpack.c.b16 %v2526, %v2525
    %v2541 = vpack.c.b16 %v2528, %v2527
    %v2542 = vpack.c.b16 %v2530, %v2529
    %v2543 = vpack.c.b16 %v2532, %v2531
    %v2544 = vpack.c.b16 %v2534, %v2533
    %v2545 = vpack.c.b16 %v2536, %v2535
    %v2546 = vpack.c.b16 %v2538, %v2537
    %2555 = vmatprep.subr.bf16.mxu0 0
    %2556 = vmatpush1.bf16.msra.mxu0 %v2539
    %2557 = vmatprep.subr.bf16.mxu0 0
    %2558 = vmatpush1.bf16.msra.mxu0 %v2540
    %2559 = vmatprep.subr.bf16.mxu0 0
    %2560 = vmatpush1.bf16.msra.mxu0 %v2541
    %2561 = vmatprep.subr.bf16.mxu0 0
    %2562 = vmatpush1.bf16.msra.mxu0 %v2542
    %2563 = vmatprep.subr.bf16.mxu0 0
    %2564 = vmatpush1.bf16.msra.mxu0 %v2543
    %2565 = vmatprep.subr.bf16.mxu0 0
    %2566 = vmatpush1.bf16.msra.mxu0 %v2544
    %2567 = vmatprep.subr.bf16.mxu0 0
    %2568 = vmatpush1.bf16.msra.mxu0 %v2545
    %2569 = vmatprep.subr.bf16.mxu0 0
    %2570 = vmatpush1.bf16.msra.mxu0 %v2546
    %2571 = vmatprep.subr.bf16.mxu0 0
    %2572 = vmatpush1.bf16.msra.mxu0 0
    %2573 = vmatprep.subr.bf16.mxu0 0
    %2574 = vmatpush1.bf16.msra.mxu0 0
    %2575 = vmatprep.subr.bf16.mxu0 0
    %2576 = vmatpush1.bf16.msra.mxu0 0
    %2577 = vmatprep.subr.bf16.mxu0 0
    %2578 = vmatpush1.bf16.msra.mxu0 0
    %2579 = vmatprep.subr.bf16.mxu0 0
    %2580 = vmatpush1.bf16.msra.mxu0 0
    %2581 = vmatprep.subr.bf16.mxu0 0
    %2582 = vmatpush1.bf16.msra.mxu0 0
    %2583 = vmatprep.subr.bf16.mxu0 0
    %2584 = vmatpush1.bf16.msra.mxu0 0
    %2585 = vmatprep.subr.bf16.mxu0 0
    %2586 = vmatpush1.bf16.msra.mxu0 0
    %2587 = vmatprep.mubr.bf16.mxu0 0
    %2588 = vmatmul.mubr.bf16.gmra.mrb[0].mxu0 %v2489
    %v2589 = vpop.f32.mrb[0].mxu0
    %v2590 = vadd.f32 0.0, %v2589
    %v2591 = vpop.f32.mrb[0].mxu0
    %v2592 = vpop.f32.mrb[0].mxu0
    %v2593 = vpop.f32.mrb[0].mxu0
    %2594 = vdwg.mxu0
    %v2595 = vadd.f32 %v2439, %v2590
    %v2596 = vld [vmem:[%s9] sm:$0x1]
    %v2598 = vlaneseq
    %v2599 = vshrl.u32 %v2598, 7
    %v2600 = vsub.s32 0, %v2599
    %v2601 = vrot.slane %v2596, %v2600
    %v2603 = vadd.f32 %v2595, %v2601
    %v2604 = vmax.f32 %v2603, 0.0
    %v2605 = vpack.c.bf16 %v2604, %v2604
    %v2606 = vld [vmem:[%s10] sm:$0x3]
    %vm2607 = vcmask 64512
    %v2609 = vsel %vm2607, %v2606, 0
    %vm2611 = vcmask 1043456
    %v2613 = vsel %vm2611, %v2605, 0
    %2615 = vmatprep.subr.bf16.mxu0 0
    %2616 = vmatpush1.bf16.msra.mxu0 %v2613
    %2617 = vmatprep.subr.bf16.mxu0 0
    %2618 = vmatpush1.bf16.msra.mxu0 0
    %2619 = vmatprep.subr.bf16.mxu0 0
    %2620 = vmatpush1.bf16.msra.mxu0 0
    %2621 = vmatprep.subr.bf16.mxu0 0
    %2622 = vmatpush1.bf16.msra.mxu0 0
    %2623 = vmatprep.subr.bf16.mxu0 0
    %2624 = vmatpush1.bf16.msra.mxu0 0
    %2625 = vmatprep.subr.bf16.mxu0 0
    %2626 = vmatpush1.bf16.msra.mxu0 0
    %2627 = vmatprep.subr.bf16.mxu0 0
    %2628 = vmatpush1.bf16.msra.mxu0 0
    %2629 = vmatprep.subr.bf16.mxu0 0
    %2630 = vmatpush1.bf16.msra.mxu0 0
    %2631 = vmatprep.subr.bf16.mxu0 0
    %2632 = vmatpush1.bf16.msra.mxu0 0
    %2633 = vmatprep.subr.bf16.mxu0 0
    %2634 = vmatpush1.bf16.msra.mxu0 0
    %2635 = vmatprep.subr.bf16.mxu0 0
    %2636 = vmatpush1.bf16.msra.mxu0 0
    %2637 = vmatprep.subr.bf16.mxu0 0
    %2638 = vmatpush1.bf16.msra.mxu0 0
    %2639 = vmatprep.subr.bf16.mxu0 0
    %2640 = vmatpush1.bf16.msra.mxu0 0
    %2641 = vmatprep.subr.bf16.mxu0 0
    %2642 = vmatpush1.bf16.msra.mxu0 0
    %2643 = vmatprep.subr.bf16.mxu0 0
    %2644 = vmatpush1.bf16.msra.mxu0 0
    %2645 = vmatprep.subr.bf16.mxu0 0
    %2646 = vmatpush1.bf16.msra.mxu0 0
    %2647 = vmatprep.mubr.bf16.mxu0 0
    %2648 = vmatmul.mubr.bf16.gmra.mrb[0].mxu0 %v2609
    %v2649 = vpop.f32.mrb[0].mxu0
    %v2650 = vadd.f32 0.0, %v2649
    %v2651 = vpop.f32.mrb[0].mxu0
    %v2652 = vpop.f32.mrb[0].mxu0
    %v2653 = vpop.f32.mrb[0].mxu0
    %2654 = vdwg.mxu0
    %v2655 = vpack.c.bf16 %v2650, %v2650
    %v2656 = vld [vmem:[#allocation10] sm:$0xf]
    %v2657 = vld [vmem:[#allocation10 + $0x4] sm:$0xf]
    %v2658 = vld [vmem:[#allocation10 + $0x8] sm:$0xf]
    %v2659 = vld [vmem:[#allocation10 + $0xc] sm:$0xf]
    %v2660 = vld [vmem:[#allocation10 + $0x10] sm:$0xf]
    %v2661 = vld [vmem:[#allocation10 + $0x14] sm:$0xf]
    %v2662 = vld [vmem:[#allocation10 + $0x18] sm:$0xf]
    %v2663 = vld [vmem:[#allocation10 + $0x1c] sm:$0xf]
    %v2664 = vld [vmem:[#allocation10 + $0x20] sm:$0xf]
    %v2665 = vld [vmem:[#allocation10 + $0x24] sm:$0xf]
    %v2666 = vld [vmem:[#allocation10 + $0x28] sm:$0xf]
    %v2667 = vld [vmem:[#allocation10 + $0x2c] sm:$0xf]
    %v2668 = vld [vmem:[#allocation10 + $0x30] sm:$0xf]
    %v2669 = vld [vmem:[#allocation10 + $0x34] sm:$0xf]
    %v2670 = vld [vmem:[#allocation10 + $0x38] sm:$0xf]
    %v2671 = vld [vmem:[#allocation10 + $0x3c] sm:$0xf]
    %s2672 = scalar_lea.vmem %s10, 2
    %v2673 = vld [vmem:[%s2672] sm:$0x3]
    %v2675 = vsel %vm2607, %v2673, 0
    %2677 = vmatprep.subr.bf16.mxu0 0
    %2678 = vmatpush1.bf16.msra.mxu0 %v2613
    %2679 = vmatprep.subr.bf16.mxu0 0
    %2680 = vmatpush1.bf16.msra.mxu0 0
    %2681 = vmatprep.subr.bf16.mxu0 0
    %2682 = vmatpush1.bf16.msra.mxu0 0
    %2683 = vmatprep.subr.bf16.mxu0 0
    %2684 = vmatpush1.bf16.msra.mxu0 0
    %2685 = vmatprep.subr.bf16.mxu0 0
    %2686 = vmatpush1.bf16.msra.mxu0 0
    %2687 = vmatprep.subr.bf16.mxu0 0
    %2688 = vmatpush1.bf16.msra.mxu0 0
    %2689 = vmatprep.subr.bf16.mxu0 0
    %2690 = vmatpush1.bf16.msra.mxu0 0
    %2691 = vmatprep.subr.bf16.mxu0 0
    %2692 = vmatpush1.bf16.msra.mxu0 0
    %2693 = vmatprep.subr.bf16.mxu0 0
    %2694 = vmatpush1.bf16.msra.mxu0 0
    %2695 = vmatprep.subr.bf16.mxu0 0
    %2696 = vmatpush1.bf16.msra.mxu0 0
    %2697 = vmatprep.subr.bf16.mxu0 0
    %2698 = vmatpush1.bf16.msra.mxu0 0
    %2699 = vmatprep.subr.bf16.mxu0 0
    %2700 = vmatpush1.bf16.msra.mxu0 0
    %2701 = vmatprep.subr.bf16.mxu0 0
    %2702 = vmatpush1.bf16.msra.mxu0 0
    %2703 = vmatprep.subr.bf16.mxu0 0
    %2704 = vmatpush1.bf16.msra.mxu0 0
    %2705 = vmatprep.subr.bf16.mxu0 0
    %2706 = vmatpush1.bf16.msra.mxu0 0
    %2707 = vmatprep.subr.bf16.mxu0 0
    %2708 = vmatpush1.bf16.msra.mxu0 0
    %2709 = vmatprep.mubr.bf16.mxu0 0
    %2710 = vmatmul.mubr.bf16.gmra.mrb[0].mxu0 %v2675
    %v2711 = vpop.f32.mrb[0].mxu0
    %v2712 = vadd.f32 0.0, %v2711
    %v2713 = vpop.f32.mrb[0].mxu0
    %v2714 = vpop.f32.mrb[0].mxu0
    %v2715 = vpop.f32.mrb[0].mxu0
    %2716 = vdwg.mxu0
    %v2717 = vpack.c.bf16 %v2712, %v2712
    %s2718 = scalar_lea.vmem [#allocation10], 64
    %v2719 = vld [vmem:[%s2718] sm:$0xf]
    %v2720 = vld [vmem:[%s2718 + $0x4] sm:$0xf]
    %v2721 = vld [vmem:[%s2718 + $0x8] sm:$0xf]
    %v2722 = vld [vmem:[%s2718 + $0xc] sm:$0xf]
    %v2723 = vld [vmem:[%s2718 + $0x10] sm:$0xf]
    %v2724 = vld [vmem:[%s2718 + $0x14] sm:$0xf]
    %v2725 = vld [vmem:[%s2718 + $0x18] sm:$0xf]
    %v2726 = vld [vmem:[%s2718 + $0x1c] sm:$0xf]
    %v2727 = vld [vmem:[%s2718 + $0x20] sm:$0xf]
    %v2728 = vld [vmem:[%s2718 + $0x24] sm:$0xf]
    %v2729 = vld [vmem:[%s2718 + $0x28] sm:$0xf]
    %v2730 = vld [vmem:[%s2718 + $0x2c] sm:$0xf]
    %v2731 = vld [vmem:[%s2718 + $0x30] sm:$0xf]
    %v2732 = vld [vmem:[%s2718 + $0x34] sm:$0xf]
    %v2733 = vld [vmem:[%s2718 + $0x38] sm:$0xf]
    %v2734 = vld [vmem:[%s2718 + $0x3c] sm:$0xf]
    %v2751 = vunpack.c.l.b16 %v2719
    %v2752 = vunpack.c.l.b16 %v2720
    %v2753 = vunpack.c.l.b16 %v2721
    %v2754 = vunpack.c.l.b16 %v2722
    %v2755 = vunpack.c.l.b16 %v2723
    %v2756 = vunpack.c.l.b16 %v2724
    %v2757 = vunpack.c.l.b16 %v2725
    %v2758 = vunpack.c.l.b16 %v2726
    %v2759 = vunpack.c.l.b16 %v2727
    %v2760 = vunpack.c.l.b16 %v2728
    %v2761 = vunpack.c.l.b16 %v2729
    %v2762 = vunpack.c.l.b16 %v2730
    %v2763 = vunpack.c.l.b16 %v2731
    %v2764 = vunpack.c.l.b16 %v2732
    %v2765 = vunpack.c.l.b16 %v2733
    %v2766 = vunpack.c.l.b16 %v2734
    %v2767 = vpack.c.b16 %v2752, %v2751
    %v2768 = vpack.c.b16 %v2754, %v2753
    %v2769 = vpack.c.b16 %v2756, %v2755
    %v2770 = vpack.c.b16 %v2758, %v2757
    %v2771 = vpack.c.b16 %v2760, %v2759
    %v2772 = vpack.c.b16 %v2762, %v2761
    %v2773 = vpack.c.b16 %v2764, %v2763
    %v2774 = vpack.c.b16 %v2766, %v2765
    %2783 = vmatprep.subr.bf16.mxu0 0
    %2784 = vmatpush1.bf16.msra.mxu0 %v2767
    %2785 = vmatprep.subr.bf16.mxu0 0
    %2786 = vmatpush1.bf16.msra.mxu0 %v2768
    %2787 = vmatprep.subr.bf16.mxu0 0
    %2788 = vmatpush1.bf16.msra.mxu0 %v2769
    %2789 = vmatprep.subr.bf16.mxu0 0
    %2790 = vmatpush1.bf16.msra.mxu0 %v2770
    %2791 = vmatprep.subr.bf16.mxu0 0
    %2792 = vmatpush1.bf16.msra.mxu0 %v2771
    %2793 = vmatprep.subr.bf16.mxu0 0
    %2794 = vmatpush1.bf16.msra.mxu0 %v2772
    %2795 = vmatprep.subr.bf16.mxu0 0
    %2796 = vmatpush1.bf16.msra.mxu0 %v2773
    %2797 = vmatprep.subr.bf16.mxu0 0
    %2798 = vmatpush1.bf16.msra.mxu0 %v2774
    %2799 = vmatprep.subr.bf16.mxu0 0
    %2800 = vmatpush1.bf16.msra.mxu0 0
    %2801 = vmatprep.subr.bf16.mxu0 0
    %2802 = vmatpush1.bf16.msra.mxu0 0
    %2803 = vmatprep.subr.bf16.mxu0 0
    %2804 = vmatpush1.bf16.msra.mxu0 0
    %2805 = vmatprep.subr.bf16.mxu0 0
    %2806 = vmatpush1.bf16.msra.mxu0 0
    %2807 = vmatprep.subr.bf16.mxu0 0
    %2808 = vmatpush1.bf16.msra.mxu0 0
    %2809 = vmatprep.subr.bf16.mxu0 0
    %2810 = vmatpush1.bf16.msra.mxu0 0
    %2811 = vmatprep.subr.bf16.mxu0 0
    %2812 = vmatpush1.bf16.msra.mxu0 0
    %2813 = vmatprep.subr.bf16.mxu0 0
    %2814 = vmatpush1.bf16.msra.mxu0 0
    %2815 = vmatprep.mubr.bf16.mxu0 0
    %2816 = vmatmul.mubr.bf16.gmra.mrb[0].mxu0 %v2717
    %v2817 = vpop.f32.mrb[0].mxu0
    %v2818 = vadd.f32 0.0, %v2817
    %v2819 = vpop.f32.mrb[0].mxu0
    %v2820 = vpop.f32.mrb[0].mxu0
    %v2821 = vpop.f32.mrb[0].mxu0
    %2822 = vdwg.mxu0
    %v2839 = vunpack.c.l.b16 %v2656
    %v2840 = vunpack.c.l.b16 %v2657
    %v2841 = vunpack.c.l.b16 %v2658
    %v2842 = vunpack.c.l.b16 %v2659
    %v2843 = vunpack.c.l.b16 %v2660
    %v2844 = vunpack.c.l.b16 %v2661
    %v2845 = vunpack.c.l.b16 %v2662
    %v2846 = vunpack.c.l.b16 %v2663
    %v2847 = vunpack.c.l.b16 %v2664
    %v2848 = vunpack.c.l.b16 %v2665
    %v2849 = vunpack.c.l.b16 %v2666
    %v2850 = vunpack.c.l.b16 %v2667
    %v2851 = vunpack.c.l.b16 %v2668
    %v2852 = vunpack.c.l.b16 %v2669
    %v2853 = vunpack.c.l.b16 %v2670
    %v2854 = vunpack.c.l.b16 %v2671
    %v2855 = vpack.c.b16 %v2840, %v2839
    %v2856 = vpack.c.b16 %v2842, %v2841
    %v2857 = vpack.c.b16 %v2844, %v2843
    %v2858 = vpack.c.b16 %v2846, %v2845
    %v2859 = vpack.c.b16 %v2848, %v2847
    %v2860 = vpack.c.b16 %v2850, %v2849
    %v2861 = vpack.c.b16 %v2852, %v2851
    %v2862 = vpack.c.b16 %v2854, %v2853
    %2871 = vmatprep.subr.bf16.mxu0 0
    %2872 = vmatpush1.bf16.msra.mxu0 %v2855
    %2873 = vmatprep.subr.bf16.mxu0 0
    %2874 = vmatpush1.bf16.msra.mxu0 %v2856
    %2875 = vmatprep.subr.bf16.mxu0 0
    %2876 = vmatpush1.bf16.msra.mxu0 %v2857
    %2877 = vmatprep.subr.bf16.mxu0 0
    %2878 = vmatpush1.bf16.msra.mxu0 %v2858
    %2879 = vmatprep.subr.bf16.mxu0 0
    %2880 = vmatpush1.bf16.msra.mxu0 %v2859
    %2881 = vmatprep.subr.bf16.mxu0 0
    %2882 = vmatpush1.bf16.msra.mxu0 %v2860
    %2883 = vmatprep.subr.bf16.mxu0 0
    %2884 = vmatpush1.bf16.msra.mxu0 %v2861
    %2885 = vmatprep.subr.bf16.mxu0 0
    %2886 = vmatpush1.bf16.msra.mxu0 %v2862
    %2887 = vmatprep.subr.bf16.mxu0 0
    %2888 = vmatpush1.bf16.msra.mxu0 0
    %2889 = vmatprep.subr.bf16.mxu0 0
    %2890 = vmatpush1.bf16.msra.mxu0 0
    %2891 = vmatprep.subr.bf16.mxu0 0
    %2892 = vmatpush1.bf16.msra.mxu0 0
    %2893 = vmatprep.subr.bf16.mxu0 0
    %2894 = vmatpush1.bf16.msra.mxu0 0
    %2895 = vmatprep.subr.bf16.mxu0 0
    %2896 = vmatpush1.bf16.msra.mxu0 0
    %2897 = vmatprep.subr.bf16.mxu0 0
    %2898 = vmatpush1.bf16.msra.mxu0 0
    %2899 = vmatprep.subr.bf16.mxu0 0
    %2900 = vmatpush1.bf16.msra.mxu0 0
    %2901 = vmatprep.subr.bf16.mxu0 0
    %2902 = vmatpush1.bf16.msra.mxu0 0
    %2903 = vmatprep.mubr.bf16.mxu0 0
    %2904 = vmatmul.mubr.bf16.gmra.mrb[0].mxu0 %v2655
    %v2905 = vpop.f32.mrb[0].mxu0
    %v2906 = vadd.f32 %v2818, %v2905
    %v2907 = vpop.f32.mrb[0].mxu0
    %v2908 = vpop.f32.mrb[0].mxu0
    %v2909 = vpop.f32.mrb[0].mxu0
    %2910 = vdwg.mxu0
    %s2911 = scalar_lea.vmem %s10, 4
    %v2912 = vld [vmem:[%s2911] sm:$0x3]
    %v2914 = vsel %vm2607, %v2912, 0
    %2916 = vmatprep.subr.bf16.mxu0 0
    %2917 = vmatpush1.bf16.msra.mxu0 %v2613
    %2918 = vmatprep.subr.bf16.mxu0 0
    %2919 = vmatpush1.bf16.msra.mxu0 0
    %2920 = vmatprep.subr.bf16.mxu0 0
    %2921 = vmatpush1.bf16.msra.mxu0 0
    %2922 = vmatprep.subr.bf16.mxu0 0
    %2923 = vmatpush1.bf16.msra.mxu0 0
    %2924 = vmatprep.subr.bf16.mxu0 0
    %2925 = vmatpush1.bf16.msra.mxu0 0
    %2926 = vmatprep.subr.bf16.mxu0 0
    %2927 = vmatpush1.bf16.msra.mxu0 0
    %2928 = vmatprep.subr.bf16.mxu0 0
    %2929 = vmatpush1.bf16.msra.mxu0 0
    %2930 = vmatprep.subr.bf16.mxu0 0
    %2931 = vmatpush1.bf16.msra.mxu0 0
    %2932 = vmatprep.subr.bf16.mxu0 0
    %2933 = vmatpush1.bf16.msra.mxu0 0
    %2934 = vmatprep.subr.bf16.mxu0 0
    %2935 = vmatpush1.bf16.msra.mxu0 0
    %2936 = vmatprep.subr.bf16.mxu0 0
    %2937 = vmatpush1.bf16.msra.mxu0 0
    %2938 = vmatprep.subr.bf16.mxu0 0
    %2939 = vmatpush1.bf16.msra.mxu0 0
    %2940 = vmatprep.subr.bf16.mxu0 0
    %2941 = vmatpush1.bf16.msra.mxu0 0
    %2942 = vmatprep.subr.bf16.mxu0 0
    %2943 = vmatpush1.bf16.msra.mxu0 0
    %2944 = vmatprep.subr.bf16.mxu0 0
    %2945 = vmatpush1.bf16.msra.mxu0 0
    %2946 = vmatprep.subr.bf16.mxu0 0
    %2947 = vmatpush1.bf16.msra.mxu0 0
    %2948 = vmatprep.mubr.bf16.mxu0 0
    %2949 = vmatmul.mubr.bf16.gmra.mrb[0].mxu0 %v2914
    %v2950 = vpop.f32.mrb[0].mxu0
    %v2951 = vadd.f32 0.0, %v2950
    %v2952 = vpop.f32.mrb[0].mxu0
    %v2953 = vpop.f32.mrb[0].mxu0
    %v2954 = vpop.f32.mrb[0].mxu0
    %2955 = vdwg.mxu0
    %v2956 = vpack.c.bf16 %v2951, %v2951
    %s2957 = scalar_lea.vmem [#allocation10], 128
    %v2958 = vld [vmem:[%s2957] sm:$0xf]
    %v2959 = vld [vmem:[%s2957 + $0x4] sm:$0xf]
    %v2960 = vld [vmem:[%s2957 + $0x8] sm:$0xf]
    %v2961 = vld [vmem:[%s2957 + $0xc] sm:$0xf]
    %v2962 = vld [vmem:[%s2957 + $0x10] sm:$0xf]
    %v2963 = vld [vmem:[%s2957 + $0x14] sm:$0xf]
    %v2964 = vld [vmem:[%s2957 + $0x18] sm:$0xf]
    %v2965 = vld [vmem:[%s2957 + $0x1c] sm:$0xf]
    %v2966 = vld [vmem:[%s2957 + $0x20] sm:$0xf]
    %v2967 = vld [vmem:[%s2957 + $0x24] sm:$0xf]
    %v2968 = vld [vmem:[%s2957 + $0x28] sm:$0xf]
    %v2969 = vld [vmem:[%s2957 + $0x2c] sm:$0xf]
    %v2970 = vld [vmem:[%s2957 + $0x30] sm:$0xf]
    %v2971 = vld [vmem:[%s2957 + $0x34] sm:$0xf]
    %v2972 = vld [vmem:[%s2957 + $0x38] sm:$0xf]
    %v2973 = vld [vmem:[%s2957 + $0x3c] sm:$0xf]
    %v2990 = vunpack.c.l.b16 %v2958
    %v2991 = vunpack.c.l.b16 %v2959
    %v2992 = vunpack.c.l.b16 %v2960
    %v2993 = vunpack.c.l.b16 %v2961
    %v2994 = vunpack.c.l.b16 %v2962
    %v2995 = vunpack.c.l.b16 %v2963
    %v2996 = vunpack.c.l.b16 %v2964
    %v2997 = vunpack.c.l.b16 %v2965
    %v2998 = vunpack.c.l.b16 %v2966
    %v2999 = vunpack.c.l.b16 %v2967
    %v3000 = vunpack.c.l.b16 %v2968
    %v3001 = vunpack.c.l.b16 %v2969
    %v3002 = vunpack.c.l.b16 %v2970
    %v3003 = vunpack.c.l.b16 %v2971
    %v3004 = vunpack.c.l.b16 %v2972
    %v3005 = vunpack.c.l.b16 %v2973
    %v3006 = vpack.c.b16 %v2991, %v2990
    %v3007 = vpack.c.b16 %v2993, %v2992
    %v3008 = vpack.c.b16 %v2995, %v2994
    %v3009 = vpack.c.b16 %v2997, %v2996
    %v3010 = vpack.c.b16 %v2999, %v2998
    %v3011 = vpack.c.b16 %v3001, %v3000
    %v3012 = vpack.c.b16 %v3003, %v3002
    %v3013 = vpack.c.b16 %v3005, %v3004
    %3022 = vmatprep.subr.bf16.mxu0 0
    %3023 = vmatpush1.bf16.msra.mxu0 %v3006
    %3024 = vmatprep.subr.bf16.mxu0 0
    %3025 = vmatpush1.bf16.msra.mxu0 %v3007
    %3026 = vmatprep.subr.bf16.mxu0 0
    %3027 = vmatpush1.bf16.msra.mxu0 %v3008
    %3028 = vmatprep.subr.bf16.mxu0 0
    %3029 = vmatpush1.bf16.msra.mxu0 %v3009
    %3030 = vmatprep.subr.bf16.mxu0 0
    %3031 = vmatpush1.bf16.msra.mxu0 %v3010
    %3032 = vmatprep.subr.bf16.mxu0 0
    %3033 = vmatpush1.bf16.msra.mxu0 %v3011
    %3034 = vmatprep.subr.bf16.mxu0 0
    %3035 = vmatpush1.bf16.msra.mxu0 %v3012
    %3036 = vmatprep.subr.bf16.mxu0 0
    %3037 = vmatpush1.bf16.msra.mxu0 %v3013
    %3038 = vmatprep.subr.bf16.mxu0 0
    %3039 = vmatpush1.bf16.msra.mxu0 0
    %3040 = vmatprep.subr.bf16.mxu0 0
    %3041 = vmatpush1.bf16.msra.mxu0 0
    %3042 = vmatprep.subr.bf16.mxu0 0
    %3043 = vmatpush1.bf16.msra.mxu0 0
    %3044 = vmatprep.subr.bf16.mxu0 0
    %3045 = vmatpush1.bf16.msra.mxu0 0
    %3046 = vmatprep.subr.bf16.mxu0 0
    %3047 = vmatpush1.bf16.msra.mxu0 0
    %3048 = vmatprep.subr.bf16.mxu0 0
    %3049 = vmatpush1.bf16.msra.mxu0 0
    %3050 = vmatprep.subr.bf16.mxu0 0
    %3051 = vmatpush1.bf16.msra.mxu0 0
    %3052 = vmatprep.subr.bf16.mxu0 0
    %3053 = vmatpush1.bf16.msra.mxu0 0
    %3054 = vmatprep.mubr.bf16.mxu0 0
    %3055 = vmatmul.mubr.bf16.gmra.mrb[0].mxu0 %v2956
    %v3056 = vpop.f32.mrb[0].mxu0
    %v3057 = vadd.f32 0.0, %v3056
    %v3058 = vpop.f32.mrb[0].mxu0
    %v3059 = vpop.f32.mrb[0].mxu0
    %v3060 = vpop.f32.mrb[0].mxu0
    %3061 = vdwg.mxu0
    %v3062 = vadd.f32 %v2906, %v3057
    %v3063 = vld [vmem:[%s12] sm:$0x1]
    %v3065 = vlaneseq
    %v3066 = vshrl.u32 %v3065, 7
    %v3067 = vsub.s32 0, %v3066
    %v3068 = vrot.slane %v3063, %v3067
    %v3070 = vadd.f32 %v3062, %v3068
    %v3071 = vmax.f32 %v3070, 0.0
    %v3072 = vpack.c.bf16 %v3071, %v3071
    %v3073 = vld [vmem:[%s13] sm:$0x1]
    %vm3074 = vcmask 31744
    %v3076 = vsel %vm3074, %v3073, 0
    %vm3078 = vcmask 1041408
    %v3080 = vsel %vm3078, %v3072, 0
    %3082 = vmatprep.subr.bf16.mxu0 0
    %3083 = vmatpush1.bf16.msra.mxu0 %v3080
    %3084 = vmatprep.subr.bf16.mxu0 0
    %3085 = vmatpush1.bf16.msra.mxu0 0
    %3086 = vmatprep.subr.bf16.mxu0 0
    %3087 = vmatpush1.bf16.msra.mxu0 0
    %3088 = vmatprep.subr.bf16.mxu0 0
    %3089 = vmatpush1.bf16.msra.mxu0 0
    %3090 = vmatprep.subr.bf16.mxu0 0
    %3091 = vmatpush1.bf16.msra.mxu0 0
    %3092 = vmatprep.subr.bf16.mxu0 0
    %3093 = vmatpush1.bf16.msra.mxu0 0
    %3094 = vmatprep.subr.bf16.mxu0 0
    %3095 = vmatpush1.bf16.msra.mxu0 0
    %3096 = vmatprep.subr.bf16.mxu0 0
    %3097 = vmatpush1.bf16.msra.mxu0 0
    %3098 = vmatprep.subr.bf16.mxu0 0
    %3099 = vmatpush1.bf16.msra.mxu0 0
    %3100 = vmatprep.subr.bf16.mxu0 0
    %3101 = vmatpush1.bf16.msra.mxu0 0
    %3102 = vmatprep.subr.bf16.mxu0 0
    %3103 = vmatpush1.bf16.msra.mxu0 0
    %3104 = vmatprep.subr.bf16.mxu0 0
    %3105 = vmatpush1.bf16.msra.mxu0 0
    %3106 = vmatprep.subr.bf16.mxu0 0
    %3107 = vmatpush1.bf16.msra.mxu0 0
    %3108 = vmatprep.subr.bf16.mxu0 0
    %3109 = vmatpush1.bf16.msra.mxu0 0
    %3110 = vmatprep.subr.bf16.mxu0 0
    %3111 = vmatpush1.bf16.msra.mxu0 0
    %3112 = vmatprep.subr.bf16.mxu0 0
    %3113 = vmatpush1.bf16.msra.mxu0 0
    %3114 = vmatprep.mubr.bf16.mxu0 0
    %3115 = vmatmul.mubr.bf16.gmra.mrb[0].mxu0 %v3076
    %v3116 = vpop.f32.mrb[0].mxu0
    %v3117 = vadd.f32 0.0, %v3116
    %v3118 = vpop.f32.mrb[0].mxu0
    %v3119 = vpop.f32.mrb[0].mxu0
    %v3120 = vpop.f32.mrb[0].mxu0
    %3121 = vdwg.mxu0
    %v3122 = vpack.c.bf16 %v3117, %v3117
    %v3123 = vld [vmem:[#allocation11] sm:$0xf]
    %v3124 = vld [vmem:[#allocation11 + $0x4] sm:$0xf]
    %v3125 = vld [vmem:[#allocation11 + $0x8] sm:$0xf]
    %v3126 = vld [vmem:[#allocation11 + $0xc] sm:$0xf]
    %v3127 = vld [vmem:[#allocation11 + $0x10] sm:$0xf]
    %v3128 = vld [vmem:[#allocation11 + $0x14] sm:$0xf]
    %v3129 = vld [vmem:[#allocation11 + $0x18] sm:$0xf]
    %v3130 = vld [vmem:[#allocation11 + $0x1c] sm:$0xf]
    %v3131 = vld [vmem:[#allocation11 + $0x20] sm:$0xf]
    %v3132 = vld [vmem:[#allocation11 + $0x24] sm:$0xf]
    %v3133 = vld [vmem:[#allocation11 + $0x28] sm:$0xf]
    %v3134 = vld [vmem:[#allocation11 + $0x2c] sm:$0xf]
    %v3135 = vld [vmem:[#allocation11 + $0x30] sm:$0xf]
    %v3136 = vld [vmem:[#allocation11 + $0x34] sm:$0xf]
    %v3137 = vld [vmem:[#allocation11 + $0x38] sm:$0xf]
    %v3138 = vld [vmem:[#allocation11 + $0x3c] sm:$0xf]
    %s3139 = scalar_lea.vmem %s13, 1
    %v3140 = vld [vmem:[%s3139] sm:$0x1]
    %v3142 = vsel %vm3074, %v3140, 0
    %3144 = vmatprep.subr.bf16.mxu0 0
    %3145 = vmatpush1.bf16.msra.mxu0 %v3080
    %3146 = vmatprep.subr.bf16.mxu0 0
    %3147 = vmatpush1.bf16.msra.mxu0 0
    %3148 = vmatprep.subr.bf16.mxu0 0
    %3149 = vmatpush1.bf16.msra.mxu0 0
    %3150 = vmatprep.subr.bf16.mxu0 0
    %3151 = vmatpush1.bf16.msra.mxu0 0
    %3152 = vmatprep.subr.bf16.mxu0 0
    %3153 = vmatpush1.bf16.msra.mxu0 0
    %3154 = vmatprep.subr.bf16.mxu0 0
    %3155 = vmatpush1.bf16.msra.mxu0 0
    %3156 = vmatprep.subr.bf16.mxu0 0
    %3157 = vmatpush1.bf16.msra.mxu0 0
    %3158 = vmatprep.subr.bf16.mxu0 0
    %3159 = vmatpush1.bf16.msra.mxu0 0
    %3160 = vmatprep.subr.bf16.mxu0 0
    %3161 = vmatpush1.bf16.msra.mxu0 0
    %3162 = vmatprep.subr.bf16.mxu0 0
    %3163 = vmatpush1.bf16.msra.mxu0 0
    %3164 = vmatprep.subr.bf16.mxu0 0
    %3165 = vmatpush1.bf16.msra.mxu0 0
    %3166 = vmatprep.subr.bf16.mxu0 0
    %3167 = vmatpush1.bf16.msra.mxu0 0
    %3168 = vmatprep.subr.bf16.mxu0 0
    %3169 = vmatpush1.bf16.msra.mxu0 0
    %3170 = vmatprep.subr.bf16.mxu0 0
    %3171 = vmatpush1.bf16.msra.mxu0 0
    %3172 = vmatprep.subr.bf16.mxu0 0
    %3173 = vmatpush1.bf16.msra.mxu0 0
    %3174 = vmatprep.subr.bf16.mxu0 0
    %3175 = vmatpush1.bf16.msra.mxu0 0
    %3176 = vmatprep.mubr.bf16.mxu0 0
    %3177 = vmatmul.mubr.bf16.gmra.mrb[0].mxu0 %v3142
    %v3178 = vpop.f32.mrb[0].mxu0
    %v3179 = vadd.f32 0.0, %v3178
    %v3180 = vpop.f32.mrb[0].mxu0
    %v3181 = vpop.f32.mrb[0].mxu0
    %v3182 = vpop.f32.mrb[0].mxu0
    %3183 = vdwg.mxu0
    %v3184 = vpack.c.bf16 %v3179, %v3179
    %s3185 = scalar_lea.vmem [#allocation11], 64
    %v3186 = vld [vmem:[%s3185] sm:$0xf]
    %v3187 = vld [vmem:[%s3185 + $0x4] sm:$0xf]
    %v3188 = vld [vmem:[%s3185 + $0x8] sm:$0xf]
    %v3189 = vld [vmem:[%s3185 + $0xc] sm:$0xf]
    %v3190 = vld [vmem:[%s3185 + $0x10] sm:$0xf]
    %v3191 = vld [vmem:[%s3185 + $0x14] sm:$0xf]
    %v3192 = vld [vmem:[%s3185 + $0x18] sm:$0xf]
    %v3193 = vld [vmem:[%s3185 + $0x1c] sm:$0xf]
    %v3194 = vld [vmem:[%s3185 + $0x20] sm:$0xf]
    %v3195 = vld [vmem:[%s3185 + $0x24] sm:$0xf]
    %v3196 = vld [vmem:[%s3185 + $0x28] sm:$0xf]
    %v3197 = vld [vmem:[%s3185 + $0x2c] sm:$0xf]
    %v3198 = vld [vmem:[%s3185 + $0x30] sm:$0xf]
    %v3199 = vld [vmem:[%s3185 + $0x34] sm:$0xf]
    %v3200 = vld [vmem:[%s3185 + $0x38] sm:$0xf]
    %v3201 = vld [vmem:[%s3185 + $0x3c] sm:$0xf]
    %v3218 = vunpack.c.l.b16 %v3186
    %v3219 = vunpack.c.l.b16 %v3187
    %v3220 = vunpack.c.l.b16 %v3188
    %v3221 = vunpack.c.l.b16 %v3189
    %v3222 = vunpack.c.l.b16 %v3190
    %v3223 = vunpack.c.l.b16 %v3191
    %v3224 = vunpack.c.l.b16 %v3192
    %v3225 = vunpack.c.l.b16 %v3193
    %v3226 = vunpack.c.l.b16 %v3194
    %v3227 = vunpack.c.l.b16 %v3195
    %v3228 = vunpack.c.l.b16 %v3196
    %v3229 = vunpack.c.l.b16 %v3197
    %v3230 = vunpack.c.l.b16 %v3198
    %v3231 = vunpack.c.l.b16 %v3199
    %v3232 = vunpack.c.l.b16 %v3200
    %v3233 = vunpack.c.l.b16 %v3201
    %v3234 = vpack.c.b16 %v3219, %v3218
    %v3235 = vpack.c.b16 %v3221, %v3220
    %v3236 = vpack.c.b16 %v3223, %v3222
    %v3237 = vpack.c.b16 %v3225, %v3224
    %v3238 = vpack.c.b16 %v3227, %v3226
    %v3239 = vpack.c.b16 %v3229, %v3228
    %v3240 = vpack.c.b16 %v3231, %v3230
    %v3241 = vpack.c.b16 %v3233, %v3232
    %3250 = vmatprep.subr.bf16.mxu0 0
    %3251 = vmatpush1.bf16.msra.mxu0 %v3234
    %3252 = vmatprep.subr.bf16.mxu0 0
    %3253 = vmatpush1.bf16.msra.mxu0 %v3235
    %3254 = vmatprep.subr.bf16.mxu0 0
    %3255 = vmatpush1.bf16.msra.mxu0 %v3236
    %3256 = vmatprep.subr.bf16.mxu0 0
    %3257 = vmatpush1.bf16.msra.mxu0 %v3237
    %3258 = vmatprep.subr.bf16.mxu0 0
    %3259 = vmatpush1.bf16.msra.mxu0 %v3238
    %3260 = vmatprep.subr.bf16.mxu0 0
    %3261 = vmatpush1.bf16.msra.mxu0 %v3239
    %3262 = vmatprep.subr.bf16.mxu0 0
    %3263 = vmatpush1.bf16.msra.mxu0 %v3240
    %3264 = vmatprep.subr.bf16.mxu0 0
    %3265 = vmatpush1.bf16.msra.mxu0 %v3241
    %3266 = vmatprep.subr.bf16.mxu0 0
    %3267 = vmatpush1.bf16.msra.mxu0 0
    %3268 = vmatprep.subr.bf16.mxu0 0
    %3269 = vmatpush1.bf16.msra.mxu0 0
    %3270 = vmatprep.subr.bf16.mxu0 0
    %3271 = vmatpush1.bf16.msra.mxu0 0
    %3272 = vmatprep.subr.bf16.mxu0 0
    %3273 = vmatpush1.bf16.msra.mxu0 0
    %3274 = vmatprep.subr.bf16.mxu0 0
    %3275 = vmatpush1.bf16.msra.mxu0 0
    %3276 = vmatprep.subr.bf16.mxu0 0
    %3277 = vmatpush1.bf16.msra.mxu0 0
    %3278 = vmatprep.subr.bf16.mxu0 0
    %3279 = vmatpush1.bf16.msra.mxu0 0
    %3280 = vmatprep.subr.bf16.mxu0 0
    %3281 = vmatpush1.bf16.msra.mxu0 0
    %3282 = vmatprep.mubr.bf16.mxu0 0
    %3283 = vmatmul.mubr.bf16.gmra.mrb[0].mxu0 %v3184
    %v3284 = vpop.f32.mrb[0].mxu0
    %v3285 = vadd.f32 0.0, %v3284
    %v3286 = vpop.f32.mrb[0].mxu0
    %v3287 = vpop.f32.mrb[0].mxu0
    %v3288 = vpop.f32.mrb[0].mxu0
    %3289 = vdwg.mxu0
    %v3306 = vunpack.c.l.b16 %v3123
    %v3307 = vunpack.c.l.b16 %v3124
    %v3308 = vunpack.c.l.b16 %v3125
    %v3309 = vunpack.c.l.b16 %v3126
    %v3310 = vunpack.c.l.b16 %v3127
    %v3311 = vunpack.c.l.b16 %v3128
    %v3312 = vunpack.c.l.b16 %v3129
    %v3313 = vunpack.c.l.b16 %v3130
    %v3314 = vunpack.c.l.b16 %v3131
    %v3315 = vunpack.c.l.b16 %v3132
    %v3316 = vunpack.c.l.b16 %v3133
    %v3317 = vunpack.c.l.b16 %v3134
    %v3318 = vunpack.c.l.b16 %v3135
    %v3319 = vunpack.c.l.b16 %v3136
    %v3320 = vunpack.c.l.b16 %v3137
    %v3321 = vunpack.c.l.b16 %v3138
    %v3322 = vpack.c.b16 %v3307, %v3306
    %v3323 = vpack.c.b16 %v3309, %v3308
    %v3324 = vpack.c.b16 %v3311, %v3310
    %v3325 = vpack.c.b16 %v3313, %v3312
    %v3326 = vpack.c.b16 %v3315, %v3314
    %v3327 = vpack.c.b16 %v3317, %v3316
    %v3328 = vpack.c.b16 %v3319, %v3318
    %v3329 = vpack.c.b16 %v3321, %v3320
    %3338 = vmatprep.subr.bf16.mxu0 0
    %3339 = vmatpush1.bf16.msra.mxu0 %v3322
    %3340 = vmatprep.subr.bf16.mxu0 0
    %3341 = vmatpush1.bf16.msra.mxu0 %v3323
    %3342 = vmatprep.subr.bf16.mxu0 0
    %3343 = vmatpush1.bf16.msra.mxu0 %v3324
    %3344 = vmatprep.subr.bf16.mxu0 0
    %3345 = vmatpush1.bf16.msra.mxu0 %v3325
    %3346 = vmatprep.subr.bf16.mxu0 0
    %3347 = vmatpush1.bf16.msra.mxu0 %v3326
    %3348 = vmatprep.subr.bf16.mxu0 0
    %3349 = vmatpush1.bf16.msra.mxu0 %v3327
    %3350 = vmatprep.subr.bf16.mxu0 0
    %3351 = vmatpush1.bf16.msra.mxu0 %v3328
    %3352 = vmatprep.subr.bf16.mxu0 0
    %3353 = vmatpush1.bf16.msra.mxu0 %v3329
    %3354 = vmatprep.subr.bf16.mxu0 0
    %3355 = vmatpush1.bf16.msra.mxu0 0
    %3356 = vmatprep.subr.bf16.mxu0 0
    %3357 = vmatpush1.bf16.msra.mxu0 0
    %3358 = vmatprep.subr.bf16.mxu0 0
    %3359 = vmatpush1.bf16.msra.mxu0 0
    %3360 = vmatprep.subr.bf16.mxu0 0
    %3361 = vmatpush1.bf16.msra.mxu0 0
    %3362 = vmatprep.subr.bf16.mxu0 0
    %3363 = vmatpush1.bf16.msra.mxu0 0
    %3364 = vmatprep.subr.bf16.mxu0 0
    %3365 = vmatpush1.bf16.msra.mxu0 0
    %3366 = vmatprep.subr.bf16.mxu0 0
    %3367 = vmatpush1.bf16.msra.mxu0 0
    %3368 = vmatprep.subr.bf16.mxu0 0
    %3369 = vmatpush1.bf16.msra.mxu0 0
    %3370 = vmatprep.mubr.bf16.mxu0 0
    %3371 = vmatmul.mubr.bf16.gmra.mrb[0].mxu0 %v3122
    %v3372 = vpop.f32.mrb[0].mxu0
    %v3373 = vadd.f32 %v3285, %v3372
    %v3374 = vpop.f32.mrb[0].mxu0
    %v3375 = vpop.f32.mrb[0].mxu0
    %v3376 = vpop.f32.mrb[0].mxu0
    %3377 = vdwg.mxu0
    %s3378 = scalar_lea.vmem %s13, 2
    %v3379 = vld [vmem:[%s3378] sm:$0x1]
    %v3381 = vsel %vm3074, %v3379, 0
    %3383 = vmatprep.subr.bf16.mxu0 0
    %3384 = vmatpush1.bf16.msra.mxu0 %v3080
    %3385 = vmatprep.subr.bf16.mxu0 0
    %3386 = vmatpush1.bf16.msra.mxu0 0
    %3387 = vmatprep.subr.bf16.mxu0 0
    %3388 = vmatpush1.bf16.msra.mxu0 0
    %3389 = vmatprep.subr.bf16.mxu0 0
    %3390 = vmatpush1.bf16.msra.mxu0 0
    %3391 = vmatprep.subr.bf16.mxu0 0
    %3392 = vmatpush1.bf16.msra.mxu0 0
    %3393 = vmatprep.subr.bf16.mxu0 0
    %3394 = vmatpush1.bf16.msra.mxu0 0
    %3395 = vmatprep.subr.bf16.mxu0 0
    %3396 = vmatpush1.bf16.msra.mxu0 0
    %3397 = vmatprep.subr.bf16.mxu0 0
    %3398 = vmatpush1.bf16.msra.mxu0 0
    %3399 = vmatprep.subr.bf16.mxu0 0
    %3400 = vmatpush1.bf16.msra.mxu0 0
    %3401 = vmatprep.subr.bf16.mxu0 0
    %3402 = vmatpush1.bf16.msra.mxu0 0
    %3403 = vmatprep.subr.bf16.mxu0 0
    %3404 = vmatpush1.bf16.msra.mxu0 0
    %3405 = vmatprep.subr.bf16.mxu0 0
    %3406 = vmatpush1.bf16.msra.mxu0 0
    %3407 = vmatprep.subr.bf16.mxu0 0
    %3408 = vmatpush1.bf16.msra.mxu0 0
    %3409 = vmatprep.subr.bf16.mxu0 0
    %3410 = vmatpush1.bf16.msra.mxu0 0
    %3411 = vmatprep.subr.bf16.mxu0 0
    %3412 = vmatpush1.bf16.msra.mxu0 0
    %3413 = vmatprep.subr.bf16.mxu0 0
    %3414 = vmatpush1.bf16.msra.mxu0 0
    %3415 = vmatprep.mubr.bf16.mxu0 0
    %3416 = vmatmul.mubr.bf16.gmra.mrb[0].mxu0 %v3381
    %v3417 = vpop.f32.mrb[0].mxu0
    %v3418 = vadd.f32 0.0, %v3417
    %v3419 = vpop.f32.mrb[0].mxu0
    %v3420 = vpop.f32.mrb[0].mxu0
    %v3421 = vpop.f32.mrb[0].mxu0
    %3422 = vdwg.mxu0
    %v3423 = vpack.c.bf16 %v3418, %v3418
    %s3424 = scalar_lea.vmem [#allocation11], 128
    %v3425 = vld [vmem:[%s3424] sm:$0xf]
    %v3426 = vld [vmem:[%s3424 + $0x4] sm:$0xf]
    %v3427 = vld [vmem:[%s3424 + $0x8] sm:$0xf]
    %v3428 = vld [vmem:[%s3424 + $0xc] sm:$0xf]
    %v3429 = vld [vmem:[%s3424 + $0x10] sm:$0xf]
    %v3430 = vld [vmem:[%s3424 + $0x14] sm:$0xf]
    %v3431 = vld [vmem:[%s3424 + $0x18] sm:$0xf]
    %v3432 = vld [vmem:[%s3424 + $0x1c] sm:$0xf]
    %v3433 = vld [vmem:[%s3424 + $0x20] sm:$0xf]
    %v3434 = vld [vmem:[%s3424 + $0x24] sm:$0xf]
    %v3435 = vld [vmem:[%s3424 + $0x28] sm:$0xf]
    %v3436 = vld [vmem:[%s3424 + $0x2c] sm:$0xf]
    %v3437 = vld [vmem:[%s3424 + $0x30] sm:$0xf]
    %v3438 = vld [vmem:[%s3424 + $0x34] sm:$0xf]
    %v3439 = vld [vmem:[%s3424 + $0x38] sm:$0xf]
    %v3440 = vld [vmem:[%s3424 + $0x3c] sm:$0xf]
    %v3457 = vunpack.c.l.b16 %v3425
    %v3458 = vunpack.c.l.b16 %v3426
    %v3459 = vunpack.c.l.b16 %v3427
    %v3460 = vunpack.c.l.b16 %v3428
    %v3461 = vunpack.c.l.b16 %v3429
    %v3462 = vunpack.c.l.b16 %v3430
    %v3463 = vunpack.c.l.b16 %v3431
    %v3464 = vunpack.c.l.b16 %v3432
    %v3465 = vunpack.c.l.b16 %v3433
    %v3466 = vunpack.c.l.b16 %v3434
    %v3467 = vunpack.c.l.b16 %v3435
    %v3468 = vunpack.c.l.b16 %v3436
    %v3469 = vunpack.c.l.b16 %v3437
    %v3470 = vunpack.c.l.b16 %v3438
    %v3471 = vunpack.c.l.b16 %v3439
    %v3472 = vunpack.c.l.b16 %v3440
    %v3473 = vpack.c.b16 %v3458, %v3457
    %v3474 = vpack.c.b16 %v3460, %v3459
    %v3475 = vpack.c.b16 %v3462, %v3461
    %v3476 = vpack.c.b16 %v3464, %v3463
    %v3477 = vpack.c.b16 %v3466, %v3465
    %v3478 = vpack.c.b16 %v3468, %v3467
    %v3479 = vpack.c.b16 %v3470, %v3469
    %v3480 = vpack.c.b16 %v3472, %v3471
    %3489 = vmatprep.subr.bf16.mxu0 0
    %3490 = vmatpush1.bf16.msra.mxu0 %v3473
    %3491 = vmatprep.subr.bf16.mxu0 0
    %3492 = vmatpush1.bf16.msra.mxu0 %v3474
    %3493 = vmatprep.subr.bf16.mxu0 0
    %3494 = vmatpush1.bf16.msra.mxu0 %v3475
    %3495 = vmatprep.subr.bf16.mxu0 0
    %3496 = vmatpush1.bf16.msra.mxu0 %v3476
    %3497 = vmatprep.subr.bf16.mxu0 0
    %3498 = vmatpush1.bf16.msra.mxu0 %v3477
    %3499 = vmatprep.subr.bf16.mxu0 0
    %3500 = vmatpush1.bf16.msra.mxu0 %v3478
    %3501 = vmatprep.subr.bf16.mxu0 0
    %3502 = vmatpush1.bf16.msra.mxu0 %v3479
    %3503 = vmatprep.subr.bf16.mxu0 0
    %3504 = vmatpush1.bf16.msra.mxu0 %v3480
    %3505 = vmatprep.subr.bf16.mxu0 0
    %3506 = vmatpush1.bf16.msra.mxu0 0
    %3507 = vmatprep.subr.bf16.mxu0 0
    %3508 = vmatpush1.bf16.msra.mxu0 0
    %3509 = vmatprep.subr.bf16.mxu0 0
    %3510 = vmatpush1.bf16.msra.mxu0 0
    %3511 = vmatprep.subr.bf16.mxu0 0
    %3512 = vmatpush1.bf16.msra.mxu0 0
    %3513 = vmatprep.subr.bf16.mxu0 0
    %3514 = vmatpush1.bf16.msra.mxu0 0
    %3515 = vmatprep.subr.bf16.mxu0 0
    %3516 = vmatpush1.bf16.msra.mxu0 0
    %3517 = vmatprep.subr.bf16.mxu0 0
    %3518 = vmatpush1.bf16.msra.mxu0 0
    %3519 = vmatprep.subr.bf16.mxu0 0
    %3520 = vmatpush1.bf16.msra.mxu0 0
    %3521 = vmatprep.mubr.bf16.mxu0 0
    %3522 = vmatmul.mubr.bf16.gmra.mrb[0].mxu0 %v3423
    %v3523 = vpop.f32.mrb[0].mxu0
    %v3524 = vadd.f32 0.0, %v3523
    %v3525 = vpop.f32.mrb[0].mxu0
    %v3526 = vpop.f32.mrb[0].mxu0
    %v3527 = vpop.f32.mrb[0].mxu0
    %3528 = vdwg.mxu0
    %v3529 = vadd.f32 %v3373, %v3524
    %v3530 = vld [vmem:[%s15] sm:$0x1]
    %v3532 = vlaneseq
    %v3533 = vshrl.u32 %v3532, 7
    %v3534 = vsub.s32 0, %v3533
    %v3535 = vrot.slane %v3530, %v3534
    %v3537 = vadd.f32 %v3529, %v3535
    %v3538 = vmax.f32 %v3537, 0.0
    %v3539 = vpack.c.bf16 %v3538, %v3538
    %v3540 = vld [vmem:[%s16] sm:$0x1]
    %vm3541 = vcmask 15360
    %v3543 = vsel %vm3541, %v3540, 0
    %vm3545 = vcmask 1040384
    %v3547 = vsel %vm3545, %v3539, 0
    %3549 = vmatprep.subr.bf16.mxu0 0
    %3550 = vmatpush1.bf16.msra.mxu0 %v3547
    %3551 = vmatprep.subr.bf16.mxu0 0
    %3552 = vmatpush1.bf16.msra.mxu0 0
    %3553 = vmatprep.subr.bf16.mxu0 0
    %3554 = vmatpush1.bf16.msra.mxu0 0
    %3555 = vmatprep.subr.bf16.mxu0 0
    %3556 = vmatpush1.bf16.msra.mxu0 0
    %3557 = vmatprep.subr.bf16.mxu0 0
    %3558 = vmatpush1.bf16.msra.mxu0 0
    %3559 = vmatprep.subr.bf16.mxu0 0
    %3560 = vmatpush1.bf16.msra.mxu0 0
    %3561 = vmatprep.subr.bf16.mxu0 0
    %3562 = vmatpush1.bf16.msra.mxu0 0
    %3563 = vmatprep.subr.bf16.mxu0 0
    %3564 = vmatpush1.bf16.msra.mxu0 0
    %3565 = vmatprep.subr.bf16.mxu0 0
    %3566 = vmatpush1.bf16.msra.mxu0 0
    %3567 = vmatprep.subr.bf16.mxu0 0
    %3568 = vmatpush1.bf16.msra.mxu0 0
    %3569 = vmatprep.subr.bf16.mxu0 0
    %3570 = vmatpush1.bf16.msra.mxu0 0
    %3571 = vmatprep.subr.bf16.mxu0 0
    %3572 = vmatpush1.bf16.msra.mxu0 0
    %3573 = vmatprep.subr.bf16.mxu0 0
    %3574 = vmatpush1.bf16.msra.mxu0 0
    %3575 = vmatprep.subr.bf16.mxu0 0
    %3576 = vmatpush1.bf16.msra.mxu0 0
    %3577 = vmatprep.subr.bf16.mxu0 0
    %3578 = vmatpush1.bf16.msra.mxu0 0
    %3579 = vmatprep.subr.bf16.mxu0 0
    %3580 = vmatpush1.bf16.msra.mxu0 0
    %3581 = vmatprep.mubr.bf16.mxu0 0
    %3582 = vmatmul.mubr.bf16.gmra.mrb[0].mxu0 %v3543
    %v3583 = vpop.f32.mrb[0].mxu0
    %v3584 = vadd.f32 0.0, %v3583
    %v3585 = vpop.f32.mrb[0].mxu0
    %v3586 = vpop.f32.mrb[0].mxu0
    %v3587 = vpop.f32.mrb[0].mxu0
    %3588 = vdwg.mxu0
    %v3589 = vpack.c.bf16 %v3584, %v3584
    %v3590 = vld [vmem:[%s17] sm:$0xf]
    %v3591 = vld [vmem:[%s17 + $0x4] sm:$0xf]
    %v3592 = vld [vmem:[%s17 + $0x8] sm:$0xf]
    %v3593 = vld [vmem:[%s17 + $0xc] sm:$0xf]
    %v3594 = vld [vmem:[%s17 + $0x10] sm:$0xf]
    %v3595 = vld [vmem:[%s17 + $0x14] sm:$0xf]
    %v3596 = vld [vmem:[%s17 + $0x18] sm:$0xf]
    %v3597 = vld [vmem:[%s17 + $0x1c] sm:$0xf]
    %v3598 = vld [vmem:[%s17 + $0x20] sm:$0xf]
    %v3599 = vld [vmem:[%s17 + $0x24] sm:$0xf]
    %v3600 = vld [vmem:[%s17 + $0x28] sm:$0xf]
    %v3601 = vld [vmem:[%s17 + $0x2c] sm:$0xf]
    %v3602 = vld [vmem:[%s17 + $0x30] sm:$0xf]
    %v3603 = vld [vmem:[%s17 + $0x34] sm:$0xf]
    %v3604 = vld [vmem:[%s17 + $0x38] sm:$0xf]
    %v3605 = vld [vmem:[%s17 + $0x3c] sm:$0xf]
    %v3606 = vld [vmem:[#allocation2] sm:$0x1]
    %v3608 = vlaneseq
    %v3609 = vshrl.u32 %v3608, 7
    %v3610 = vsub.s32 0, %v3609
    %v3611 = vrot.slane %v3606, %v3610
    %v3629 = vunpack.c.l.b16 %v3590
    %v3630 = vunpack.c.l.b16 %v3591
    %v3631 = vunpack.c.l.b16 %v3592
    %v3632 = vunpack.c.l.b16 %v3593
    %v3633 = vunpack.c.l.b16 %v3594
    %v3634 = vunpack.c.l.b16 %v3595
    %v3635 = vunpack.c.l.b16 %v3596
    %v3636 = vunpack.c.l.b16 %v3597
    %v3637 = vunpack.c.l.b16 %v3598
    %v3638 = vunpack.c.l.b16 %v3599
    %v3639 = vunpack.c.l.b16 %v3600
    %v3640 = vunpack.c.l.b16 %v3601
    %v3641 = vunpack.c.l.b16 %v3602
    %v3642 = vunpack.c.l.b16 %v3603
    %v3643 = vunpack.c.l.b16 %v3604
    %v3644 = vunpack.c.l.b16 %v3605
    %v3645 = vpack.c.b16 %v3630, %v3629
    %v3646 = vpack.c.b16 %v3632, %v3631
    %v3647 = vpack.c.b16 %v3634, %v3633
    %v3648 = vpack.c.b16 %v3636, %v3635
    %v3649 = vpack.c.b16 %v3638, %v3637
    %v3650 = vpack.c.b16 %v3640, %v3639
    %v3651 = vpack.c.b16 %v3642, %v3641
    %v3652 = vpack.c.b16 %v3644, %v3643
    %3661 = vmatprep.subr.bf16.mxu0 0
    %3662 = vmatpush1.bf16.msra.mxu0 %v3645
    %3663 = vmatprep.subr.bf16.mxu0 0
    %3664 = vmatpush1.bf16.msra.mxu0 %v3646
    %3665 = vmatprep.subr.bf16.mxu0 0
    %3666 = vmatpush1.bf16.msra.mxu0 %v3647
    %3667 = vmatprep.subr.bf16.mxu0 0
    %3668 = vmatpush1.bf16.msra.mxu0 %v3648
    %3669 = vmatprep.subr.bf16.mxu0 0
    %3670 = vmatpush1.bf16.msra.mxu0 %v3649
    %3671 = vmatprep.subr.bf16.mxu0 0
    %3672 = vmatpush1.bf16.msra.mxu0 %v3650
    %3673 = vmatprep.subr.bf16.mxu0 0
    %3674 = vmatpush1.bf16.msra.mxu0 %v3651
    %3675 = vmatprep.subr.bf16.mxu0 0
    %3676 = vmatpush1.bf16.msra.mxu0 %v3652
    %3677 = vmatprep.subr.bf16.mxu0 0
    %3678 = vmatpush1.bf16.msra.mxu0 0
    %3679 = vmatprep.subr.bf16.mxu0 0
    %3680 = vmatpush1.bf16.msra.mxu0 0
    %3681 = vmatprep.subr.bf16.mxu0 0
    %3682 = vmatpush1.bf16.msra.mxu0 0
    %3683 = vmatprep.subr.bf16.mxu0 0
    %3684 = vmatpush1.bf16.msra.mxu0 0
    %3685 = vmatprep.subr.bf16.mxu0 0
    %3686 = vmatpush1.bf16.msra.mxu0 0
    %3687 = vmatprep.subr.bf16.mxu0 0
    %3688 = vmatpush1.bf16.msra.mxu0 0
    %3689 = vmatprep.subr.bf16.mxu0 0
    %3690 = vmatpush1.bf16.msra.mxu0 0
    %3691 = vmatprep.subr.bf16.mxu0 0
    %3692 = vmatpush1.bf16.msra.mxu0 0
    %3693 = vmatprep.mubr.bf16.mxu0 0
    %3694 = vmatmul.mubr.bf16.gmra.mrb[0].mxu0 %v3589
    %v3695 = vpop.f32.mrb[0].mxu0
    %v3696 = vadd.f32 %v3611, %v3695
    %v3697 = vpop.f32.mrb[0].mxu0
    %v3698 = vpop.f32.mrb[0].mxu0
    %v3699 = vpop.f32.mrb[0].mxu0
    %3700 = vdwg.mxu0
    %vm3701 = vcmask 1024
    %3702 = vst.msk [vmem:[%s19] sm:$0x3] %vm3701, %v3696
    // Predicated region
    $region102: #{value_model_forward.1} parent=1 // pred_check
      _
    $region103: #{value_model_forward.1} parent=1 // pred_check_branch
      %3704 = sbr.rel (0) target = $region105
    $region104: #{value_model_forward.1} parent=1 // pred_region
      _
    $region105: #{value_model_forward.1} parent=1 // pred_fallthru
      _
    // Predicated region
    $region106: #{value_model_forward.1} parent=1 // pred_check
      _
    $region107: #{value_model_forward.1} parent=1 // pred_check_branch
      %3706 = sbr.rel (0) target = $region109
    $region108: #{value_model_forward.1} parent=1 // pred_region
      _
    $region109: #{value_model_forward.1} parent=1 // pred_fallthru
      _
    %3707 = vsyncpa [#allocation4], 1
    %3708 = vsyncpa [#allocation6], 1
    %3709 = vsyncpa [#allocation9], 1
    %3710 = vsyncpa [#allocation12], 1

</llo_original>
